<compile_context>
chip_gen: v7x
topology: tpu7x:2x2x1
jax: 0.10.0
libtpu: 0.0.40
codegen_flags: <defaults>
</compile_context>

<pallas_src>
import math
from functools import partial

import jax
import jax.numpy as jnp
from jax import lax
from jax.experimental import pallas as pl
from jax.experimental.pallas import tpu as pltpu


def _round_up(x, m):
    return ((x + m - 1) // m) * m


def _nbytes(shape, dtype):
    return math.prod(shape) * jnp.dtype(dtype).itemsize


def _pad_gate_cols(w, H, Hp):
    """(rows, 3H) with gate order [r|z|n] -> (rows, 3*Hp), each gate zero-padded to Hp."""
    parts = [w[:, g * H:(g + 1) * H] for g in range(3)]
    parts = [jnp.pad(p, ((0, 0), (0, Hp - H))) for p in parts]
    return jnp.concatenate(parts, axis=1)


# ------------------------------ Fused model kernel ---------------------------
def _make_fused_gru_kernel(num_layers, T, Bb, Hp, unroll):
    """Kernel ref order:
      x (T, Bb, I),
      [w_ih (in,3Hp), w_hh (Hp,3Hp), b_gi (1,3Hp), b_hn (1,Hp)] * num_layers,
      w_lin (1, Hp), b_lin (1, 1),
      out (Bb, 1),
      gi_scratch (T, Bb, 3Hp) f32, seq_scratch (T, Bb, Hp) f32
    """

    def kernel(*refs):
        x_ref = refs[0]
        layer_refs = [tuple(refs[1 + 4 * l: 1 + 4 * (l + 1)]) for l in range(num_layers)]
        w_lin_ref = refs[1 + 4 * num_layers]
        b_lin_ref = refs[2 + 4 * num_layers]
        out_ref = refs[3 + 4 * num_layers]
        gi_ref = refs[4 + 4 * num_layers]
        seq_ref = refs[5 + 4 * num_layers]

        cur_in_ref = x_ref
        h_last = jnp.zeros((Bb, Hp), jnp.float32)
        for l, (wih_ref, whh_ref, bgi_ref, bhn_ref) in enumerate(layer_refs):
            in_dim = wih_ref.shape[0]
            wih = wih_ref[...]                                    # (in_dim, 3Hp), matmul dtype
            # Hoisted input projection: one big MXU matmul covering all T timesteps.
            # Leading-dim reshapes are layout-free (Bb is a multiple of 8).
            x2d = cur_in_ref[...].reshape(T * Bb, in_dim).astype(wih.dtype)
            gi_ref[...] = (
                jnp.dot(x2d, wih, preferred_element_type=jnp.float32) + bgi_ref[...]
            ).reshape(T, Bb, 3 * Hp)

            # Hoist the n-gate recurrent bias broadcast out of the unrolled loop.
            bhn_b = jnp.broadcast_to(bhn_ref[...], (Bb, Hp))
            is_last_layer = l == num_layers - 1

            def step(t, h, whh_ref=whh_ref, bhn_b=bhn_b, last=is_last_layer):
                gi = gi_ref[t]                                    # (Bb, 3Hp), lane-aligned
                gh = jnp.dot(h.astype(whh_ref.dtype), whh_ref[...],
                             preferred_element_type=jnp.float32)  # (Bb, 3Hp)
                r = jax.nn.sigmoid(gi[:, :Hp] + gh[:, :Hp])
                z = jax.nn.sigmoid(gi[:, Hp:2 * Hp] + gh[:, Hp:2 * Hp])
                n = jnp.tanh(gi[:, 2 * Hp:] + r * (gh[:, 2 * Hp:] + bhn_b))
                h_new = (1.0 - z) * n + z * h
                if not last:
                    seq_ref[t] = h_new                            # feed next layer
                return h_new

            h_last = lax.fori_loop(
                0, T, step, jnp.zeros((Bb, Hp), jnp.float32), unroll=unroll
            )
            cur_in_ref = seq_ref

        # Linear head (output width 1): VPU multiply + lane reduce — avoids an MXU
        # push/drain for a single output lane.
        w_row = w_lin_ref[...]                                    # (1, Hp)
        out_ref[...] = (
            jnp.sum(h_last * w_row, axis=-1, keepdims=True) + b_lin_ref[...]
        ).astype(out_ref.dtype)

    return kernel


# --------------------------------- Wrapper ------------------------------------
@partial(jax.jit, static_argnames=("matmul_dtype",))
def gru_model_forward(x, params, matmul_dtype=jnp.bfloat16):
    """x: (B, T, input_size) -> (B, 1). Matches torch GRU(batch_first=True)+Linear (eval)."""
    B, T, I = x.shape
    layers = params["layers"]
    num_layers = len(layers)
    H = layers[0]["w_hh"].shape[1]
    Hp = _round_up(H, 128)                 # lane-aligned gate width

    # Batch padding / blocking: sublane-aligned blocks on a "parallel" grid axis so v7x
    # can shard independent batch blocks across its two TensorCores.
    B_pad = _round_up(B, 8)
    if B_pad >= 16:
        Bb = _round_up((B_pad + 1) // 2, 8)
        B_pad, nb = 2 * Bb, 2
    else:
        Bb, nb = B_pad, 1

    # Time-major, batch-padded input (T, B_pad, I); cheap one-off XLA reshuffle.
    xt = jnp.transpose(x, (1, 0, 2)).astype(jnp.float32)
    if B_pad != B:
        xt = jnp.pad(xt, ((0, 0), (0, B_pad - B), (0, 0)))

    args = [xt]
    in_specs = [pl.BlockSpec((T, Bb, I), lambda b: (0, b, 0))]

    for l, lp in enumerate(layers):
        in_raw = I if l == 0 else H
        in_dim = I if l == 0 else Hp
        wih = _pad_gate_cols(lp["w_ih"].T, H, Hp)                 # (in_raw, 3Hp)
        whh = _pad_gate_cols(lp["w_hh"].T, H, Hp)                 # (H, 3Hp)
        if in_dim != in_raw:
            wih = jnp.pad(wih, ((0, in_dim - in_raw), (0, 0)))
        whh = jnp.pad(whh, ((0, Hp - H), (0, 0)))                 # (Hp, 3Hp)
        bih = _pad_gate_cols(lp["b_ih"][None, :], H, Hp)          # (1, 3Hp)
        bhh = _pad_gate_cols(lp["b_hh"][None, :], H, Hp)
        # Fold the r/z thirds of b_hh into the hoisted-projection bias; keep only b_hn.
        b_gi = bih.at[:, :2 * Hp].add(bhh[:, :2 * Hp])
        b_hn = bhh[:, 2 * Hp:]                                    # (1, Hp)
        args += [wih.astype(matmul_dtype), whh.astype(matmul_dtype), b_gi, b_hn]
        in_specs += [
            pl.BlockSpec((in_dim, 3 * Hp), lambda b: (0, 0)),
            pl.BlockSpec((Hp, 3 * Hp), lambda b: (0, 0)),
            pl.BlockSpec((1, 3 * Hp), lambda b: (0, 0)),
            pl.BlockSpec((1, Hp), lambda b: (0, 0)),
        ]

    w_lin_row = jnp.pad(params["w_lin"].reshape(1, H), ((0, 0), (0, Hp - H)))
    b_lin = params["b_lin"].reshape(1, 1)
    args += [w_lin_row, b_lin]
    in_specs += [pl.BlockSpec((1, Hp), lambda b: (0, 0)),
                 pl.BlockSpec((1, 1), lambda b: (0, 0))]

    # VMEM budget (double-buffered input blocks + output + scratch) -> vmem_limit_bytes.
    vmem = 2 * _nbytes((T, Bb, I), jnp.float32)
    for l in range(num_layers):
        in_dim = I if l == 0 else Hp
        vmem += 2 * (_nbytes((in_dim, 3 * Hp), matmul_dtype)
                     + _nbytes((Hp, 3 * Hp), matmul_dtype)
                     + _nbytes((1, 3 * Hp), jnp.float32)
                     + _nbytes((1, Hp), jnp.float32))
    vmem += 2 * (_nbytes((1, Hp), jnp.float32) + _nbytes((1, 1), jnp.float32))
    vmem += 2 * _nbytes((Bb, 1), jnp.float32)
    vmem += _nbytes((T, Bb, 3 * Hp), jnp.float32) + _nbytes((T, Bb, Hp), jnp.float32)
    vmem_limit = min(max(int(vmem * 1.5) + (2 << 20), 16 << 20), 100 << 20)

    out = pl.pallas_call(
        _make_fused_gru_kernel(num_layers, T, Bb, Hp, unroll=min(T, 8)),
        out_shape=jax.ShapeDtypeStruct((B_pad, 1), jnp.float32),
        grid=(nb,),
        in_specs=in_specs,
        out_specs=pl.BlockSpec((Bb, 1), lambda b: (b, 0)),
        scratch_shapes=[
            pltpu.VMEM((T, Bb, 3 * Hp), jnp.float32),   # hoisted input projections
            pltpu.VMEM((T, Bb, Hp), jnp.float32),       # inter-layer sequence
        ],
        compiler_params=pltpu.CompilerParams(
            dimension_semantics=("parallel",),
            vmem_limit_bytes=vmem_limit,
        ),
    )(*args)
    return out[:B]


# --------------------------------- Parameters --------------------------------
def init_params(key, input_size, hidden_size, num_layers):
    """PyTorch-layout weights, uniform +-1/sqrt(H) like torch default."""
    bound = 1.0 / float(jnp.sqrt(jnp.float32(hidden_size)))
    params = {"layers": []}
    for l in range(num_layers):
        in_sz = input_size if l == 0 else hidden_size
        key, k1, k2, k3, k4 = jax.random.split(key, 5)
        params["layers"].append(
            dict(
                w_ih=jax.random.uniform(k1, (3 * hidden_size, in_sz), jnp.float32, -bound, bound),
                w_hh=jax.random.uniform(k2, (3 * hidden_size, hidden_size), jnp.float32, -bound, bound),
                b_ih=jax.random.uniform(k3, (3 * hidden_size,), jnp.float32, -bound, bound),
                b_hh=jax.random.uniform(k4, (3 * hidden_size,), jnp.float32, -bound, bound),
            )
        )
    key, k5, k6 = jax.random.split(key, 3)
    params["w_lin"] = jax.random.uniform(k5, (1, hidden_size), jnp.float32, -bound, bound)
    params["b_lin"] = jax.random.uniform(k6, (1,), jnp.float32, -bound, bound)
    return params


# ----------------------------- Pure-JAX reference ----------------------------
def gru_model_reference(x, params):
    out = x.astype(jnp.float32)
    B = x.shape[0]
    for lp in params["layers"]:
        H = lp["w_hh"].shape[1]

        def step(h, x_t, lp=lp, H=H):
            gi = x_t @ lp["w_ih"].T + lp["b_ih"]
            gh = h @ lp["w_hh"].T + lp["b_hh"]
            r = jax.nn.sigmoid(gi[:, :H] + gh[:, :H])
            z = jax.nn.sigmoid(gi[:, H:2 * H] + gh[:, H:2 * H])
            n = jnp.tanh(gi[:, 2 * H:] + r * gh[:, 2 * H:])
            h_new = (1.0 - z) * n + z * h
            return h_new, h_new

        h0 = jnp.zeros((B, H), jnp.float32)
        _, seq = lax.scan(step, h0, jnp.transpose(out, (1, 0, 2)))
        out = jnp.transpose(seq, (1, 0, 2))
    return out[:, -1, :] @ params["w_lin"].T + params["b_lin"]


if __name__ == "__main__":
    batch, seq_len, input_size, hidden_size, num_layers = 12, 8, 16, 32, 2

    key = jax.random.PRNGKey(0)
    key, kx, kp = jax.random.split(key, 3)
    x = jax.random.normal(kx, (batch, seq_len, input_size), jnp.float32)
    params = init_params(kp, input_size, hidden_size, num_layers)

    ref = gru_model_reference(x, params)

    # Exact-arithmetic path (f32 MXU operands): tight check against the reference.
    out_f32 = jax.block_until_ready(gru_model_forward(x, params, matmul_dtype=jnp.float32))
    assert out_f32.shape == (batch, 1), out_f32.shape
    assert jnp.allclose(out_f32, ref, atol=1e-4, rtol=1e-4), (out_f32, ref)

    # bf16-MXU path (v6e/v7x native). The recurrence compounds bf16 operand rounding over
    # T steps, so validate with a looser tolerance.
    out_bf16 = jax.block_until_ready(gru_model_forward(x, params, matmul_dtype=jnp.bfloat16))
    assert out_bf16.shape == (batch, 1), out_bf16.shape
    assert jnp.allclose(out_bf16, ref, atol=5e-2, rtol=5e-2), (out_bf16, ref)

    print("KERNEL_OK")
</pallas_src>

<mosaic_0001>
module attributes {stable_mosaic.version = 11 : i64} {
  func.func @kernel(%arg0: i32, %arg1: memref<8x8x16xf32, #tpu.memory_space<vmem>>, %arg2: memref<16x384xf32, #tpu.memory_space<vmem>>, %arg3: memref<128x384xf32, #tpu.memory_space<vmem>>, %arg4: memref<1x384xf32, #tpu.memory_space<vmem>>, %arg5: memref<1x128xf32, #tpu.memory_space<vmem>>, %arg6: memref<128x384xf32, #tpu.memory_space<vmem>>, %arg7: memref<128x384xf32, #tpu.memory_space<vmem>>, %arg8: memref<1x384xf32, #tpu.memory_space<vmem>>, %arg9: memref<1x128xf32, #tpu.memory_space<vmem>>, %arg10: memref<1x128xf32, #tpu.memory_space<vmem>>, %arg11: memref<1x1xf32, #tpu.memory_space<vmem>>, %arg12: memref<8x1xf32, #tpu.memory_space<vmem>>, %arg13: memref<8x8x384xf32, #tpu.memory_space<vmem>>, %arg14: memref<8x8x128xf32, #tpu.memory_space<vmem>>) attributes {dimension_semantics = [#tpu.dimension_semantics<parallel>], iteration_bounds = array<i64: 2>, scalar_prefetch = 0 : i64, scratch_operands = 2 : i64, tpu.core_type = #tpu.core_type<tc>, window_params = [{transform_indices = @transform_0, window_bounds = array<i64: 8, 8, 16>}, {pipeline_mode = #tpu.pipeline_mode<synchronous>, transform_indices = @transform_1, window_bounds = array<i64: 16, 384>}, {pipeline_mode = #tpu.pipeline_mode<synchronous>, transform_indices = @transform_2, window_bounds = array<i64: 128, 384>}, {pipeline_mode = #tpu.pipeline_mode<synchronous>, transform_indices = @transform_3, window_bounds = array<i64: 1, 384>}, {pipeline_mode = #tpu.pipeline_mode<synchronous>, transform_indices = @transform_4, window_bounds = array<i64: 1, 128>}, {pipeline_mode = #tpu.pipeline_mode<synchronous>, transform_indices = @transform_5, window_bounds = array<i64: 128, 384>}, {pipeline_mode = #tpu.pipeline_mode<synchronous>, transform_indices = @transform_6, window_bounds = array<i64: 128, 384>}, {pipeline_mode = #tpu.pipeline_mode<synchronous>, transform_indices = @transform_7, window_bounds = array<i64: 1, 384>}, {pipeline_mode = #tpu.pipeline_mode<synchronous>, transform_indices = @transform_8, window_bounds = array<i64: 1, 128>}, {pipeline_mode = #tpu.pipeline_mode<synchronous>, transform_indices = @transform_9, window_bounds = array<i64: 1, 128>}, {pipeline_mode = #tpu.pipeline_mode<synchronous>, transform_indices = @transform_10, window_bounds = array<i64: 1, 1>}, {transform_indices = @transform_11, window_bounds = array<i64: 8, 1>}]} {
    %c0 = arith.constant 0 : index
    %c0_0 = arith.constant 0 : index
    %0 = vector.load %arg2[%c0, %c0_0] : memref<16x384xf32, #tpu.memory_space<vmem>>, vector<16x384xf32>
    %c0_1 = arith.constant 0 : index
    %c0_2 = arith.constant 0 : index
    %c0_3 = arith.constant 0 : index
    %1 = vector.load %arg1[%c0_1, %c0_2, %c0_3] : memref<8x8x16xf32, #tpu.memory_space<vmem>>, vector<8x8x16xf32>
    %2 = vector.shape_cast %1 : vector<8x8x16xf32> to vector<64x16xf32>
    %cst = arith.constant dense<0.000000e+00> : vector<64x384xf32>
    %3 = tpu.matmul %2, %0, %cst {dimension_numbers = #tpu.dot_dimension_numbers<[1], [0], [0], [1], [0, 0, 1, 1], [], []>} : vector<64x16xf32>, vector<16x384xf32>, vector<64x384xf32> -> vector<64x384xf32>
    %c0_4 = arith.constant 0 : index
    %c0_5 = arith.constant 0 : index
    %4 = vector.load %arg4[%c0_4, %c0_5] : memref<1x384xf32, #tpu.memory_space<vmem>>, vector<1x384xf32>
    %5 = vector.broadcast %4 : vector<1x384xf32> to vector<64x384xf32>
    %6 = arith.addf %3, %5 : vector<64x384xf32>
    %7 = vector.shape_cast %6 : vector<64x384xf32> to vector<8x8x384xf32>
    %c0_6 = arith.constant 0 : index
    %c0_7 = arith.constant 0 : index
    %c0_8 = arith.constant 0 : index
    %8 = vector.load %arg13[%c0_6, %c0_7, %c0_8] : memref<8x8x384xf32, #tpu.memory_space<vmem>>, vector<8x8x384xf32>
    tpu.vector_store %arg13[%c0_6, %c0_7, %c0_8], %7 {strides = array<i32>} : memref<8x8x384xf32, #tpu.memory_space<vmem>>, vector<8x8x384xf32>,
    %c0_9 = arith.constant 0 : index
    %c0_10 = arith.constant 0 : index
    %9 = vector.load %arg5[%c0_9, %c0_10] : memref<1x128xf32, #tpu.memory_space<vmem>>, vector<1x128xf32>
    %10 = vector.shape_cast %9 : vector<1x128xf32> to vector<1x128xf32>
    %11 = vector.broadcast %10 : vector<1x128xf32> to vector<8x128xf32>
    %cst_11 = arith.constant 0.000000e+00 : f32
    %12 = vector.broadcast %cst_11 : f32 to vector<8x128xf32>
    %c0_i32 = arith.constant 0 : i32
    %13 = arith.index_cast %c0_i32 : i32 to index
    %c0_12 = arith.constant 0 : index
    %c0_13 = arith.constant 0 : index
    %14 = vector.load %arg13[%13, %c0_12, %c0_13] : memref<8x8x384xf32, #tpu.memory_space<vmem>>, vector<1x8x384xf32>
    %15 = vector.shape_cast %14 : vector<1x8x384xf32> to vector<8x384xf32>
    %c0_14 = arith.constant 0 : index
    %c0_15 = arith.constant 0 : index
    %16 = vector.load %arg3[%c0_14, %c0_15] : memref<128x384xf32, #tpu.memory_space<vmem>>, vector<128x384xf32>
    %cst_16 = arith.constant dense<0.000000e+00> : vector<8x384xf32>
    %17 = tpu.matmul %12, %16, %cst_16 {dimension_numbers = #tpu.dot_dimension_numbers<[1], [0], [0], [1], [0, 0, 1, 1], [], []>} : vector<8x128xf32>, vector<128x384xf32>, vector<8x384xf32> -> vector<8x384xf32>
    %18 = vector.extract_strided_slice %15 {offsets = [0, 0], sizes = [8, 128], strides = [1, 1]} : vector<8x384xf32> to vector<8x128xf32>
    %19 = vector.extract_strided_slice %17 {offsets = [0, 0], sizes = [8, 128], strides = [1, 1]} : vector<8x384xf32> to vector<8x128xf32>
    %20 = arith.addf %18, %19 : vector<8x128xf32>
    %21 = arith.negf %20 : vector<8x128xf32>
    %22 = math.exp %21 : vector<8x128xf32>
    %cst_17 = arith.constant 1.000000e+00 : f32
    %23 = vector.broadcast %cst_17 : f32 to vector<8x128xf32>
    %24 = arith.addf %23, %22 : vector<8x128xf32>
    %25 = arith.divf %23, %24 : vector<8x128xf32>
    %26 = vector.extract_strided_slice %15 {offsets = [0, 128], sizes = [8, 128], strides = [1, 1]} : vector<8x384xf32> to vector<8x128xf32>
    %27 = vector.extract_strided_slice %17 {offsets = [0, 128], sizes = [8, 128], strides = [1, 1]} : vector<8x384xf32> to vector<8x128xf32>
    %28 = arith.addf %26, %27 : vector<8x128xf32>
    %29 = arith.negf %28 : vector<8x128xf32>
    %30 = math.exp %29 : vector<8x128xf32>
    %cst_18 = arith.constant 1.000000e+00 : f32
    %31 = vector.broadcast %cst_18 : f32 to vector<8x128xf32>
    %32 = arith.addf %31, %30 : vector<8x128xf32>
    %33 = arith.divf %31, %32 : vector<8x128xf32>
    %34 = vector.extract_strided_slice %15 {offsets = [0, 256], sizes = [8, 128], strides = [1, 1]} : vector<8x384xf32> to vector<8x128xf32>
    %35 = vector.extract_strided_slice %17 {offsets = [0, 256], sizes = [8, 128], strides = [1, 1]} : vector<8x384xf32> to vector<8x128xf32>
    %36 = arith.addf %35, %11 : vector<8x128xf32>
    %37 = arith.mulf %25, %36 : vector<8x128xf32>
    %38 = arith.addf %34, %37 : vector<8x128xf32>
    %39 = math.tanh %38 : vector<8x128xf32>
    %cst_19 = arith.constant 1.000000e+00 : f32
    %40 = vector.broadcast %cst_19 : f32 to vector<8x128xf32>
    %41 = arith.subf %40, %33 : vector<8x128xf32>
    %42 = arith.mulf %41, %39 : vector<8x128xf32>
    %43 = arith.mulf %33, %12 : vector<8x128xf32>
    %44 = arith.addf %42, %43 : vector<8x128xf32>
    %45 = arith.index_cast %c0_i32 : i32 to index
    %c0_20 = arith.constant 0 : index
    %c0_21 = arith.constant 0 : index
    %46 = vector.load %arg14[%45, %c0_20, %c0_21] : memref<8x8x128xf32, #tpu.memory_space<vmem>>, vector<1x8x128xf32>
    %47 = vector.shape_cast %46 : vector<1x8x128xf32> to vector<8x128xf32>
    %48 = vector.shape_cast %44 : vector<8x128xf32> to vector<1x8x128xf32>
    tpu.vector_store %arg14[%45, %c0_20, %c0_21], %48 {strides = array<i32>} : memref<8x8x128xf32, #tpu.memory_space<vmem>>, vector<1x8x128xf32>,
    %c1_i32 = arith.constant 1 : i32
    %49 = arith.index_cast %c1_i32 : i32 to index
    %c0_22 = arith.constant 0 : index
    %c0_23 = arith.constant 0 : index
    %50 = vector.load %arg13[%49, %c0_22, %c0_23] : memref<8x8x384xf32, #tpu.memory_space<vmem>>, vector<1x8x384xf32>
    %51 = vector.shape_cast %50 : vector<1x8x384xf32> to vector<8x384xf32>
    %c0_24 = arith.constant 0 : index
    %c0_25 = arith.constant 0 : index
    %52 = vector.load %arg3[%c0_24, %c0_25] : memref<128x384xf32, #tpu.memory_space<vmem>>, vector<128x384xf32>
    %cst_26 = arith.constant dense<0.000000e+00> : vector<8x384xf32>
    %53 = tpu.matmul %44, %52, %cst_26 {dimension_numbers = #tpu.dot_dimension_numbers<[1], [0], [0], [1], [0, 0, 1, 1], [], []>} : vector<8x128xf32>, vector<128x384xf32>, vector<8x384xf32> -> vector<8x384xf32>
    %54 = vector.extract_strided_slice %51 {offsets = [0, 0], sizes = [8, 128], strides = [1, 1]} : vector<8x384xf32> to vector<8x128xf32>
    %55 = vector.extract_strided_slice %53 {offsets = [0, 0], sizes = [8, 128], strides = [1, 1]} : vector<8x384xf32> to vector<8x128xf32>
    %56 = arith.addf %54, %55 : vector<8x128xf32>
    %57 = arith.negf %56 : vector<8x128xf32>
    %58 = math.exp %57 : vector<8x128xf32>
    %cst_27 = arith.constant 1.000000e+00 : f32
    %59 = vector.broadcast %cst_27 : f32 to vector<8x128xf32>
    %60 = arith.addf %59, %58 : vector<8x128xf32>
    %61 = arith.divf %59, %60 : vector<8x128xf32>
    %62 = vector.extract_strided_slice %51 {offsets = [0, 128], sizes = [8, 128], strides = [1, 1]} : vector<8x384xf32> to vector<8x128xf32>
    %63 = vector.extract_strided_slice %53 {offsets = [0, 128], sizes = [8, 128], strides = [1, 1]} : vector<8x384xf32> to vector<8x128xf32>
    %64 = arith.addf %62, %63 : vector<8x128xf32>
    %65 = arith.negf %64 : vector<8x128xf32>
    %66 = math.exp %65 : vector<8x128xf32>
    %cst_28 = arith.constant 1.000000e+00 : f32
    %67 = vector.broadcast %cst_28 : f32 to vector<8x128xf32>
    %68 = arith.addf %67, %66 : vector<8x128xf32>
    %69 = arith.divf %67, %68 : vector<8x128xf32>
    %70 = vector.extract_strided_slice %51 {offsets = [0, 256], sizes = [8, 128], strides = [1, 1]} : vector<8x384xf32> to vector<8x128xf32>
    %71 = vector.extract_strided_slice %53 {offsets = [0, 256], sizes = [8, 128], strides = [1, 1]} : vector<8x384xf32> to vector<8x128xf32>
    %72 = arith.addf %71, %11 : vector<8x128xf32>
    %73 = arith.mulf %61, %72 : vector<8x128xf32>
    %74 = arith.addf %70, %73 : vector<8x128xf32>
    %75 = math.tanh %74 : vector<8x128xf32>
    %cst_29 = arith.constant 1.000000e+00 : f32
    %76 = vector.broadcast %cst_29 : f32 to vector<8x128xf32>
    %77 = arith.subf %76, %69 : vector<8x128xf32>
    %78 = arith.mulf %77, %75 : vector<8x128xf32>
    %79 = arith.mulf %69, %44 : vector<8x128xf32>
    %80 = arith.addf %78, %79 : vector<8x128xf32>
    %81 = arith.index_cast %c1_i32 : i32 to index
    %c0_30 = arith.constant 0 : index
    %c0_31 = arith.constant 0 : index
    %82 = vector.load %arg14[%81, %c0_30, %c0_31] : memref<8x8x128xf32, #tpu.memory_space<vmem>>, vector<1x8x128xf32>
    %83 = vector.shape_cast %82 : vector<1x8x128xf32> to vector<8x128xf32>
    %84 = vector.shape_cast %80 : vector<8x128xf32> to vector<1x8x128xf32>
    tpu.vector_store %arg14[%81, %c0_30, %c0_31], %84 {strides = array<i32>} : memref<8x8x128xf32, #tpu.memory_space<vmem>>, vector<1x8x128xf32>,
    %c2_i32 = arith.constant 2 : i32
    %85 = arith.index_cast %c2_i32 : i32 to index
    %c0_32 = arith.constant 0 : index
    %c0_33 = arith.constant 0 : index
    %86 = vector.load %arg13[%85, %c0_32, %c0_33] : memref<8x8x384xf32, #tpu.memory_space<vmem>>, vector<1x8x384xf32>
    %87 = vector.shape_cast %86 : vector<1x8x384xf32> to vector<8x384xf32>
    %c0_34 = arith.constant 0 : index
    %c0_35 = arith.constant 0 : index
    %88 = vector.load %arg3[%c0_34, %c0_35] : memref<128x384xf32, #tpu.memory_space<vmem>>, vector<128x384xf32>
    %cst_36 = arith.constant dense<0.000000e+00> : vector<8x384xf32>
    %89 = tpu.matmul %80, %88, %cst_36 {dimension_numbers = #tpu.dot_dimension_numbers<[1], [0], [0], [1], [0, 0, 1, 1], [], []>} : vector<8x128xf32>, vector<128x384xf32>, vector<8x384xf32> -> vector<8x384xf32>
    %90 = vector.extract_strided_slice %87 {offsets = [0, 0], sizes = [8, 128], strides = [1, 1]} : vector<8x384xf32> to vector<8x128xf32>
    %91 = vector.extract_strided_slice %89 {offsets = [0, 0], sizes = [8, 128], strides = [1, 1]} : vector<8x384xf32> to vector<8x128xf32>
    %92 = arith.addf %90, %91 : vector<8x128xf32>
    %93 = arith.negf %92 : vector<8x128xf32>
    %94 = math.exp %93 : vector<8x128xf32>
    %cst_37 = arith.constant 1.000000e+00 : f32
    %95 = vector.broadcast %cst_37 : f32 to vector<8x128xf32>
    %96 = arith.addf %95, %94 : vector<8x128xf32>
    %97 = arith.divf %95, %96 : vector<8x128xf32>
    %98 = vector.extract_strided_slice %87 {offsets = [0, 128], sizes = [8, 128], strides = [1, 1]} : vector<8x384xf32> to vector<8x128xf32>
    %99 = vector.extract_strided_slice %89 {offsets = [0, 128], sizes = [8, 128], strides = [1, 1]} : vector<8x384xf32> to vector<8x128xf32>
    %100 = arith.addf %98, %99 : vector<8x128xf32>
    %101 = arith.negf %100 : vector<8x128xf32>
    %102 = math.exp %101 : vector<8x128xf32>
    %cst_38 = arith.constant 1.000000e+00 : f32
    %103 = vector.broadcast %cst_38 : f32 to vector<8x128xf32>
    %104 = arith.addf %103, %102 : vector<8x128xf32>
    %105 = arith.divf %103, %104 : vector<8x128xf32>
    %106 = vector.extract_strided_slice %87 {offsets = [0, 256], sizes = [8, 128], strides = [1, 1]} : vector<8x384xf32> to vector<8x128xf32>
    %107 = vector.extract_strided_slice %89 {offsets = [0, 256], sizes = [8, 128], strides = [1, 1]} : vector<8x384xf32> to vector<8x128xf32>
    %108 = arith.addf %107, %11 : vector<8x128xf32>
    %109 = arith.mulf %97, %108 : vector<8x128xf32>
    %110 = arith.addf %106, %109 : vector<8x128xf32>
    %111 = math.tanh %110 : vector<8x128xf32>
    %cst_39 = arith.constant 1.000000e+00 : f32
    %112 = vector.broadcast %cst_39 : f32 to vector<8x128xf32>
    %113 = arith.subf %112, %105 : vector<8x128xf32>
    %114 = arith.mulf %113, %111 : vector<8x128xf32>
    %115 = arith.mulf %105, %80 : vector<8x128xf32>
    %116 = arith.addf %114, %115 : vector<8x128xf32>
    %117 = arith.index_cast %c2_i32 : i32 to index
    %c0_40 = arith.constant 0 : index
    %c0_41 = arith.constant 0 : index
    %118 = vector.load %arg14[%117, %c0_40, %c0_41] : memref<8x8x128xf32, #tpu.memory_space<vmem>>, vector<1x8x128xf32>
    %119 = vector.shape_cast %118 : vector<1x8x128xf32> to vector<8x128xf32>
    %120 = vector.shape_cast %116 : vector<8x128xf32> to vector<1x8x128xf32>
    tpu.vector_store %arg14[%117, %c0_40, %c0_41], %120 {strides = array<i32>} : memref<8x8x128xf32, #tpu.memory_space<vmem>>, vector<1x8x128xf32>,
    %c3_i32 = arith.constant 3 : i32
    %121 = arith.index_cast %c3_i32 : i32 to index
    %c0_42 = arith.constant 0 : index
    %c0_43 = arith.constant 0 : index
    %122 = vector.load %arg13[%121, %c0_42, %c0_43] : memref<8x8x384xf32, #tpu.memory_space<vmem>>, vector<1x8x384xf32>
    %123 = vector.shape_cast %122 : vector<1x8x384xf32> to vector<8x384xf32>
    %c0_44 = arith.constant 0 : index
    %c0_45 = arith.constant 0 : index
    %124 = vector.load %arg3[%c0_44, %c0_45] : memref<128x384xf32, #tpu.memory_space<vmem>>, vector<128x384xf32>
    %cst_46 = arith.constant dense<0.000000e+00> : vector<8x384xf32>
    %125 = tpu.matmul %116, %124, %cst_46 {dimension_numbers = #tpu.dot_dimension_numbers<[1], [0], [0], [1], [0, 0, 1, 1], [], []>} : vector<8x128xf32>, vector<128x384xf32>, vector<8x384xf32> -> vector<8x384xf32>
    %126 = vector.extract_strided_slice %123 {offsets = [0, 0], sizes = [8, 128], strides = [1, 1]} : vector<8x384xf32> to vector<8x128xf32>
    %127 = vector.extract_strided_slice %125 {offsets = [0, 0], sizes = [8, 128], strides = [1, 1]} : vector<8x384xf32> to vector<8x128xf32>
    %128 = arith.addf %126, %127 : vector<8x128xf32>
    %129 = arith.negf %128 : vector<8x128xf32>
    %130 = math.exp %129 : vector<8x128xf32>
    %cst_47 = arith.constant 1.000000e+00 : f32
    %131 = vector.broadcast %cst_47 : f32 to vector<8x128xf32>
    %132 = arith.addf %131, %130 : vector<8x128xf32>
    %133 = arith.divf %131, %132 : vector<8x128xf32>
    %134 = vector.extract_strided_slice %123 {offsets = [0, 128], sizes = [8, 128], strides = [1, 1]} : vector<8x384xf32> to vector<8x128xf32>
    %135 = vector.extract_strided_slice %125 {offsets = [0, 128], sizes = [8, 128], strides = [1, 1]} : vector<8x384xf32> to vector<8x128xf32>
    %136 = arith.addf %134, %135 : vector<8x128xf32>
    %137 = arith.negf %136 : vector<8x128xf32>
    %138 = math.exp %137 : vector<8x128xf32>
    %cst_48 = arith.constant 1.000000e+00 : f32
    %139 = vector.broadcast %cst_48 : f32 to vector<8x128xf32>
    %140 = arith.addf %139, %138 : vector<8x128xf32>
    %141 = arith.divf %139, %140 : vector<8x128xf32>
    %142 = vector.extract_strided_slice %123 {offsets = [0, 256], sizes = [8, 128], strides = [1, 1]} : vector<8x384xf32> to vector<8x128xf32>
    %143 = vector.extract_strided_slice %125 {offsets = [0, 256], sizes = [8, 128], strides = [1, 1]} : vector<8x384xf32> to vector<8x128xf32>
    %144 = arith.addf %143, %11 : vector<8x128xf32>
    %145 = arith.mulf %133, %144 : vector<8x128xf32>
    %146 = arith.addf %142, %145 : vector<8x128xf32>
    %147 = math.tanh %146 : vector<8x128xf32>
    %cst_49 = arith.constant 1.000000e+00 : f32
    %148 = vector.broadcast %cst_49 : f32 to vector<8x128xf32>
    %149 = arith.subf %148, %141 : vector<8x128xf32>
    %150 = arith.mulf %149, %147 : vector<8x128xf32>
    %151 = arith.mulf %141, %116 : vector<8x128xf32>
    %152 = arith.addf %150, %151 : vector<8x128xf32>
    %153 = arith.index_cast %c3_i32 : i32 to index
    %c0_50 = arith.constant 0 : index
    %c0_51 = arith.constant 0 : index
    %154 = vector.load %arg14[%153, %c0_50, %c0_51] : memref<8x8x128xf32, #tpu.memory_space<vmem>>, vector<1x8x128xf32>
    %155 = vector.shape_cast %154 : vector<1x8x128xf32> to vector<8x128xf32>
    %156 = vector.shape_cast %152 : vector<8x128xf32> to vector<1x8x128xf32>
    tpu.vector_store %arg14[%153, %c0_50, %c0_51], %156 {strides = array<i32>} : memref<8x8x128xf32, #tpu.memory_space<vmem>>, vector<1x8x128xf32>,
    %c4_i32 = arith.constant 4 : i32
    %157 = arith.index_cast %c4_i32 : i32 to index
    %c0_52 = arith.constant 0 : index
    %c0_53 = arith.constant 0 : index
    %158 = vector.load %arg13[%157, %c0_52, %c0_53] : memref<8x8x384xf32, #tpu.memory_space<vmem>>, vector<1x8x384xf32>
    %159 = vector.shape_cast %158 : vector<1x8x384xf32> to vector<8x384xf32>
    %c0_54 = arith.constant 0 : index
    %c0_55 = arith.constant 0 : index
    %160 = vector.load %arg3[%c0_54, %c0_55] : memref<128x384xf32, #tpu.memory_space<vmem>>, vector<128x384xf32>
    %cst_56 = arith.constant dense<0.000000e+00> : vector<8x384xf32>
    %161 = tpu.matmul %152, %160, %cst_56 {dimension_numbers = #tpu.dot_dimension_numbers<[1], [0], [0], [1], [0, 0, 1, 1], [], []>} : vector<8x128xf32>, vector<128x384xf32>, vector<8x384xf32> -> vector<8x384xf32>
    %162 = vector.extract_strided_slice %159 {offsets = [0, 0], sizes = [8, 128], strides = [1, 1]} : vector<8x384xf32> to vector<8x128xf32>
    %163 = vector.extract_strided_slice %161 {offsets = [0, 0], sizes = [8, 128], strides = [1, 1]} : vector<8x384xf32> to vector<8x128xf32>
    %164 = arith.addf %162, %163 : vector<8x128xf32>
    %165 = arith.negf %164 : vector<8x128xf32>
    %166 = math.exp %165 : vector<8x128xf32>
    %cst_57 = arith.constant 1.000000e+00 : f32
    %167 = vector.broadcast %cst_57 : f32 to vector<8x128xf32>
    %168 = arith.addf %167, %166 : vector<8x128xf32>
    %169 = arith.divf %167, %168 : vector<8x128xf32>
    %170 = vector.extract_strided_slice %159 {offsets = [0, 128], sizes = [8, 128], strides = [1, 1]} : vector<8x384xf32> to vector<8x128xf32>
    %171 = vector.extract_strided_slice %161 {offsets = [0, 128], sizes = [8, 128], strides = [1, 1]} : vector<8x384xf32> to vector<8x128xf32>
    %172 = arith.addf %170, %171 : vector<8x128xf32>
    %173 = arith.negf %172 : vector<8x128xf32>
    %174 = math.exp %173 : vector<8x128xf32>
    %cst_58 = arith.constant 1.000000e+00 : f32
    %175 = vector.broadcast %cst_58 : f32 to vector<8x128xf32>
    %176 = arith.addf %175, %174 : vector<8x128xf32>
    %177 = arith.divf %175, %176 : vector<8x128xf32>
    %178 = vector.extract_strided_slice %159 {offsets = [0, 256], sizes = [8, 128], strides = [1, 1]} : vector<8x384xf32> to vector<8x128xf32>
    %179 = vector.extract_strided_slice %161 {offsets = [0, 256], sizes = [8, 128], strides = [1, 1]} : vector<8x384xf32> to vector<8x128xf32>
    %180 = arith.addf %179, %11 : vector<8x128xf32>
    %181 = arith.mulf %169, %180 : vector<8x128xf32>
    %182 = arith.addf %178, %181 : vector<8x128xf32>
    %183 = math.tanh %182 : vector<8x128xf32>
    %cst_59 = arith.constant 1.000000e+00 : f32
    %184 = vector.broadcast %cst_59 : f32 to vector<8x128xf32>
    %185 = arith.subf %184, %177 : vector<8x128xf32>
    %186 = arith.mulf %185, %183 : vector<8x128xf32>
    %187 = arith.mulf %177, %152 : vector<8x128xf32>
    %188 = arith.addf %186, %187 : vector<8x128xf32>
    %189 = arith.index_cast %c4_i32 : i32 to index
    %c0_60 = arith.constant 0 : index
    %c0_61 = arith.constant 0 : index
    %190 = vector.load %arg14[%189, %c0_60, %c0_61] : memref<8x8x128xf32, #tpu.memory_space<vmem>>, vector<1x8x128xf32>
    %191 = vector.shape_cast %190 : vector<1x8x128xf32> to vector<8x128xf32>
    %192 = vector.shape_cast %188 : vector<8x128xf32> to vector<1x8x128xf32>
    tpu.vector_store %arg14[%189, %c0_60, %c0_61], %192 {strides = array<i32>} : memref<8x8x128xf32, #tpu.memory_space<vmem>>, vector<1x8x128xf32>,
    %c5_i32 = arith.constant 5 : i32
    %193 = arith.index_cast %c5_i32 : i32 to index
    %c0_62 = arith.constant 0 : index
    %c0_63 = arith.constant 0 : index
    %194 = vector.load %arg13[%193, %c0_62, %c0_63] : memref<8x8x384xf32, #tpu.memory_space<vmem>>, vector<1x8x384xf32>
    %195 = vector.shape_cast %194 : vector<1x8x384xf32> to vector<8x384xf32>
    %c0_64 = arith.constant 0 : index
    %c0_65 = arith.constant 0 : index
    %196 = vector.load %arg3[%c0_64, %c0_65] : memref<128x384xf32, #tpu.memory_space<vmem>>, vector<128x384xf32>
    %cst_66 = arith.constant dense<0.000000e+00> : vector<8x384xf32>
    %197 = tpu.matmul %188, %196, %cst_66 {dimension_numbers = #tpu.dot_dimension_numbers<[1], [0], [0], [1], [0, 0, 1, 1], [], []>} : vector<8x128xf32>, vector<128x384xf32>, vector<8x384xf32> -> vector<8x384xf32>
    %198 = vector.extract_strided_slice %195 {offsets = [0, 0], sizes = [8, 128], strides = [1, 1]} : vector<8x384xf32> to vector<8x128xf32>
    %199 = vector.extract_strided_slice %197 {offsets = [0, 0], sizes = [8, 128], strides = [1, 1]} : vector<8x384xf32> to vector<8x128xf32>
    %200 = arith.addf %198, %199 : vector<8x128xf32>
    %201 = arith.negf %200 : vector<8x128xf32>
    %202 = math.exp %201 : vector<8x128xf32>
    %cst_67 = arith.constant 1.000000e+00 : f32
    %203 = vector.broadcast %cst_67 : f32 to vector<8x128xf32>
    %204 = arith.addf %203, %202 : vector<8x128xf32>
    %205 = arith.divf %203, %204 : vector<8x128xf32>
    %206 = vector.extract_strided_slice %195 {offsets = [0, 128], sizes = [8, 128], strides = [1, 1]} : vector<8x384xf32> to vector<8x128xf32>
    %207 = vector.extract_strided_slice %197 {offsets = [0, 128], sizes = [8, 128], strides = [1, 1]} : vector<8x384xf32> to vector<8x128xf32>
    %208 = arith.addf %206, %207 : vector<8x128xf32>
    %209 = arith.negf %208 : vector<8x128xf32>
    %210 = math.exp %209 : vector<8x128xf32>
    %cst_68 = arith.constant 1.000000e+00 : f32
    %211 = vector.broadcast %cst_68 : f32 to vector<8x128xf32>
    %212 = arith.addf %211, %210 : vector<8x128xf32>
    %213 = arith.divf %211, %212 : vector<8x128xf32>
    %214 = vector.extract_strided_slice %195 {offsets = [0, 256], sizes = [8, 128], strides = [1, 1]} : vector<8x384xf32> to vector<8x128xf32>
    %215 = vector.extract_strided_slice %197 {offsets = [0, 256], sizes = [8, 128], strides = [1, 1]} : vector<8x384xf32> to vector<8x128xf32>
    %216 = arith.addf %215, %11 : vector<8x128xf32>
    %217 = arith.mulf %205, %216 : vector<8x128xf32>
    %218 = arith.addf %214, %217 : vector<8x128xf32>
    %219 = math.tanh %218 : vector<8x128xf32>
    %cst_69 = arith.constant 1.000000e+00 : f32
    %220 = vector.broadcast %cst_69 : f32 to vector<8x128xf32>
    %221 = arith.subf %220, %213 : vector<8x128xf32>
    %222 = arith.mulf %221, %219 : vector<8x128xf32>
    %223 = arith.mulf %213, %188 : vector<8x128xf32>
    %224 = arith.addf %222, %223 : vector<8x128xf32>
    %225 = arith.index_cast %c5_i32 : i32 to index
    %c0_70 = arith.constant 0 : index
    %c0_71 = arith.constant 0 : index
    %226 = vector.load %arg14[%225, %c0_70, %c0_71] : memref<8x8x128xf32, #tpu.memory_space<vmem>>, vector<1x8x128xf32>
    %227 = vector.shape_cast %226 : vector<1x8x128xf32> to vector<8x128xf32>
    %228 = vector.shape_cast %224 : vector<8x128xf32> to vector<1x8x128xf32>
    tpu.vector_store %arg14[%225, %c0_70, %c0_71], %228 {strides = array<i32>} : memref<8x8x128xf32, #tpu.memory_space<vmem>>, vector<1x8x128xf32>,
    %c6_i32 = arith.constant 6 : i32
    %229 = arith.index_cast %c6_i32 : i32 to index
    %c0_72 = arith.constant 0 : index
    %c0_73 = arith.constant 0 : index
    %230 = vector.load %arg13[%229, %c0_72, %c0_73] : memref<8x8x384xf32, #tpu.memory_space<vmem>>, vector<1x8x384xf32>
    %231 = vector.shape_cast %230 : vector<1x8x384xf32> to vector<8x384xf32>
    %c0_74 = arith.constant 0 : index
    %c0_75 = arith.constant 0 : index
    %232 = vector.load %arg3[%c0_74, %c0_75] : memref<128x384xf32, #tpu.memory_space<vmem>>, vector<128x384xf32>
    %cst_76 = arith.constant dense<0.000000e+00> : vector<8x384xf32>
    %233 = tpu.matmul %224, %232, %cst_76 {dimension_numbers = #tpu.dot_dimension_numbers<[1], [0], [0], [1], [0, 0, 1, 1], [], []>} : vector<8x128xf32>, vector<128x384xf32>, vector<8x384xf32> -> vector<8x384xf32>
    %234 = vector.extract_strided_slice %231 {offsets = [0, 0], sizes = [8, 128], strides = [1, 1]} : vector<8x384xf32> to vector<8x128xf32>
    %235 = vector.extract_strided_slice %233 {offsets = [0, 0], sizes = [8, 128], strides = [1, 1]} : vector<8x384xf32> to vector<8x128xf32>
    %236 = arith.addf %234, %235 : vector<8x128xf32>
    %237 = arith.negf %236 : vector<8x128xf32>
    %238 = math.exp %237 : vector<8x128xf32>
    %cst_77 = arith.constant 1.000000e+00 : f32
    %239 = vector.broadcast %cst_77 : f32 to vector<8x128xf32>
    %240 = arith.addf %239, %238 : vector<8x128xf32>
    %241 = arith.divf %239, %240 : vector<8x128xf32>
    %242 = vector.extract_strided_slice %231 {offsets = [0, 128], sizes = [8, 128], strides = [1, 1]} : vector<8x384xf32> to vector<8x128xf32>
    %243 = vector.extract_strided_slice %233 {offsets = [0, 128], sizes = [8, 128], strides = [1, 1]} : vector<8x384xf32> to vector<8x128xf32>
    %244 = arith.addf %242, %243 : vector<8x128xf32>
    %245 = arith.negf %244 : vector<8x128xf32>
    %246 = math.exp %245 : vector<8x128xf32>
    %cst_78 = arith.constant 1.000000e+00 : f32
    %247 = vector.broadcast %cst_78 : f32 to vector<8x128xf32>
    %248 = arith.addf %247, %246 : vector<8x128xf32>
    %249 = arith.divf %247, %248 : vector<8x128xf32>
    %250 = vector.extract_strided_slice %231 {offsets = [0, 256], sizes = [8, 128], strides = [1, 1]} : vector<8x384xf32> to vector<8x128xf32>
    %251 = vector.extract_strided_slice %233 {offsets = [0, 256], sizes = [8, 128], strides = [1, 1]} : vector<8x384xf32> to vector<8x128xf32>
    %252 = arith.addf %251, %11 : vector<8x128xf32>
    %253 = arith.mulf %241, %252 : vector<8x128xf32>
    %254 = arith.addf %250, %253 : vector<8x128xf32>
    %255 = math.tanh %254 : vector<8x128xf32>
    %cst_79 = arith.constant 1.000000e+00 : f32
    %256 = vector.broadcast %cst_79 : f32 to vector<8x128xf32>
    %257 = arith.subf %256, %249 : vector<8x128xf32>
    %258 = arith.mulf %257, %255 : vector<8x128xf32>
    %259 = arith.mulf %249, %224 : vector<8x128xf32>
    %260 = arith.addf %258, %259 : vector<8x128xf32>
    %261 = arith.index_cast %c6_i32 : i32 to index
    %c0_80 = arith.constant 0 : index
    %c0_81 = arith.constant 0 : index
    %262 = vector.load %arg14[%261, %c0_80, %c0_81] : memref<8x8x128xf32, #tpu.memory_space<vmem>>, vector<1x8x128xf32>
    %263 = vector.shape_cast %262 : vector<1x8x128xf32> to vector<8x128xf32>
    %264 = vector.shape_cast %260 : vector<8x128xf32> to vector<1x8x128xf32>
    tpu.vector_store %arg14[%261, %c0_80, %c0_81], %264 {strides = array<i32>} : memref<8x8x128xf32, #tpu.memory_space<vmem>>, vector<1x8x128xf32>,
    %c7_i32 = arith.constant 7 : i32
    %265 = arith.index_cast %c7_i32 : i32 to index
    %c0_82 = arith.constant 0 : index
    %c0_83 = arith.constant 0 : index
    %266 = vector.load %arg13[%265, %c0_82, %c0_83] : memref<8x8x384xf32, #tpu.memory_space<vmem>>, vector<1x8x384xf32>
    %267 = vector.shape_cast %266 : vector<1x8x384xf32> to vector<8x384xf32>
    %c0_84 = arith.constant 0 : index
    %c0_85 = arith.constant 0 : index
    %268 = vector.load %arg3[%c0_84, %c0_85] : memref<128x384xf32, #tpu.memory_space<vmem>>, vector<128x384xf32>
    %cst_86 = arith.constant dense<0.000000e+00> : vector<8x384xf32>
    %269 = tpu.matmul %260, %268, %cst_86 {dimension_numbers = #tpu.dot_dimension_numbers<[1], [0], [0], [1], [0, 0, 1, 1], [], []>} : vector<8x128xf32>, vector<128x384xf32>, vector<8x384xf32> -> vector<8x384xf32>
    %270 = vector.extract_strided_slice %267 {offsets = [0, 0], sizes = [8, 128], strides = [1, 1]} : vector<8x384xf32> to vector<8x128xf32>
    %271 = vector.extract_strided_slice %269 {offsets = [0, 0], sizes = [8, 128], strides = [1, 1]} : vector<8x384xf32> to vector<8x128xf32>
    %272 = arith.addf %270, %271 : vector<8x128xf32>
    %273 = arith.negf %272 : vector<8x128xf32>
    %274 = math.exp %273 : vector<8x128xf32>
    %cst_87 = arith.constant 1.000000e+00 : f32
    %275 = vector.broadcast %cst_87 : f32 to vector<8x128xf32>
    %276 = arith.addf %275, %274 : vector<8x128xf32>
    %277 = arith.divf %275, %276 : vector<8x128xf32>
    %278 = vector.extract_strided_slice %267 {offsets = [0, 128], sizes = [8, 128], strides = [1, 1]} : vector<8x384xf32> to vector<8x128xf32>
    %279 = vector.extract_strided_slice %269 {offsets = [0, 128], sizes = [8, 128], strides = [1, 1]} : vector<8x384xf32> to vector<8x128xf32>
    %280 = arith.addf %278, %279 : vector<8x128xf32>
    %281 = arith.negf %280 : vector<8x128xf32>
    %282 = math.exp %281 : vector<8x128xf32>
    %cst_88 = arith.constant 1.000000e+00 : f32
    %283 = vector.broadcast %cst_88 : f32 to vector<8x128xf32>
    %284 = arith.addf %283, %282 : vector<8x128xf32>
    %285 = arith.divf %283, %284 : vector<8x128xf32>
    %286 = vector.extract_strided_slice %267 {offsets = [0, 256], sizes = [8, 128], strides = [1, 1]} : vector<8x384xf32> to vector<8x128xf32>
    %287 = vector.extract_strided_slice %269 {offsets = [0, 256], sizes = [8, 128], strides = [1, 1]} : vector<8x384xf32> to vector<8x128xf32>
    %288 = arith.addf %287, %11 : vector<8x128xf32>
    %289 = arith.mulf %277, %288 : vector<8x128xf32>
    %290 = arith.addf %286, %289 : vector<8x128xf32>
    %291 = math.tanh %290 : vector<8x128xf32>
    %cst_89 = arith.constant 1.000000e+00 : f32
    %292 = vector.broadcast %cst_89 : f32 to vector<8x128xf32>
    %293 = arith.subf %292, %285 : vector<8x128xf32>
    %294 = arith.mulf %293, %291 : vector<8x128xf32>
    %295 = arith.mulf %285, %260 : vector<8x128xf32>
    %296 = arith.addf %294, %295 : vector<8x128xf32>
    %297 = arith.index_cast %c7_i32 : i32 to index
    %c0_90 = arith.constant 0 : index
    %c0_91 = arith.constant 0 : index
    %298 = vector.load %arg14[%297, %c0_90, %c0_91] : memref<8x8x128xf32, #tpu.memory_space<vmem>>, vector<1x8x128xf32>
    %299 = vector.shape_cast %298 : vector<1x8x128xf32> to vector<8x128xf32>
    %300 = vector.shape_cast %296 : vector<8x128xf32> to vector<1x8x128xf32>
    tpu.vector_store %arg14[%297, %c0_90, %c0_91], %300 {strides = array<i32>} : memref<8x8x128xf32, #tpu.memory_space<vmem>>, vector<1x8x128xf32>,
    %c8_i32 = arith.constant 8 : i32
    %c0_92 = arith.constant 0 : index
    %c0_93 = arith.constant 0 : index
    %301 = vector.load %arg6[%c0_92, %c0_93] : memref<128x384xf32, #tpu.memory_space<vmem>>, vector<128x384xf32>
    %c0_94 = arith.constant 0 : index
    %c0_95 = arith.constant 0 : index
    %c0_96 = arith.constant 0 : index
    %302 = vector.load %arg14[%c0_94, %c0_95, %c0_96] : memref<8x8x128xf32, #tpu.memory_space<vmem>>, vector<8x8x128xf32>
    %303 = vector.shape_cast %302 : vector<8x8x128xf32> to vector<64x128xf32>
    %cst_97 = arith.constant dense<0.000000e+00> : vector<64x384xf32>
    %304 = tpu.matmul %303, %301, %cst_97 {dimension_numbers = #tpu.dot_dimension_numbers<[1], [0], [0], [1], [0, 0, 1, 1], [], []>} : vector<64x128xf32>, vector<128x384xf32>, vector<64x384xf32> -> vector<64x384xf32>
    %c0_98 = arith.constant 0 : index
    %c0_99 = arith.constant 0 : index
    %305 = vector.load %arg8[%c0_98, %c0_99] : memref<1x384xf32, #tpu.memory_space<vmem>>, vector<1x384xf32>
    %306 = vector.broadcast %305 : vector<1x384xf32> to vector<64x384xf32>
    %307 = arith.addf %304, %306 : vector<64x384xf32>
    %308 = vector.shape_cast %307 : vector<64x384xf32> to vector<8x8x384xf32>
    %c0_100 = arith.constant 0 : index
    %c0_101 = arith.constant 0 : index
    %c0_102 = arith.constant 0 : index
    %309 = vector.load %arg13[%c0_100, %c0_101, %c0_102] : memref<8x8x384xf32, #tpu.memory_space<vmem>>, vector<8x8x384xf32>
    tpu.vector_store %arg13[%c0_100, %c0_101, %c0_102], %308 {strides = array<i32>} : memref<8x8x384xf32, #tpu.memory_space<vmem>>, vector<8x8x384xf32>,
    %c0_103 = arith.constant 0 : index
    %c0_104 = arith.constant 0 : index
    %310 = vector.load %arg9[%c0_103, %c0_104] : memref<1x128xf32, #tpu.memory_space<vmem>>, vector<1x128xf32>
    %311 = vector.shape_cast %310 : vector<1x128xf32> to vector<1x128xf32>
    %312 = vector.broadcast %311 : vector<1x128xf32> to vector<8x128xf32>
    %cst_105 = arith.constant 0.000000e+00 : f32
    %313 = vector.broadcast %cst_105 : f32 to vector<8x128xf32>
    %c0_i32_106 = arith.constant 0 : i32
    %314 = arith.index_cast %c0_i32_106 : i32 to index
    %c0_107 = arith.constant 0 : index
    %c0_108 = arith.constant 0 : index
    %315 = vector.load %arg13[%314, %c0_107, %c0_108] : memref<8x8x384xf32, #tpu.memory_space<vmem>>, vector<1x8x384xf32>
    %316 = vector.shape_cast %315 : vector<1x8x384xf32> to vector<8x384xf32>
    %c0_109 = arith.constant 0 : index
    %c0_110 = arith.constant 0 : index
    %317 = vector.load %arg7[%c0_109, %c0_110] : memref<128x384xf32, #tpu.memory_space<vmem>>, vector<128x384xf32>
    %cst_111 = arith.constant dense<0.000000e+00> : vector<8x384xf32>
    %318 = tpu.matmul %313, %317, %cst_111 {dimension_numbers = #tpu.dot_dimension_numbers<[1], [0], [0], [1], [0, 0, 1, 1], [], []>} : vector<8x128xf32>, vector<128x384xf32>, vector<8x384xf32> -> vector<8x384xf32>
    %319 = vector.extract_strided_slice %316 {offsets = [0, 0], sizes = [8, 128], strides = [1, 1]} : vector<8x384xf32> to vector<8x128xf32>
    %320 = vector.extract_strided_slice %318 {offsets = [0, 0], sizes = [8, 128], strides = [1, 1]} : vector<8x384xf32> to vector<8x128xf32>
    %321 = arith.addf %319, %320 : vector<8x128xf32>
    %322 = arith.negf %321 : vector<8x128xf32>
    %323 = math.exp %322 : vector<8x128xf32>
    %cst_112 = arith.constant 1.000000e+00 : f32
    %324 = vector.broadcast %cst_112 : f32 to vector<8x128xf32>
    %325 = arith.addf %324, %323 : vector<8x128xf32>
    %326 = arith.divf %324, %325 : vector<8x128xf32>
    %327 = vector.extract_strided_slice %316 {offsets = [0, 128], sizes = [8, 128], strides = [1, 1]} : vector<8x384xf32> to vector<8x128xf32>
    %328 = vector.extract_strided_slice %318 {offsets = [0, 128], sizes = [8, 128], strides = [1, 1]} : vector<8x384xf32> to vector<8x128xf32>
    %329 = arith.addf %327, %328 : vector<8x128xf32>
    %330 = arith.negf %329 : vector<8x128xf32>
    %331 = math.exp %330 : vector<8x128xf32>
    %cst_113 = arith.constant 1.000000e+00 : f32
    %332 = vector.broadcast %cst_113 : f32 to vector<8x128xf32>
    %333 = arith.addf %332, %331 : vector<8x128xf32>
    %334 = arith.divf %332, %333 : vector<8x128xf32>
    %335 = vector.extract_strided_slice %316 {offsets = [0, 256], sizes = [8, 128], strides = [1, 1]} : vector<8x384xf32> to vector<8x128xf32>
    %336 = vector.extract_strided_slice %318 {offsets = [0, 256], sizes = [8, 128], strides = [1, 1]} : vector<8x384xf32> to vector<8x128xf32>
    %337 = arith.addf %336, %312 : vector<8x128xf32>
    %338 = arith.mulf %326, %337 : vector<8x128xf32>
    %339 = arith.addf %335, %338 : vector<8x128xf32>
    %340 = math.tanh %339 : vector<8x128xf32>
    %cst_114 = arith.constant 1.000000e+00 : f32
    %341 = vector.broadcast %cst_114 : f32 to vector<8x128xf32>
    %342 = arith.subf %341, %334 : vector<8x128xf32>
    %343 = arith.mulf %342, %340 : vector<8x128xf32>
    %344 = arith.mulf %334, %313 : vector<8x128xf32>
    %345 = arith.addf %343, %344 : vector<8x128xf32>
    %c1_i32_115 = arith.constant 1 : i32
    %346 = arith.index_cast %c1_i32_115 : i32 to index
    %c0_116 = arith.constant 0 : index
    %c0_117 = arith.constant 0 : index
    %347 = vector.load %arg13[%346, %c0_116, %c0_117] : memref<8x8x384xf32, #tpu.memory_space<vmem>>, vector<1x8x384xf32>
    %348 = vector.shape_cast %347 : vector<1x8x384xf32> to vector<8x384xf32>
    %c0_118 = arith.constant 0 : index
    %c0_119 = arith.constant 0 : index
    %349 = vector.load %arg7[%c0_118, %c0_119] : memref<128x384xf32, #tpu.memory_space<vmem>>, vector<128x384xf32>
    %cst_120 = arith.constant dense<0.000000e+00> : vector<8x384xf32>
    %350 = tpu.matmul %345, %349, %cst_120 {dimension_numbers = #tpu.dot_dimension_numbers<[1], [0], [0], [1], [0, 0, 1, 1], [], []>} : vector<8x128xf32>, vector<128x384xf32>, vector<8x384xf32> -> vector<8x384xf32>
    %351 = vector.extract_strided_slice %348 {offsets = [0, 0], sizes = [8, 128], strides = [1, 1]} : vector<8x384xf32> to vector<8x128xf32>
    %352 = vector.extract_strided_slice %350 {offsets = [0, 0], sizes = [8, 128], strides = [1, 1]} : vector<8x384xf32> to vector<8x128xf32>
    %353 = arith.addf %351, %352 : vector<8x128xf32>
    %354 = arith.negf %353 : vector<8x128xf32>
    %355 = math.exp %354 : vector<8x128xf32>
    %cst_121 = arith.constant 1.000000e+00 : f32
    %356 = vector.broadcast %cst_121 : f32 to vector<8x128xf32>
    %357 = arith.addf %356, %355 : vector<8x128xf32>
    %358 = arith.divf %356, %357 : vector<8x128xf32>
    %359 = vector.extract_strided_slice %348 {offsets = [0, 128], sizes = [8, 128], strides = [1, 1]} : vector<8x384xf32> to vector<8x128xf32>
    %360 = vector.extract_strided_slice %350 {offsets = [0, 128], sizes = [8, 128], strides = [1, 1]} : vector<8x384xf32> to vector<8x128xf32>
    %361 = arith.addf %359, %360 : vector<8x128xf32>
    %362 = arith.negf %361 : vector<8x128xf32>
    %363 = math.exp %362 : vector<8x128xf32>
    %cst_122 = arith.constant 1.000000e+00 : f32
    %364 = vector.broadcast %cst_122 : f32 to vector<8x128xf32>
    %365 = arith.addf %364, %363 : vector<8x128xf32>
    %366 = arith.divf %364, %365 : vector<8x128xf32>
    %367 = vector.extract_strided_slice %348 {offsets = [0, 256], sizes = [8, 128], strides = [1, 1]} : vector<8x384xf32> to vector<8x128xf32>
    %368 = vector.extract_strided_slice %350 {offsets = [0, 256], sizes = [8, 128], strides = [1, 1]} : vector<8x384xf32> to vector<8x128xf32>
    %369 = arith.addf %368, %312 : vector<8x128xf32>
    %370 = arith.mulf %358, %369 : vector<8x128xf32>
    %371 = arith.addf %367, %370 : vector<8x128xf32>
    %372 = math.tanh %371 : vector<8x128xf32>
    %cst_123 = arith.constant 1.000000e+00 : f32
    %373 = vector.broadcast %cst_123 : f32 to vector<8x128xf32>
    %374 = arith.subf %373, %366 : vector<8x128xf32>
    %375 = arith.mulf %374, %372 : vector<8x128xf32>
    %376 = arith.mulf %366, %345 : vector<8x128xf32>
    %377 = arith.addf %375, %376 : vector<8x128xf32>
    %c2_i32_124 = arith.constant 2 : i32
    %378 = arith.index_cast %c2_i32_124 : i32 to index
    %c0_125 = arith.constant 0 : index
    %c0_126 = arith.constant 0 : index
    %379 = vector.load %arg13[%378, %c0_125, %c0_126] : memref<8x8x384xf32, #tpu.memory_space<vmem>>, vector<1x8x384xf32>
    %380 = vector.shape_cast %379 : vector<1x8x384xf32> to vector<8x384xf32>
    %c0_127 = arith.constant 0 : index
    %c0_128 = arith.constant 0 : index
    %381 = vector.load %arg7[%c0_127, %c0_128] : memref<128x384xf32, #tpu.memory_space<vmem>>, vector<128x384xf32>
    %cst_129 = arith.constant dense<0.000000e+00> : vector<8x384xf32>
    %382 = tpu.matmul %377, %381, %cst_129 {dimension_numbers = #tpu.dot_dimension_numbers<[1], [0], [0], [1], [0, 0, 1, 1], [], []>} : vector<8x128xf32>, vector<128x384xf32>, vector<8x384xf32> -> vector<8x384xf32>
    %383 = vector.extract_strided_slice %380 {offsets = [0, 0], sizes = [8, 128], strides = [1, 1]} : vector<8x384xf32> to vector<8x128xf32>
    %384 = vector.extract_strided_slice %382 {offsets = [0, 0], sizes = [8, 128], strides = [1, 1]} : vector<8x384xf32> to vector<8x128xf32>
    %385 = arith.addf %383, %384 : vector<8x128xf32>
    %386 = arith.negf %385 : vector<8x128xf32>
    %387 = math.exp %386 : vector<8x128xf32>
    %cst_130 = arith.constant 1.000000e+00 : f32
    %388 = vector.broadcast %cst_130 : f32 to vector<8x128xf32>
    %389 = arith.addf %388, %387 : vector<8x128xf32>
    %390 = arith.divf %388, %389 : vector<8x128xf32>
    %391 = vector.extract_strided_slice %380 {offsets = [0, 128], sizes = [8, 128], strides = [1, 1]} : vector<8x384xf32> to vector<8x128xf32>
    %392 = vector.extract_strided_slice %382 {offsets = [0, 128], sizes = [8, 128], strides = [1, 1]} : vector<8x384xf32> to vector<8x128xf32>
    %393 = arith.addf %391, %392 : vector<8x128xf32>
    %394 = arith.negf %393 : vector<8x128xf32>
    %395 = math.exp %394 : vector<8x128xf32>
    %cst_131 = arith.constant 1.000000e+00 : f32
    %396 = vector.broadcast %cst_131 : f32 to vector<8x128xf32>
    %397 = arith.addf %396, %395 : vector<8x128xf32>
    %398 = arith.divf %396, %397 : vector<8x128xf32>
    %399 = vector.extract_strided_slice %380 {offsets = [0, 256], sizes = [8, 128], strides = [1, 1]} : vector<8x384xf32> to vector<8x128xf32>
    %400 = vector.extract_strided_slice %382 {offsets = [0, 256], sizes = [8, 128], strides = [1, 1]} : vector<8x384xf32> to vector<8x128xf32>
    %401 = arith.addf %400, %312 : vector<8x128xf32>
    %402 = arith.mulf %390, %401 : vector<8x128xf32>
    %403 = arith.addf %399, %402 : vector<8x128xf32>
    %404 = math.tanh %403 : vector<8x128xf32>
    %cst_132 = arith.constant 1.000000e+00 : f32
    %405 = vector.broadcast %cst_132 : f32 to vector<8x128xf32>
    %406 = arith.subf %405, %398 : vector<8x128xf32>
    %407 = arith.mulf %406, %404 : vector<8x128xf32>
    %408 = arith.mulf %398, %377 : vector<8x128xf32>
    %409 = arith.addf %407, %408 : vector<8x128xf32>
    %c3_i32_133 = arith.constant 3 : i32
    %410 = arith.index_cast %c3_i32_133 : i32 to index
    %c0_134 = arith.constant 0 : index
    %c0_135 = arith.constant 0 : index
    %411 = vector.load %arg13[%410, %c0_134, %c0_135] : memref<8x8x384xf32, #tpu.memory_space<vmem>>, vector<1x8x384xf32>
    %412 = vector.shape_cast %411 : vector<1x8x384xf32> to vector<8x384xf32>
    %c0_136 = arith.constant 0 : index
    %c0_137 = arith.constant 0 : index
    %413 = vector.load %arg7[%c0_136, %c0_137] : memref<128x384xf32, #tpu.memory_space<vmem>>, vector<128x384xf32>
    %cst_138 = arith.constant dense<0.000000e+00> : vector<8x384xf32>
    %414 = tpu.matmul %409, %413, %cst_138 {dimension_numbers = #tpu.dot_dimension_numbers<[1], [0], [0], [1], [0, 0, 1, 1], [], []>} : vector<8x128xf32>, vector<128x384xf32>, vector<8x384xf32> -> vector<8x384xf32>
    %415 = vector.extract_strided_slice %412 {offsets = [0, 0], sizes = [8, 128], strides = [1, 1]} : vector<8x384xf32> to vector<8x128xf32>
    %416 = vector.extract_strided_slice %414 {offsets = [0, 0], sizes = [8, 128], strides = [1, 1]} : vector<8x384xf32> to vector<8x128xf32>
    %417 = arith.addf %415, %416 : vector<8x128xf32>
    %418 = arith.negf %417 : vector<8x128xf32>
    %419 = math.exp %418 : vector<8x128xf32>
    %cst_139 = arith.constant 1.000000e+00 : f32
    %420 = vector.broadcast %cst_139 : f32 to vector<8x128xf32>
    %421 = arith.addf %420, %419 : vector<8x128xf32>
    %422 = arith.divf %420, %421 : vector<8x128xf32>
    %423 = vector.extract_strided_slice %412 {offsets = [0, 128], sizes = [8, 128], strides = [1, 1]} : vector<8x384xf32> to vector<8x128xf32>
    %424 = vector.extract_strided_slice %414 {offsets = [0, 128], sizes = [8, 128], strides = [1, 1]} : vector<8x384xf32> to vector<8x128xf32>
    %425 = arith.addf %423, %424 : vector<8x128xf32>
    %426 = arith.negf %425 : vector<8x128xf32>
    %427 = math.exp %426 : vector<8x128xf32>
    %cst_140 = arith.constant 1.000000e+00 : f32
    %428 = vector.broadcast %cst_140 : f32 to vector<8x128xf32>
    %429 = arith.addf %428, %427 : vector<8x128xf32>
    %430 = arith.divf %428, %429 : vector<8x128xf32>
    %431 = vector.extract_strided_slice %412 {offsets = [0, 256], sizes = [8, 128], strides = [1, 1]} : vector<8x384xf32> to vector<8x128xf32>
    %432 = vector.extract_strided_slice %414 {offsets = [0, 256], sizes = [8, 128], strides = [1, 1]} : vector<8x384xf32> to vector<8x128xf32>
    %433 = arith.addf %432, %312 : vector<8x128xf32>
    %434 = arith.mulf %422, %433 : vector<8x128xf32>
    %435 = arith.addf %431, %434 : vector<8x128xf32>
    %436 = math.tanh %435 : vector<8x128xf32>
    %cst_141 = arith.constant 1.000000e+00 : f32
    %437 = vector.broadcast %cst_141 : f32 to vector<8x128xf32>
    %438 = arith.subf %437, %430 : vector<8x128xf32>
    %439 = arith.mulf %438, %436 : vector<8x128xf32>
    %440 = arith.mulf %430, %409 : vector<8x128xf32>
    %441 = arith.addf %439, %440 : vector<8x128xf32>
    %c4_i32_142 = arith.constant 4 : i32
    %442 = arith.index_cast %c4_i32_142 : i32 to index
    %c0_143 = arith.constant 0 : index
    %c0_144 = arith.constant 0 : index
    %443 = vector.load %arg13[%442, %c0_143, %c0_144] : memref<8x8x384xf32, #tpu.memory_space<vmem>>, vector<1x8x384xf32>
    %444 = vector.shape_cast %443 : vector<1x8x384xf32> to vector<8x384xf32>
    %c0_145 = arith.constant 0 : index
    %c0_146 = arith.constant 0 : index
    %445 = vector.load %arg7[%c0_145, %c0_146] : memref<128x384xf32, #tpu.memory_space<vmem>>, vector<128x384xf32>
    %cst_147 = arith.constant dense<0.000000e+00> : vector<8x384xf32>
    %446 = tpu.matmul %441, %445, %cst_147 {dimension_numbers = #tpu.dot_dimension_numbers<[1], [0], [0], [1], [0, 0, 1, 1], [], []>} : vector<8x128xf32>, vector<128x384xf32>, vector<8x384xf32> -> vector<8x384xf32>
    %447 = vector.extract_strided_slice %444 {offsets = [0, 0], sizes = [8, 128], strides = [1, 1]} : vector<8x384xf32> to vector<8x128xf32>
    %448 = vector.extract_strided_slice %446 {offsets = [0, 0], sizes = [8, 128], strides = [1, 1]} : vector<8x384xf32> to vector<8x128xf32>
    %449 = arith.addf %447, %448 : vector<8x128xf32>
    %450 = arith.negf %449 : vector<8x128xf32>
    %451 = math.exp %450 : vector<8x128xf32>
    %cst_148 = arith.constant 1.000000e+00 : f32
    %452 = vector.broadcast %cst_148 : f32 to vector<8x128xf32>
    %453 = arith.addf %452, %451 : vector<8x128xf32>
    %454 = arith.divf %452, %453 : vector<8x128xf32>
    %455 = vector.extract_strided_slice %444 {offsets = [0, 128], sizes = [8, 128], strides = [1, 1]} : vector<8x384xf32> to vector<8x128xf32>
    %456 = vector.extract_strided_slice %446 {offsets = [0, 128], sizes = [8, 128], strides = [1, 1]} : vector<8x384xf32> to vector<8x128xf32>
    %457 = arith.addf %455, %456 : vector<8x128xf32>
    %458 = arith.negf %457 : vector<8x128xf32>
    %459 = math.exp %458 : vector<8x128xf32>
    %cst_149 = arith.constant 1.000000e+00 : f32
    %460 = vector.broadcast %cst_149 : f32 to vector<8x128xf32>
    %461 = arith.addf %460, %459 : vector<8x128xf32>
    %462 = arith.divf %460, %461 : vector<8x128xf32>
    %463 = vector.extract_strided_slice %444 {offsets = [0, 256], sizes = [8, 128], strides = [1, 1]} : vector<8x384xf32> to vector<8x128xf32>
    %464 = vector.extract_strided_slice %446 {offsets = [0, 256], sizes = [8, 128], strides = [1, 1]} : vector<8x384xf32> to vector<8x128xf32>
    %465 = arith.addf %464, %312 : vector<8x128xf32>
    %466 = arith.mulf %454, %465 : vector<8x128xf32>
    %467 = arith.addf %463, %466 : vector<8x128xf32>
    %468 = math.tanh %467 : vector<8x128xf32>
    %cst_150 = arith.constant 1.000000e+00 : f32
    %469 = vector.broadcast %cst_150 : f32 to vector<8x128xf32>
    %470 = arith.subf %469, %462 : vector<8x128xf32>
    %471 = arith.mulf %470, %468 : vector<8x128xf32>
    %472 = arith.mulf %462, %441 : vector<8x128xf32>
    %473 = arith.addf %471, %472 : vector<8x128xf32>
    %c5_i32_151 = arith.constant 5 : i32
    %474 = arith.index_cast %c5_i32_151 : i32 to index
    %c0_152 = arith.constant 0 : index
    %c0_153 = arith.constant 0 : index
    %475 = vector.load %arg13[%474, %c0_152, %c0_153] : memref<8x8x384xf32, #tpu.memory_space<vmem>>, vector<1x8x384xf32>
    %476 = vector.shape_cast %475 : vector<1x8x384xf32> to vector<8x384xf32>
    %c0_154 = arith.constant 0 : index
    %c0_155 = arith.constant 0 : index
    %477 = vector.load %arg7[%c0_154, %c0_155] : memref<128x384xf32, #tpu.memory_space<vmem>>, vector<128x384xf32>
    %cst_156 = arith.constant dense<0.000000e+00> : vector<8x384xf32>
    %478 = tpu.matmul %473, %477, %cst_156 {dimension_numbers = #tpu.dot_dimension_numbers<[1], [0], [0], [1], [0, 0, 1, 1], [], []>} : vector<8x128xf32>, vector<128x384xf32>, vector<8x384xf32> -> vector<8x384xf32>
    %479 = vector.extract_strided_slice %476 {offsets = [0, 0], sizes = [8, 128], strides = [1, 1]} : vector<8x384xf32> to vector<8x128xf32>
    %480 = vector.extract_strided_slice %478 {offsets = [0, 0], sizes = [8, 128], strides = [1, 1]} : vector<8x384xf32> to vector<8x128xf32>
    %481 = arith.addf %479, %480 : vector<8x128xf32>
    %482 = arith.negf %481 : vector<8x128xf32>
    %483 = math.exp %482 : vector<8x128xf32>
    %cst_157 = arith.constant 1.000000e+00 : f32
    %484 = vector.broadcast %cst_157 : f32 to vector<8x128xf32>
    %485 = arith.addf %484, %483 : vector<8x128xf32>
    %486 = arith.divf %484, %485 : vector<8x128xf32>
    %487 = vector.extract_strided_slice %476 {offsets = [0, 128], sizes = [8, 128], strides = [1, 1]} : vector<8x384xf32> to vector<8x128xf32>
    %488 = vector.extract_strided_slice %478 {offsets = [0, 128], sizes = [8, 128], strides = [1, 1]} : vector<8x384xf32> to vector<8x128xf32>
    %489 = arith.addf %487, %488 : vector<8x128xf32>
    %490 = arith.negf %489 : vector<8x128xf32>
    %491 = math.exp %490 : vector<8x128xf32>
    %cst_158 = arith.constant 1.000000e+00 : f32
    %492 = vector.broadcast %cst_158 : f32 to vector<8x128xf32>
    %493 = arith.addf %492, %491 : vector<8x128xf32>
    %494 = arith.divf %492, %493 : vector<8x128xf32>
    %495 = vector.extract_strided_slice %476 {offsets = [0, 256], sizes = [8, 128], strides = [1, 1]} : vector<8x384xf32> to vector<8x128xf32>
    %496 = vector.extract_strided_slice %478 {offsets = [0, 256], sizes = [8, 128], strides = [1, 1]} : vector<8x384xf32> to vector<8x128xf32>
    %497 = arith.addf %496, %312 : vector<8x128xf32>
    %498 = arith.mulf %486, %497 : vector<8x128xf32>
    %499 = arith.addf %495, %498 : vector<8x128xf32>
    %500 = math.tanh %499 : vector<8x128xf32>
    %cst_159 = arith.constant 1.000000e+00 : f32
    %501 = vector.broadcast %cst_159 : f32 to vector<8x128xf32>
    %502 = arith.subf %501, %494 : vector<8x128xf32>
    %503 = arith.mulf %502, %500 : vector<8x128xf32>
    %504 = arith.mulf %494, %473 : vector<8x128xf32>
    %505 = arith.addf %503, %504 : vector<8x128xf32>
    %c6_i32_160 = arith.constant 6 : i32
    %506 = arith.index_cast %c6_i32_160 : i32 to index
    %c0_161 = arith.constant 0 : index
    %c0_162 = arith.constant 0 : index
    %507 = vector.load %arg13[%506, %c0_161, %c0_162] : memref<8x8x384xf32, #tpu.memory_space<vmem>>, vector<1x8x384xf32>
    %508 = vector.shape_cast %507 : vector<1x8x384xf32> to vector<8x384xf32>
    %c0_163 = arith.constant 0 : index
    %c0_164 = arith.constant 0 : index
    %509 = vector.load %arg7[%c0_163, %c0_164] : memref<128x384xf32, #tpu.memory_space<vmem>>, vector<128x384xf32>
    %cst_165 = arith.constant dense<0.000000e+00> : vector<8x384xf32>
    %510 = tpu.matmul %505, %509, %cst_165 {dimension_numbers = #tpu.dot_dimension_numbers<[1], [0], [0], [1], [0, 0, 1, 1], [], []>} : vector<8x128xf32>, vector<128x384xf32>, vector<8x384xf32> -> vector<8x384xf32>
    %511 = vector.extract_strided_slice %508 {offsets = [0, 0], sizes = [8, 128], strides = [1, 1]} : vector<8x384xf32> to vector<8x128xf32>
    %512 = vector.extract_strided_slice %510 {offsets = [0, 0], sizes = [8, 128], strides = [1, 1]} : vector<8x384xf32> to vector<8x128xf32>
    %513 = arith.addf %511, %512 : vector<8x128xf32>
    %514 = arith.negf %513 : vector<8x128xf32>
    %515 = math.exp %514 : vector<8x128xf32>
    %cst_166 = arith.constant 1.000000e+00 : f32
    %516 = vector.broadcast %cst_166 : f32 to vector<8x128xf32>
    %517 = arith.addf %516, %515 : vector<8x128xf32>
    %518 = arith.divf %516, %517 : vector<8x128xf32>
    %519 = vector.extract_strided_slice %508 {offsets = [0, 128], sizes = [8, 128], strides = [1, 1]} : vector<8x384xf32> to vector<8x128xf32>
    %520 = vector.extract_strided_slice %510 {offsets = [0, 128], sizes = [8, 128], strides = [1, 1]} : vector<8x384xf32> to vector<8x128xf32>
    %521 = arith.addf %519, %520 : vector<8x128xf32>
    %522 = arith.negf %521 : vector<8x128xf32>
    %523 = math.exp %522 : vector<8x128xf32>
    %cst_167 = arith.constant 1.000000e+00 : f32
    %524 = vector.broadcast %cst_167 : f32 to vector<8x128xf32>
    %525 = arith.addf %524, %523 : vector<8x128xf32>
    %526 = arith.divf %524, %525 : vector<8x128xf32>
    %527 = vector.extract_strided_slice %508 {offsets = [0, 256], sizes = [8, 128], strides = [1, 1]} : vector<8x384xf32> to vector<8x128xf32>
    %528 = vector.extract_strided_slice %510 {offsets = [0, 256], sizes = [8, 128], strides = [1, 1]} : vector<8x384xf32> to vector<8x128xf32>
    %529 = arith.addf %528, %312 : vector<8x128xf32>
    %530 = arith.mulf %518, %529 : vector<8x128xf32>
    %531 = arith.addf %527, %530 : vector<8x128xf32>
    %532 = math.tanh %531 : vector<8x128xf32>
    %cst_168 = arith.constant 1.000000e+00 : f32
    %533 = vector.broadcast %cst_168 : f32 to vector<8x128xf32>
    %534 = arith.subf %533, %526 : vector<8x128xf32>
    %535 = arith.mulf %534, %532 : vector<8x128xf32>
    %536 = arith.mulf %526, %505 : vector<8x128xf32>
    %537 = arith.addf %535, %536 : vector<8x128xf32>
    %c7_i32_169 = arith.constant 7 : i32
    %538 = arith.index_cast %c7_i32_169 : i32 to index
    %c0_170 = arith.constant 0 : index
    %c0_171 = arith.constant 0 : index
    %539 = vector.load %arg13[%538, %c0_170, %c0_171] : memref<8x8x384xf32, #tpu.memory_space<vmem>>, vector<1x8x384xf32>
    %540 = vector.shape_cast %539 : vector<1x8x384xf32> to vector<8x384xf32>
    %c0_172 = arith.constant 0 : index
    %c0_173 = arith.constant 0 : index
    %541 = vector.load %arg7[%c0_172, %c0_173] : memref<128x384xf32, #tpu.memory_space<vmem>>, vector<128x384xf32>
    %cst_174 = arith.constant dense<0.000000e+00> : vector<8x384xf32>
    %542 = tpu.matmul %537, %541, %cst_174 {dimension_numbers = #tpu.dot_dimension_numbers<[1], [0], [0], [1], [0, 0, 1, 1], [], []>} : vector<8x128xf32>, vector<128x384xf32>, vector<8x384xf32> -> vector<8x384xf32>
    %543 = vector.extract_strided_slice %540 {offsets = [0, 0], sizes = [8, 128], strides = [1, 1]} : vector<8x384xf32> to vector<8x128xf32>
    %544 = vector.extract_strided_slice %542 {offsets = [0, 0], sizes = [8, 128], strides = [1, 1]} : vector<8x384xf32> to vector<8x128xf32>
    %545 = arith.addf %543, %544 : vector<8x128xf32>
    %546 = arith.negf %545 : vector<8x128xf32>
    %547 = math.exp %546 : vector<8x128xf32>
    %cst_175 = arith.constant 1.000000e+00 : f32
    %548 = vector.broadcast %cst_175 : f32 to vector<8x128xf32>
    %549 = arith.addf %548, %547 : vector<8x128xf32>
    %550 = arith.divf %548, %549 : vector<8x128xf32>
    %551 = vector.extract_strided_slice %540 {offsets = [0, 128], sizes = [8, 128], strides = [1, 1]} : vector<8x384xf32> to vector<8x128xf32>
    %552 = vector.extract_strided_slice %542 {offsets = [0, 128], sizes = [8, 128], strides = [1, 1]} : vector<8x384xf32> to vector<8x128xf32>
    %553 = arith.addf %551, %552 : vector<8x128xf32>
    %554 = arith.negf %553 : vector<8x128xf32>
    %555 = math.exp %554 : vector<8x128xf32>
    %cst_176 = arith.constant 1.000000e+00 : f32
    %556 = vector.broadcast %cst_176 : f32 to vector<8x128xf32>
    %557 = arith.addf %556, %555 : vector<8x128xf32>
    %558 = arith.divf %556, %557 : vector<8x128xf32>
    %559 = vector.extract_strided_slice %540 {offsets = [0, 256], sizes = [8, 128], strides = [1, 1]} : vector<8x384xf32> to vector<8x128xf32>
    %560 = vector.extract_strided_slice %542 {offsets = [0, 256], sizes = [8, 128], strides = [1, 1]} : vector<8x384xf32> to vector<8x128xf32>
    %561 = arith.addf %560, %312 : vector<8x128xf32>
    %562 = arith.mulf %550, %561 : vector<8x128xf32>
    %563 = arith.addf %559, %562 : vector<8x128xf32>
    %564 = math.tanh %563 : vector<8x128xf32>
    %cst_177 = arith.constant 1.000000e+00 : f32
    %565 = vector.broadcast %cst_177 : f32 to vector<8x128xf32>
    %566 = arith.subf %565, %558 : vector<8x128xf32>
    %567 = arith.mulf %566, %564 : vector<8x128xf32>
    %568 = arith.mulf %558, %537 : vector<8x128xf32>
    %569 = arith.addf %567, %568 : vector<8x128xf32>
    %c8_i32_178 = arith.constant 8 : i32
    %c0_179 = arith.constant 0 : index
    %c0_180 = arith.constant 0 : index
    %570 = vector.load %arg10[%c0_179, %c0_180] : memref<1x128xf32, #tpu.memory_space<vmem>>, vector<1x128xf32>
    %571 = vector.broadcast %570 : vector<1x128xf32> to vector<8x128xf32>
    %572 = arith.mulf %569, %571 : vector<8x128xf32>
    %cst_181 = arith.constant dense<0.000000e+00> : vector<8xf32>
    %573 = vector.multi_reduction <add>, %572, %cst_181 [1] : vector<8x128xf32> to vector<8xf32>
    %574 = vector.shape_cast %573 : vector<8xf32> to vector<8x1xf32>
    %c0_182 = arith.constant 0 : index
    %c0_183 = arith.constant 0 : index
    %575 = vector.load %arg11[%c0_182, %c0_183] : memref<1x1xf32, #tpu.memory_space<vmem>>, vector<1x1xf32>
    %576 = vector.broadcast %575 : vector<1x1xf32> to vector<8x1xf32>
    %577 = arith.addf %574, %576 : vector<8x1xf32>
    %c0_184 = arith.constant 0 : index
    %c0_185 = arith.constant 0 : index
    %578 = vector.load %arg12[%c0_184, %c0_185] : memref<8x1xf32, #tpu.memory_space<vmem>>, vector<8x1xf32>
    tpu.vector_store %arg12[%c0_184, %c0_185], %577 {strides = array<i32>} : memref<8x1xf32, #tpu.memory_space<vmem>>, vector<8x1xf32>,
    return
  }
  func.func @transform_0(%arg0: i32) -> (i32, i32, i32) {
    %c0_i32 = arith.constant 0 : i32
    %c0_i32_0 = arith.constant 0 : i32
    %c0_i32_1 = arith.constant 0 : i32
    return %c0_i32, %arg0, %c0_i32_0 : i32, i32, i32
  }
  func.func @transform_1(%arg0: i32) -> (i32, i32) {
    %c0_i32 = arith.constant 0 : i32
    %c0_i32_0 = arith.constant 0 : i32
    %c0_i32_1 = arith.constant 0 : i32
    return %c0_i32, %c0_i32_0 : i32, i32
  }
  func.func @transform_2(%arg0: i32) -> (i32, i32) {
    %c0_i32 = arith.constant 0 : i32
    %c0_i32_0 = arith.constant 0 : i32
    %c0_i32_1 = arith.constant 0 : i32
    return %c0_i32, %c0_i32_0 : i32, i32
  }
  func.func @transform_3(%arg0: i32) -> (i32, i32) {
    %c0_i32 = arith.constant 0 : i32
    %c0_i32_0 = arith.constant 0 : i32
    %c0_i32_1 = arith.constant 0 : i32
    return %c0_i32, %c0_i32_0 : i32, i32
  }
  func.func @transform_4(%arg0: i32) -> (i32, i32) {
    %c0_i32 = arith.constant 0 : i32
    %c0_i32_0 = arith.constant 0 : i32
    %c0_i32_1 = arith.constant 0 : i32
    return %c0_i32, %c0_i32_0 : i32, i32
  }
  func.func @transform_5(%arg0: i32) -> (i32, i32) {
    %c0_i32 = arith.constant 0 : i32
    %c0_i32_0 = arith.constant 0 : i32
    %c0_i32_1 = arith.constant 0 : i32
    return %c0_i32, %c0_i32_0 : i32, i32
  }
  func.func @transform_6(%arg0: i32) -> (i32, i32) {
    %c0_i32 = arith.constant 0 : i32
    %c0_i32_0 = arith.constant 0 : i32
    %c0_i32_1 = arith.constant 0 : i32
    return %c0_i32, %c0_i32_0 : i32, i32
  }
  func.func @transform_7(%arg0: i32) -> (i32, i32) {
    %c0_i32 = arith.constant 0 : i32
    %c0_i32_0 = arith.constant 0 : i32
    %c0_i32_1 = arith.constant 0 : i32
    return %c0_i32, %c0_i32_0 : i32, i32
  }
  func.func @transform_8(%arg0: i32) -> (i32, i32) {
    %c0_i32 = arith.constant 0 : i32
    %c0_i32_0 = arith.constant 0 : i32
    %c0_i32_1 = arith.constant 0 : i32
    return %c0_i32, %c0_i32_0 : i32, i32
  }
  func.func @transform_9(%arg0: i32) -> (i32, i32) {
    %c0_i32 = arith.constant 0 : i32
    %c0_i32_0 = arith.constant 0 : i32
    %c0_i32_1 = arith.constant 0 : i32
    return %c0_i32, %c0_i32_0 : i32, i32
  }
  func.func @transform_10(%arg0: i32) -> (i32, i32) {
    %c0_i32 = arith.constant 0 : i32
    %c0_i32_0 = arith.constant 0 : i32
    %c0_i32_1 = arith.constant 0 : i32
    return %c0_i32, %c0_i32_0 : i32, i32
  }
  func.func @transform_11(%arg0: i32) -> (i32, i32) {
    %c0_i32 = arith.constant 0 : i32
    %c0_i32_0 = arith.constant 0 : i32
    return %arg0, %c0_i32 : i32, i32
  }
}

</mosaic_0001>

<llo_original>
// kernel: gru_model_forward.1
$region0: #{gru_model_forward.1}
  #allocation0 [shape = 'u32[]', space=smem, size = 0x4, offset = 0x4, fixed_abs, tag = 'smem constant byte address 0x4 - core index']
  #allocation1 [shape = 'u32[144,128]{1,0:T(1,128)}', space=vmem, size = 0x12000, scoped, tag = 'internal scratch']
  #allocation2 [shape = 'f32[8,8,384]{2,1,0:T(8,128)}', space=vmem, size = 0x18000, scoped, tag = 'scratch operand']
  #allocation3 [shape = 'f32[8,8,128]{2,1,0:T(8,128)}', space=vmem, size = 0x8000, scoped, tag = 'scratch operand']
  #allocation4 [shape = 'f32[1,1]{1,0:T(1,128)S(1)}', space=vmem, size = 0x200, scoped, tag = 'scoped memory for gru_model_forward.1']
  %s0 = inlined_call_operand.vmem [shape: f32[8,16,16], index: 0, kind: input, shape index: {}]
  %s1 = inlined_call_operand.vmem [shape: f32[16,384], index: 1, kind: input, shape index: {}]
  %s2 = inlined_call_operand.vmem [shape: f32[128,384], index: 2, kind: input, shape index: {}]
  %s3 = inlined_call_operand.vmem [shape: f32[1,384], index: 3, kind: input, shape index: {}]
  %s4 = inlined_call_operand.vmem [shape: f32[1,128], index: 4, kind: input, shape index: {}]
  %s5 = inlined_call_operand.vmem [shape: f32[128,384], index: 5, kind: input, shape index: {}]
  %s6 = inlined_call_operand.vmem [shape: f32[128,384], index: 6, kind: input, shape index: {}]
  %s7 = inlined_call_operand.vmem [shape: f32[1,384], index: 7, kind: input, shape index: {}]
  %s8 = inlined_call_operand.vmem [shape: f32[1,128], index: 8, kind: input, shape index: {}]
  %s9 = inlined_call_operand.vmem [shape: f32[1,128], index: 9, kind: input, shape index: {}]
  %s10 = inlined_call_operand.<no memory space> [shape: f32[1,1], index: 10, kind: input, shape index: {}]
  %s11 = inlined_call_operand.vmem [shape: f32[16,1], index: 11, kind: output, shape index: {}]
  %s12 = sld [smem:[#allocation0]]
  $region115: #{gru_model_forward.1} parent=0
    _
  %s14 = ssub.s32 1, %s12
  %s15 = scalar_select 0, %s14, %s12
  %v16 = vstv %s10
  %17 = vst [vmem:[#allocation4] sm:$0x1] %v16
  $region1: #{gru_model_forward.1} parent=0
    #allocation5 [shape = 'u8[65536]{0}', space=vmem, size = 0x10000, scoped, tag = 'input window, operand 0']
    loop: start=0, step=1, limit=4
    $region2: #{gru_model_forward.1} parent=1 // loop_pre_header
      _
    $region3: #{gru_model_forward.1} parent=1 // loop_header
      %s19 = sphi 0, %s23
      %p20 = scmp.ge.s32.totalorder %s19, 4
      %s29 = sphi 0, %s31
      %s32 = sphi 0, %s29
      %s33 = sphi 0, %s32
      %s49 = sphi 0, %s33
      %s53 = sphi 0, %s53
      %s55 = sphi 0, %s53
      %s56 = sphi 0, %s55
      %s70 = sphi 0, %s56
      %s74 = sphi 0, %s74
      %s76 = sphi 0, %s74
      %s77 = sphi 0, %s76
      %s91 = sphi 0, %s77
      %s95 = sphi 0, %s95
      %s97 = sphi 0, %s95
      %s98 = sphi 0, %s97
      %s112 = sphi 0, %s98
      %s116 = sphi 0, %s116
      %s118 = sphi 0, %s116
      %s119 = sphi 0, %s118
      %s133 = sphi 0, %s119
      %s137 = sphi 0, %s137
      %s139 = sphi 0, %s137
      %s140 = sphi 0, %s139
      %s154 = sphi 0, %s140
      %s158 = sphi 0, %s158
      %s160 = sphi 0, %s158
      %s161 = sphi 0, %s160
      %s175 = sphi 0, %s161
      %s179 = sphi 0, %s179
      %s181 = sphi 0, %s179
      %s182 = sphi 0, %s181
      %s196 = sphi 0, %s182
      %s200 = sphi 0, %s200
      %s202 = sphi 0, %s200
      %s203 = sphi 0, %s202
      %s217 = sphi 0, %s203
      %s221 = sphi 0, %s221
      %s223 = sphi 0, %s221
      %s224 = sphi 0, %s223
      %s238 = sphi 0, %s224
      %s242 = sphi 0, %s242
      %s244 = sphi 0, %s242
      %s245 = sphi 0, %s244
      %s259 = sphi 0, %s245
      %s265 = sphi 0, %s267
      %s268 = sphi 0, %s265
      %s269 = sphi 0, %s268
      %s285 = sphi 0, %s269
    $region4: #{gru_model_forward.1} parent=1 // loop_header_branch
      %22 = sbr.rel (%p20) target = $region8
    $region5: #{gru_model_forward.1} parent=1 // loop_body
      %s24 = ssub.s32 %s19, 1
      %s25 = ssub.s32 %s19, 2
      %s26 = sadd.s32 %s19, 1
      %s27 = ssub.s32 %s19, %s26
      %p28 = scmp.eq.s32.totalorder %s27, 0
      %s30 = sadd.s32 %s29, 1
      %s31 = scalar_select %p28, %s29, %s30
      %p34 = pneg %p28
      %p35 = scmp.eq.s32.totalorder %s19, 1
      %p36 = por %p34, %p35
      %p37 = scmp.ne.s32.totalorder %s29, %s32
      %p38 = scmp.eq.s32.totalorder %s19, 0
      %p39 = por %p37, %p38
      %p40 = scmp.ne.s32.totalorder %s29, %s32
      %p41 = scmp.eq.s32.totalorder %s24, 1
      %p42 = por %p40, %p41
      %p43 = scmp.ne.s32.totalorder %s32, %s33
      %p44 = scmp.eq.s32.totalorder %s24, 0
      %p45 = por %p43, %p44
      %p46 = scmp.ne.s32.totalorder %s32, %s33
      %p47 = scmp.eq.s32.totalorder %s25, 1
      %p48 = por %p46, %p47
      %p50 = scmp.ne.s32.totalorder %s33, %s49
      %p51 = scmp.eq.s32.totalorder %s25, 0
      %p52 = por %p50, %p51
      %s54 = sadd.s32 %s53, 1
      %p57 = scmp.eq.s32.totalorder %s19, 1
      %p58 = scmp.ne.s32.totalorder %s53, %s55
      %p59 = scmp.eq.s32.totalorder %s19, 0
      %p60 = por %p58, %p59
      %p61 = scmp.ne.s32.totalorder %s53, %s55
      %p62 = scmp.eq.s32.totalorder %s24, 1
      %p63 = por %p61, %p62
      %p64 = scmp.ne.s32.totalorder %s55, %s56
      %p65 = scmp.eq.s32.totalorder %s24, 0
      %p66 = por %p64, %p65
      %p67 = scmp.ne.s32.totalorder %s55, %s56
      %p68 = scmp.eq.s32.totalorder %s25, 1
      %p69 = por %p67, %p68
      %p71 = scmp.ne.s32.totalorder %s56, %s70
      %p72 = scmp.eq.s32.totalorder %s25, 0
      %p73 = por %p71, %p72
      %s75 = sadd.s32 %s74, 1
      %p78 = scmp.eq.s32.totalorder %s19, 1
      %p79 = scmp.ne.s32.totalorder %s74, %s76
      %p80 = scmp.eq.s32.totalorder %s19, 0
      %p81 = por %p79, %p80
      %p82 = scmp.ne.s32.totalorder %s74, %s76
      %p83 = scmp.eq.s32.totalorder %s24, 1
      %p84 = por %p82, %p83
      %p85 = scmp.ne.s32.totalorder %s76, %s77
      %p86 = scmp.eq.s32.totalorder %s24, 0
      %p87 = por %p85, %p86
      %p88 = scmp.ne.s32.totalorder %s76, %s77
      %p89 = scmp.eq.s32.totalorder %s25, 1
      %p90 = por %p88, %p89
      %p92 = scmp.ne.s32.totalorder %s77, %s91
      %p93 = scmp.eq.s32.totalorder %s25, 0
      %p94 = por %p92, %p93
      %s96 = sadd.s32 %s95, 1
      %p99 = scmp.eq.s32.totalorder %s19, 1
      %p100 = scmp.ne.s32.totalorder %s95, %s97
      %p101 = scmp.eq.s32.totalorder %s19, 0
      %p102 = por %p100, %p101
      %p103 = scmp.ne.s32.totalorder %s95, %s97
      %p104 = scmp.eq.s32.totalorder %s24, 1
      %p105 = por %p103, %p104
      %p106 = scmp.ne.s32.totalorder %s97, %s98
      %p107 = scmp.eq.s32.totalorder %s24, 0
      %p108 = por %p106, %p107
      %p109 = scmp.ne.s32.totalorder %s97, %s98
      %p110 = scmp.eq.s32.totalorder %s25, 1
      %p111 = por %p109, %p110
      %p113 = scmp.ne.s32.totalorder %s98, %s112
      %p114 = scmp.eq.s32.totalorder %s25, 0
      %p115 = por %p113, %p114
      %s117 = sadd.s32 %s116, 1
      %p120 = scmp.eq.s32.totalorder %s19, 1
      %p121 = scmp.ne.s32.totalorder %s116, %s118
      %p122 = scmp.eq.s32.totalorder %s19, 0
      %p123 = por %p121, %p122
      %p124 = scmp.ne.s32.totalorder %s116, %s118
      %p125 = scmp.eq.s32.totalorder %s24, 1
      %p126 = por %p124, %p125
      %p127 = scmp.ne.s32.totalorder %s118, %s119
      %p128 = scmp.eq.s32.totalorder %s24, 0
      %p129 = por %p127, %p128
      %p130 = scmp.ne.s32.totalorder %s118, %s119
      %p131 = scmp.eq.s32.totalorder %s25, 1
      %p132 = por %p130, %p131
      %p134 = scmp.ne.s32.totalorder %s119, %s133
      %p135 = scmp.eq.s32.totalorder %s25, 0
      %p136 = por %p134, %p135
      %s138 = sadd.s32 %s137, 1
      %p141 = scmp.eq.s32.totalorder %s19, 1
      %p142 = scmp.ne.s32.totalorder %s137, %s139
      %p143 = scmp.eq.s32.totalorder %s19, 0
      %p144 = por %p142, %p143
      %p145 = scmp.ne.s32.totalorder %s137, %s139
      %p146 = scmp.eq.s32.totalorder %s24, 1
      %p147 = por %p145, %p146
      %p148 = scmp.ne.s32.totalorder %s139, %s140
      %p149 = scmp.eq.s32.totalorder %s24, 0
      %p150 = por %p148, %p149
      %p151 = scmp.ne.s32.totalorder %s139, %s140
      %p152 = scmp.eq.s32.totalorder %s25, 1
      %p153 = por %p151, %p152
      %p155 = scmp.ne.s32.totalorder %s140, %s154
      %p156 = scmp.eq.s32.totalorder %s25, 0
      %p157 = por %p155, %p156
      %s159 = sadd.s32 %s158, 1
      %p162 = scmp.eq.s32.totalorder %s19, 1
      %p163 = scmp.ne.s32.totalorder %s158, %s160
      %p164 = scmp.eq.s32.totalorder %s19, 0
      %p165 = por %p163, %p164
      %p166 = scmp.ne.s32.totalorder %s158, %s160
      %p167 = scmp.eq.s32.totalorder %s24, 1
      %p168 = por %p166, %p167
      %p169 = scmp.ne.s32.totalorder %s160, %s161
      %p170 = scmp.eq.s32.totalorder %s24, 0
      %p171 = por %p169, %p170
      %p172 = scmp.ne.s32.totalorder %s160, %s161
      %p173 = scmp.eq.s32.totalorder %s25, 1
      %p174 = por %p172, %p173
      %p176 = scmp.ne.s32.totalorder %s161, %s175
      %p177 = scmp.eq.s32.totalorder %s25, 0
      %p178 = por %p176, %p177
      %s180 = sadd.s32 %s179, 1
      %p183 = scmp.eq.s32.totalorder %s19, 1
      %p184 = scmp.ne.s32.totalorder %s179, %s181
      %p185 = scmp.eq.s32.totalorder %s19, 0
      %p186 = por %p184, %p185
      %p187 = scmp.ne.s32.totalorder %s179, %s181
      %p188 = scmp.eq.s32.totalorder %s24, 1
      %p189 = por %p187, %p188
      %p190 = scmp.ne.s32.totalorder %s181, %s182
      %p191 = scmp.eq.s32.totalorder %s24, 0
      %p192 = por %p190, %p191
      %p193 = scmp.ne.s32.totalorder %s181, %s182
      %p194 = scmp.eq.s32.totalorder %s25, 1
      %p195 = por %p193, %p194
      %p197 = scmp.ne.s32.totalorder %s182, %s196
      %p198 = scmp.eq.s32.totalorder %s25, 0
      %p199 = por %p197, %p198
      %s201 = sadd.s32 %s200, 1
      %p204 = scmp.eq.s32.totalorder %s19, 1
      %p205 = scmp.ne.s32.totalorder %s200, %s202
      %p206 = scmp.eq.s32.totalorder %s19, 0
      %p207 = por %p205, %p206
      %p208 = scmp.ne.s32.totalorder %s200, %s202
      %p209 = scmp.eq.s32.totalorder %s24, 1
      %p210 = por %p208, %p209
      %p211 = scmp.ne.s32.totalorder %s202, %s203
      %p212 = scmp.eq.s32.totalorder %s24, 0
      %p213 = por %p211, %p212
      %p214 = scmp.ne.s32.totalorder %s202, %s203
      %p215 = scmp.eq.s32.totalorder %s25, 1
      %p216 = por %p214, %p215
      %p218 = scmp.ne.s32.totalorder %s203, %s217
      %p219 = scmp.eq.s32.totalorder %s25, 0
      %p220 = por %p218, %p219
      %s222 = sadd.s32 %s221, 1
      %p225 = scmp.eq.s32.totalorder %s19, 1
      %p226 = scmp.ne.s32.totalorder %s221, %s223
      %p227 = scmp.eq.s32.totalorder %s19, 0
      %p228 = por %p226, %p227
      %p229 = scmp.ne.s32.totalorder %s221, %s223
      %p230 = scmp.eq.s32.totalorder %s24, 1
      %p231 = por %p229, %p230
      %p232 = scmp.ne.s32.totalorder %s223, %s224
      %p233 = scmp.eq.s32.totalorder %s24, 0
      %p234 = por %p232, %p233
      %p235 = scmp.ne.s32.totalorder %s223, %s224
      %p236 = scmp.eq.s32.totalorder %s25, 1
      %p237 = por %p235, %p236
      %p239 = scmp.ne.s32.totalorder %s224, %s238
      %p240 = scmp.eq.s32.totalorder %s25, 0
      %p241 = por %p239, %p240
      %s243 = sadd.s32 %s242, 1
      %p246 = scmp.eq.s32.totalorder %s19, 1
      %p247 = scmp.ne.s32.totalorder %s242, %s244
      %p248 = scmp.eq.s32.totalorder %s19, 0
      %p249 = por %p247, %p248
      %p250 = scmp.ne.s32.totalorder %s242, %s244
      %p251 = scmp.eq.s32.totalorder %s24, 1
      %p252 = por %p250, %p251
      %p253 = scmp.ne.s32.totalorder %s244, %s245
      %p254 = scmp.eq.s32.totalorder %s24, 0
      %p255 = por %p253, %p254
      %p256 = scmp.ne.s32.totalorder %s244, %s245
      %p257 = scmp.eq.s32.totalorder %s25, 1
      %p258 = por %p256, %p257
      %p260 = scmp.ne.s32.totalorder %s245, %s259
      %p261 = scmp.eq.s32.totalorder %s25, 0
      %p262 = por %p260, %p261
      %s263 = ssub.s32 %s19, %s26
      %p264 = scmp.eq.s32.totalorder %s263, 0
      %s266 = sadd.s32 %s265, 1
      %s267 = scalar_select %p264, %s265, %s266
      %p270 = pneg %p264
      %p271 = scmp.eq.s32.totalorder %s19, 1
      %p272 = por %p270, %p271
      %p273 = scmp.ne.s32.totalorder %s265, %s268
      %p274 = scmp.eq.s32.totalorder %s19, 0
      %p275 = por %p273, %p274
      %p276 = scmp.ne.s32.totalorder %s265, %s268
      %p277 = scmp.eq.s32.totalorder %s24, 1
      %p278 = por %p276, %p277
      %p279 = scmp.ne.s32.totalorder %s268, %s269
      %p280 = scmp.eq.s32.totalorder %s24, 0
      %p281 = por %p279, %p280
      %p282 = scmp.ne.s32.totalorder %s268, %s269
      %p283 = scmp.eq.s32.totalorder %s25, 1
      %p284 = por %p282, %p283
      %p286 = scmp.ne.s32.totalorder %s269, %s285
      %p287 = scmp.eq.s32.totalorder %s25, 0
      %p288 = por %p286, %p287
      %p289 = scmp.le.s32.totalorder 1, %s19
      %p290 = scmp.lt.s32.totalorder %s19, 3
      %p291 = pnand %p289, %p290
      %p292 = pneg %p291
      // Predicated region
      $region9: #{gru_model_forward.1} parent=5 // pred_check
        _
      $region10: #{gru_model_forward.1} parent=5 // pred_check_branch
        %294 = sbr.rel (%p291) target = $region12
      $region11: #{gru_model_forward.1} parent=5 // pred_region
        %s295 = ssub.s32 %s19, 1
        // Predicated region
        $region13: #{gru_model_forward.1} parent=11 // pred_check
          %p296 = pneg %p66
        $region14: #{gru_model_forward.1} parent=11 // pred_check_branch
          %298 = sbr.rel (%p296) target = $region16
        $region15: #{gru_model_forward.1} parent=11 // pred_region
          _
        $region16: #{gru_model_forward.1} parent=11 // pred_fallthru
          _
        // Predicated region
        $region17: #{gru_model_forward.1} parent=11 // pred_check
          %p299 = pneg %p87
        $region18: #{gru_model_forward.1} parent=11 // pred_check_branch
          %301 = sbr.rel (%p299) target = $region20
        $region19: #{gru_model_forward.1} parent=11 // pred_region
          _
        $region20: #{gru_model_forward.1} parent=11 // pred_fallthru
          _
        // Predicated region
        $region21: #{gru_model_forward.1} parent=11 // pred_check
          %p302 = pneg %p108
        $region22: #{gru_model_forward.1} parent=11 // pred_check_branch
          %304 = sbr.rel (%p302) target = $region24
        $region23: #{gru_model_forward.1} parent=11 // pred_region
          _
        $region24: #{gru_model_forward.1} parent=11 // pred_fallthru
          _
        // Predicated region
        $region25: #{gru_model_forward.1} parent=11 // pred_check
          %p305 = pneg %p129
        $region26: #{gru_model_forward.1} parent=11 // pred_check_branch
          %307 = sbr.rel (%p305) target = $region28
        $region27: #{gru_model_forward.1} parent=11 // pred_region
          _
        $region28: #{gru_model_forward.1} parent=11 // pred_fallthru
          _
        // Predicated region
        $region29: #{gru_model_forward.1} parent=11 // pred_check
          %p308 = pneg %p150
        $region30: #{gru_model_forward.1} parent=11 // pred_check_branch
          %310 = sbr.rel (%p308) target = $region32
        $region31: #{gru_model_forward.1} parent=11 // pred_region
          _
        $region32: #{gru_model_forward.1} parent=11 // pred_fallthru
          _
        // Predicated region
        $region33: #{gru_model_forward.1} parent=11 // pred_check
          %p311 = pneg %p171
        $region34: #{gru_model_forward.1} parent=11 // pred_check_branch
          %313 = sbr.rel (%p311) target = $region36
        $region35: #{gru_model_forward.1} parent=11 // pred_region
          _
        $region36: #{gru_model_forward.1} parent=11 // pred_fallthru
          _
        // Predicated region
        $region37: #{gru_model_forward.1} parent=11 // pred_check
          %p314 = pneg %p192
        $region38: #{gru_model_forward.1} parent=11 // pred_check_branch
          %316 = sbr.rel (%p314) target = $region40
        $region39: #{gru_model_forward.1} parent=11 // pred_region
          _
        $region40: #{gru_model_forward.1} parent=11 // pred_fallthru
          _
        // Predicated region
        $region41: #{gru_model_forward.1} parent=11 // pred_check
          %p317 = pneg %p213
        $region42: #{gru_model_forward.1} parent=11 // pred_check_branch
          %319 = sbr.rel (%p317) target = $region44
        $region43: #{gru_model_forward.1} parent=11 // pred_region
          _
        $region44: #{gru_model_forward.1} parent=11 // pred_fallthru
          _
        // Predicated region
        $region45: #{gru_model_forward.1} parent=11 // pred_check
          %p320 = pneg %p234
        $region46: #{gru_model_forward.1} parent=11 // pred_check_branch
          %322 = sbr.rel (%p320) target = $region48
        $region47: #{gru_model_forward.1} parent=11 // pred_region
          _
        $region48: #{gru_model_forward.1} parent=11 // pred_fallthru
          _
        // Predicated region
        $region49: #{gru_model_forward.1} parent=11 // pred_check
          %p323 = pneg %p255
        $region50: #{gru_model_forward.1} parent=11 // pred_check_branch
          %325 = sbr.rel (%p323) target = $region52
        $region51: #{gru_model_forward.1} parent=11 // pred_region
          _
        $region52: #{gru_model_forward.1} parent=11 // pred_fallthru
          _
      $region12: #{gru_model_forward.1} parent=5 // pred_fallthru
        _
      %p326 = scmp.lt.s32.totalorder %s19, 2
      // Predicated region
      $region53: #{gru_model_forward.1} parent=5 // pred_check
        %p327 = pneg %p326
      $region54: #{gru_model_forward.1} parent=5 // pred_check_branch
        %329 = sbr.rel (%p327) target = $region56
      $region55: #{gru_model_forward.1} parent=5 // pred_region
        // Predicated region
        $region57: #{gru_model_forward.1} parent=55 // pred_check
          %p330 = pneg %p39
        $region58: #{gru_model_forward.1} parent=55 // pred_check_branch
          %332 = sbr.rel (%p330) target = $region60
        $region59: #{gru_model_forward.1} parent=55 // pred_region
          %s333 = sand.u32 %s29, 1
          %s334 = sand.u32 %s29, 1
          %s335 = smul.addr %s334, 64
          %s336 = scalar_lea.vmem [#allocation5], %s335
          %s337 = smul.addr %s19, 8
          %s338 = scalar_lea.vmem %s0, %s337
          // Predicated region
          $region61: #{gru_model_forward.1} parent=59 // pred_check
            _
          $region62: #{gru_model_forward.1} parent=59 // pred_check_branch
            %340 = sbr.rel (0) target = $region64
          $region63: #{gru_model_forward.1} parent=59 // pred_region
            // Predicated region
            $region65: #{gru_model_forward.1} parent=63 // pred_check
              _
            $region66: #{gru_model_forward.1} parent=63 // pred_check_branch
              %342 = sbr.rel (0) target = $region68
            $region67: #{gru_model_forward.1} parent=63 // pred_region
              // Predicated region
              $region80: #{gru_model_forward.1} parent=67 // pred_check
                _
              $region81: #{gru_model_forward.1} parent=67 // pred_check_branch
                %371 = sbr.rel (0) target = $region83
              $region82: #{gru_model_forward.1} parent=67 // pred_region
                loop: start=0, step=1, limit=1
                $region84: #{gru_model_forward.1} parent=82 // loop_pre_header
                  _
                $region85: #{gru_model_forward.1} parent=82 // loop_header
                  %s373 = sphi 0, %s377
                  %p374 = scmp.ge.s32.totalorder %s373, 1
                  %s378 = sphi %s338, %s338
                  %s379 = sphi %s336, %s336
                $region86: #{gru_model_forward.1} parent=82 // loop_header_branch
                  %376 = sbr.rel (%p374) target = $region90
                $region87: #{gru_model_forward.1} parent=82 // loop_body
                  %v380 = vld [vmem:[%s378] sm:$0xff]
                  %381 = vst [vmem:[%s379] sm:$0xff] %v380
                  %v382 = vld [vmem:[%s378 + $0x10] sm:$0xff]
                  %383 = vst [vmem:[%s379 + $0x8] sm:$0xff] %v382
                  %v384 = vld [vmem:[%s378 + $0x20] sm:$0xff]
                  %385 = vst [vmem:[%s379 + $0x10] sm:$0xff] %v384
                  %v386 = vld [vmem:[%s378 + $0x30] sm:$0xff]
                  %387 = vst [vmem:[%s379 + $0x18] sm:$0xff] %v386
                  %v388 = vld [vmem:[%s378 + $0x40] sm:$0xff]
                  %389 = vst [vmem:[%s379 + $0x20] sm:$0xff] %v388
                  %v390 = vld [vmem:[%s378 + $0x50] sm:$0xff]
                  %391 = vst [vmem:[%s379 + $0x28] sm:$0xff] %v390
                  %v392 = vld [vmem:[%s378 + $0x60] sm:$0xff]
                  %393 = vst [vmem:[%s379 + $0x30] sm:$0xff] %v392
                  %v394 = vld [vmem:[%s378 + $0x70] sm:$0xff]
                  %395 = vst [vmem:[%s379 + $0x38] sm:$0xff] %v394
                $region88: #{gru_model_forward.1} parent=82 // loop_footer
                  %s377 = sadd.s32 1, %s373
                $region89: #{gru_model_forward.1} parent=82 // loop_footer_branch
                  %372 = sbr.rel target = $region85
                $region90: #{gru_model_forward.1} parent=82 // loop_exit
                  _
              $region83: #{gru_model_forward.1} parent=67 // pred_fallthru
                _
              // Predicated region
              $region91: #{gru_model_forward.1} parent=67 // pred_check
                _
              $region92: #{gru_model_forward.1} parent=67 // pred_check_branch
                %397 = sbr.rel target = $region94
              $region93: #{gru_model_forward.1} parent=67 // pred_region
                _
              $region94: #{gru_model_forward.1} parent=67 // pred_fallthru
                _
            $region68: #{gru_model_forward.1} parent=63 // pred_fallthru
              _
            // Predicated region
            $region69: #{gru_model_forward.1} parent=63 // pred_check
              _
            $region70: #{gru_model_forward.1} parent=63 // pred_check_branch
              %344 = sbr.rel target = $region72
            $region71: #{gru_model_forward.1} parent=63 // pred_region
              loop: start=0, step=1, limit=1
              $region73: #{gru_model_forward.1} parent=71 // loop_pre_header
                _
              $region74: #{gru_model_forward.1} parent=71 // loop_header
                %s347 = sphi 0, %s351
                %p348 = scmp.ge.s32.totalorder %s347, 1
                %s352 = sphi %s338, %s338
                %s353 = sphi %s336, %s336
              $region75: #{gru_model_forward.1} parent=71 // loop_header_branch
                %350 = sbr.rel (%p348) target = $region79
              $region76: #{gru_model_forward.1} parent=71 // loop_body
                %v354 = vld [vmem:[%s352] sm:$0xff]
                %355 = vst [vmem:[%s353] sm:$0xff] %v354
                %v356 = vld [vmem:[%s352 + $0x10] sm:$0xff]
                %357 = vst [vmem:[%s353 + $0x8] sm:$0xff] %v356
                %v358 = vld [vmem:[%s352 + $0x20] sm:$0xff]
                %359 = vst [vmem:[%s353 + $0x10] sm:$0xff] %v358
                %v360 = vld [vmem:[%s352 + $0x30] sm:$0xff]
                %361 = vst [vmem:[%s353 + $0x18] sm:$0xff] %v360
                %v362 = vld [vmem:[%s352 + $0x40] sm:$0xff]
                %363 = vst [vmem:[%s353 + $0x20] sm:$0xff] %v362
                %v364 = vld [vmem:[%s352 + $0x50] sm:$0xff]
                %365 = vst [vmem:[%s353 + $0x28] sm:$0xff] %v364
                %v366 = vld [vmem:[%s352 + $0x60] sm:$0xff]
                %367 = vst [vmem:[%s353 + $0x30] sm:$0xff] %v366
                %v368 = vld [vmem:[%s352 + $0x70] sm:$0xff]
                %369 = vst [vmem:[%s353 + $0x38] sm:$0xff] %v368
              $region77: #{gru_model_forward.1} parent=71 // loop_footer
                %s351 = sadd.s32 1, %s347
              $region78: #{gru_model_forward.1} parent=71 // loop_footer_branch
                %346 = sbr.rel target = $region74
              $region79: #{gru_model_forward.1} parent=71 // loop_exit
                _
            $region72: #{gru_model_forward.1} parent=63 // pred_fallthru
              _
          $region64: #{gru_model_forward.1} parent=59 // pred_fallthru
            _
          %398 = vnop
        $region60: #{gru_model_forward.1} parent=55 // pred_fallthru
          _
      $region56: #{gru_model_forward.1} parent=5 // pred_fallthru
        _
      %p399 = scmp.le.s32.totalorder 1, %s19
      %p400 = scmp.lt.s32.totalorder %s19, 3
      %p401 = pnand %p399, %p400
      %p402 = pneg %p401
      // Predicated region
      $region95: #{gru_model_forward.1} parent=5 // pred_check
        _
      $region96: #{gru_model_forward.1} parent=5 // pred_check_branch
        %404 = sbr.rel (%p401) target = $region98
      $region97: #{gru_model_forward.1} parent=5 // pred_region
        %s405 = ssub.s32 %s19, 1
        %s406 = sand.u32 %s32, 1
        %s407 = sand.u32 %s32, 1
        %s408 = smul.addr %s407, 64
        %s409 = scalar_lea.vmem [#allocation5], %s408
        // Predicated region
        $region99: #{gru_model_forward.1} parent=97 // pred_check
          %p410 = pneg %p45
        $region100: #{gru_model_forward.1} parent=97 // pred_check_branch
          %412 = sbr.rel (%p410) target = $region102
        $region101: #{gru_model_forward.1} parent=97 // pred_region
          _
        $region102: #{gru_model_forward.1} parent=97 // pred_fallthru
          _
        %s413 = sand.u32 %s32, 1
        %s414 = sand.u32 %s32, 1
        %s415 = smul.addr %s414, 64
        %s416 = scalar_lea.vmem [#allocation5], %s415
        %p417 = pneg %p45
        %p418 = pneg %p42
        %p419 = pneg %p66
        %p420 = pneg %p63
        %p421 = pneg %p87
        %p422 = pneg %p84
        %p423 = pneg %p108
        %p424 = pneg %p105
        %p425 = pneg %p129
        %p426 = pneg %p126
        %p427 = pneg %p150
        %p428 = pneg %p147
        %p429 = pneg %p171
        %p430 = pneg %p168
        %p431 = pneg %p192
        %p432 = pneg %p189
        %p433 = pneg %p213
        %p434 = pneg %p210
        %p435 = pneg %p234
        %p436 = pneg %p231
        %p437 = pneg %p255
        %p438 = pneg %p252
        %p439 = pneg %p281
        %p440 = pneg %p278
        %p441 = scmp.lt.s32.totalorder %s24, 1
        %s442 = scalar_select %p441, %s24, 1
        %s443 = smul.addr %s442, 8
        %s444 = scalar_lea.vmem %s11, %s443
        %p445 = scmp.lt.s32.totalorder %s24, 1
        %s446 = scalar_select %p445, %s24, 1
        %s447 = smul.addr %s446, 8
        %s448 = scalar_lea.vmem %s11, %s447
        %v449 = vld [vmem:[%s1] sm:$0xff]
        %v450 = vld [vmem:[%s1 + $0x8] sm:$0xff]
        %v451 = vld [vmem:[%s1 + $0x10] sm:$0xff]
        %v452 = vld [vmem:[%s1 + $0x18] sm:$0xff]
        %v453 = vld [vmem:[%s1 + $0x20] sm:$0xff]
        %v454 = vld [vmem:[%s1 + $0x28] sm:$0xff]
        %v455 = vld [vmem:[%s409] sm:$0xff]
        %v456 = vld [vmem:[%s409 + $0x8] sm:$0xff]
        %v457 = vld [vmem:[%s409 + $0x10] sm:$0xff]
        %v458 = vld [vmem:[%s409 + $0x18] sm:$0xff]
        %v459 = vld [vmem:[%s409 + $0x20] sm:$0xff]
        %v460 = vld [vmem:[%s409 + $0x28] sm:$0xff]
        %v461 = vld [vmem:[%s409 + $0x30] sm:$0xff]
        %v462 = vld [vmem:[%s409 + $0x38] sm:$0xff]
        %v463 = vld [vmem:[%s3] sm:$0x7]
        %v465 = vlaneseq
        %v466 = vshrl.u32 %v465, 7
        %v467 = vsub.s32 0, %v466
        %v468 = vrot.slane %v463, %v467
        %v469 = vlaneseq
        %v470 = vshrl.u32 %v469, 7
        %v471 = vsub.s32 1, %v470
        %v472 = vrot.slane %v463, %v471
        %v473 = vlaneseq
        %v474 = vshrl.u32 %v473, 7
        %v475 = vsub.s32 2, %v474
        %v476 = vrot.slane %v463, %v475
        %vm480 = vcmask 130048
        %v482 = vsel %vm480, %v455, 0
        %v485 = vsel %vm480, %v456, 0
        %v488 = vsel %vm480, %v457, 0
        %v491 = vsel %vm480, %v458, 0
        %v494 = vsel %vm480, %v459, 0
        %v497 = vsel %vm480, %v460, 0
        %v500 = vsel %vm480, %v461, 0
        %v503 = vsel %vm480, %v462, 0
        %505 = vmatprep.subr.mxu0 %v450
        %506 = vmatpush1.msra.mxu0 %v449
        %507 = vmatprep.subr.mxu0 %v453
        %508 = vmatpush1.msra.mxu0 %v452
        %509 = vmatprep.subr.mxu0 0.0
        %510 = vmatpush1.msra.mxu0 0.0
        %511 = vmatprep.subr.mxu0 0.0
        %512 = vmatpush1.msra.mxu0 0.0
        %513 = vmatprep.subr.mxu0 0.0
        %514 = vmatpush1.msra.mxu0 0.0
        %515 = vmatprep.subr.mxu0 0.0
        %516 = vmatpush1.msra.mxu0 0.0
        %517 = vmatprep.subr.mxu0 0.0
        %518 = vmatpush1.msra.mxu0 0.0
        %519 = vmatprep.subr.mxu0 0.0
        %520 = vmatpush1.msra.mxu0 0.0
        %521 = vmatprep.subr.mxu0 0.0
        %522 = vmatpush1.msra.mxu0 0.0
        %523 = vmatprep.subr.mxu0 0.0
        %524 = vmatpush1.msra.mxu0 0.0
        %525 = vmatprep.subr.mxu0 0.0
        %526 = vmatpush1.msra.mxu0 0.0
        %527 = vmatprep.subr.mxu0 0.0
        %528 = vmatpush1.msra.mxu0 0.0
        %529 = vmatprep.subr.mxu0 0.0
        %530 = vmatpush1.msra.mxu0 0.0
        %531 = vmatprep.subr.mxu0 0.0
        %532 = vmatpush1.msra.mxu0 0.0
        %533 = vmatprep.subr.mxu0 0.0
        %534 = vmatpush1.msra.mxu0 0.0
        %535 = vmatprep.subr.mxu0 0.0
        %536 = vmatpush1.msra.mxu0 0.0
        %537 = vmatprep.subr.mxu0 0.0
        %538 = vmatpush1.msra.mxu0 0.0
        %539 = vmatprep.subr.mxu0 0.0
        %540 = vmatpush1.msra.mxu0 0.0
        %541 = vmatprep.subr.mxu0 0.0
        %542 = vmatpush1.msra.mxu0 0.0
        %543 = vmatprep.subr.mxu0 0.0
        %544 = vmatpush1.msra.mxu0 0.0
        %545 = vmatprep.subr.mxu0 0.0
        %546 = vmatpush1.msra.mxu0 0.0
        %547 = vmatprep.subr.mxu0 0.0
        %548 = vmatpush1.msra.mxu0 0.0
        %549 = vmatprep.subr.mxu0 0.0
        %550 = vmatpush1.msra.mxu0 0.0
        %551 = vmatprep.subr.mxu0 0.0
        %552 = vmatpush1.msra.mxu0 0.0
        %553 = vmatprep.subr.mxu0 0.0
        %554 = vmatpush1.msra.mxu0 0.0
        %555 = vmatprep.subr.mxu0 0.0
        %556 = vmatpush1.msra.mxu0 0.0
        %557 = vmatprep.subr.mxu0 0.0
        %558 = vmatpush1.msra.mxu0 0.0
        %559 = vmatprep.subr.mxu0 0.0
        %560 = vmatpush1.msra.mxu0 0.0
        %561 = vmatprep.subr.mxu0 0.0
        %562 = vmatpush1.msra.mxu0 0.0
        %563 = vmatprep.subr.mxu0 0.0
        %564 = vmatpush1.msra.mxu0 0.0
        %565 = vmatprep.subr.mxu0 0.0
        %566 = vmatpush1.msra.mxu0 0.0
        %567 = vmatprep.subr.mxu0 0.0
        %568 = vmatpush1.msra.mxu0 0.0
        %569 = vmatprep.mubr.f32.mxu0 0.0
        %570 = vmatmul.mubr.f32.gmra.mrb[0].mxu0 %v482
        %v571 = vpop.f32.mrb[0].mxu0
        %v572 = vadd.f32 %v468, %v571
        %v573 = vpop.f32.mrb[0].mxu0
        %v574 = vadd.f32 %v472, %v573
        %575 = vmatprep.mubr.f32.mxu0 0.0
        %576 = vmatmul.mubr.f32.gmra.mrb[0].mxu0 %v485
        %v577 = vpop.f32.mrb[0].mxu0
        %v578 = vadd.f32 %v468, %v577
        %v579 = vpop.f32.mrb[0].mxu0
        %v580 = vadd.f32 %v472, %v579
        %581 = vmatprep.mubr.f32.mxu0 0.0
        %582 = vmatmul.mubr.f32.gmra.mrb[0].mxu0 %v488
        %v583 = vpop.f32.mrb[0].mxu0
        %v584 = vadd.f32 %v468, %v583
        %v585 = vpop.f32.mrb[0].mxu0
        %v586 = vadd.f32 %v472, %v585
        %587 = vmatprep.mubr.f32.mxu0 0.0
        %588 = vmatmul.mubr.f32.gmra.mrb[0].mxu0 %v491
        %v589 = vpop.f32.mrb[0].mxu0
        %v590 = vadd.f32 %v468, %v589
        %v591 = vpop.f32.mrb[0].mxu0
        %v592 = vadd.f32 %v472, %v591
        %593 = vmatprep.mubr.f32.mxu0 0.0
        %594 = vmatmul.mubr.f32.gmra.mrb[0].mxu0 %v494
        %v595 = vpop.f32.mrb[0].mxu0
        %v596 = vadd.f32 %v468, %v595
        %v597 = vpop.f32.mrb[0].mxu0
        %v598 = vadd.f32 %v472, %v597
        %599 = vmatprep.mubr.f32.mxu0 0.0
        %600 = vmatmul.mubr.f32.gmra.mrb[0].mxu0 %v497
        %v601 = vpop.f32.mrb[0].mxu0
        %v602 = vadd.f32 %v468, %v601
        %v603 = vpop.f32.mrb[0].mxu0
        %v604 = vadd.f32 %v472, %v603
        %605 = vmatprep.mubr.f32.mxu0 0.0
        %606 = vmatmul.mubr.f32.gmra.mrb[0].mxu0 %v500
        %v607 = vpop.f32.mrb[0].mxu0
        %v608 = vadd.f32 %v468, %v607
        %v609 = vpop.f32.mrb[0].mxu0
        %v610 = vadd.f32 %v472, %v609
        %611 = vmatprep.mubr.f32.mxu0 0.0
        %612 = vmatmul.mubr.f32.gmra.mrb[0].mxu0 %v503
        %v613 = vpop.f32.mrb[0].mxu0
        %v614 = vadd.f32 %v468, %v613
        %v615 = vpop.f32.mrb[0].mxu0
        %v616 = vadd.f32 %v472, %v615
        %617 = vdwg.mxu0
        %618 = vmatprep.subr.mxu0 0.0
        %619 = vmatpush1.msra.mxu0 %v451
        %620 = vmatprep.subr.mxu0 0.0
        %621 = vmatpush1.msra.mxu0 %v454
        %622 = vmatprep.subr.mxu0 0.0
        %623 = vmatpush1.msra.mxu0 0.0
        %624 = vmatprep.subr.mxu0 0.0
        %625 = vmatpush1.msra.mxu0 0.0
        %626 = vmatprep.subr.mxu0 0.0
        %627 = vmatpush1.msra.mxu0 0.0
        %628 = vmatprep.subr.mxu0 0.0
        %629 = vmatpush1.msra.mxu0 0.0
        %630 = vmatprep.subr.mxu0 0.0
        %631 = vmatpush1.msra.mxu0 0.0
        %632 = vmatprep.subr.mxu0 0.0
        %633 = vmatpush1.msra.mxu0 0.0
        %634 = vmatprep.subr.mxu0 0.0
        %635 = vmatpush1.msra.mxu0 0.0
        %636 = vmatprep.subr.mxu0 0.0
        %637 = vmatpush1.msra.mxu0 0.0
        %638 = vmatprep.subr.mxu0 0.0
        %639 = vmatpush1.msra.mxu0 0.0
        %640 = vmatprep.subr.mxu0 0.0
        %641 = vmatpush1.msra.mxu0 0.0
        %642 = vmatprep.subr.mxu0 0.0
        %643 = vmatpush1.msra.mxu0 0.0
        %644 = vmatprep.subr.mxu0 0.0
        %645 = vmatpush1.msra.mxu0 0.0
        %646 = vmatprep.subr.mxu0 0.0
        %647 = vmatpush1.msra.mxu0 0.0
        %648 = vmatprep.subr.mxu0 0.0
        %649 = vmatpush1.msra.mxu0 0.0
        %650 = vmatprep.subr.mxu0 0.0
        %651 = vmatpush1.msra.mxu0 0.0
        %652 = vmatprep.subr.mxu0 0.0
        %653 = vmatpush1.msra.mxu0 0.0
        %654 = vmatprep.subr.mxu0 0.0
        %655 = vmatpush1.msra.mxu0 0.0
        %656 = vmatprep.subr.mxu0 0.0
        %657 = vmatpush1.msra.mxu0 0.0
        %658 = vmatprep.subr.mxu0 0.0
        %659 = vmatpush1.msra.mxu0 0.0
        %660 = vmatprep.subr.mxu0 0.0
        %661 = vmatpush1.msra.mxu0 0.0
        %662 = vmatprep.subr.mxu0 0.0
        %663 = vmatpush1.msra.mxu0 0.0
        %664 = vmatprep.subr.mxu0 0.0
        %665 = vmatpush1.msra.mxu0 0.0
        %666 = vmatprep.subr.mxu0 0.0
        %667 = vmatpush1.msra.mxu0 0.0
        %668 = vmatprep.subr.mxu0 0.0
        %669 = vmatpush1.msra.mxu0 0.0
        %670 = vmatprep.subr.mxu0 0.0
        %671 = vmatpush1.msra.mxu0 0.0
        %672 = vmatprep.subr.mxu0 0.0
        %673 = vmatpush1.msra.mxu0 0.0
        %674 = vmatprep.subr.mxu0 0.0
        %675 = vmatpush1.msra.mxu0 0.0
        %676 = vmatprep.subr.mxu0 0.0
        %677 = vmatpush1.msra.mxu0 0.0
        %678 = vmatprep.subr.mxu0 0.0
        %679 = vmatpush1.msra.mxu0 0.0
        %680 = vmatprep.subr.mxu0 0.0
        %681 = vmatpush1.msra.mxu0 0.0
        %682 = vmatprep.mubr.f32.mxu0 0.0
        %683 = vmatmul.mubr.f32.gmra.mrb[0].mxu0 %v482
        %v684 = vpop.f32.mrb[0].mxu0
        %v685 = vadd.f32 %v476, %v684
        %v686 = vpop.f32.mrb[0].mxu0
        %687 = vmatprep.mubr.f32.mxu0 0.0
        %688 = vmatmul.mubr.f32.gmra.mrb[0].mxu0 %v485
        %v689 = vpop.f32.mrb[0].mxu0
        %v690 = vadd.f32 %v476, %v689
        %v691 = vpop.f32.mrb[0].mxu0
        %692 = vmatprep.mubr.f32.mxu0 0.0
        %693 = vmatmul.mubr.f32.gmra.mrb[0].mxu0 %v488
        %v694 = vpop.f32.mrb[0].mxu0
        %v695 = vadd.f32 %v476, %v694
        %v696 = vpop.f32.mrb[0].mxu0
        %697 = vmatprep.mubr.f32.mxu0 0.0
        %698 = vmatmul.mubr.f32.gmra.mrb[0].mxu0 %v491
        %v699 = vpop.f32.mrb[0].mxu0
        %v700 = vadd.f32 %v476, %v699
        %v701 = vpop.f32.mrb[0].mxu0
        %702 = vmatprep.mubr.f32.mxu0 0.0
        %703 = vmatmul.mubr.f32.gmra.mrb[0].mxu0 %v494
        %v704 = vpop.f32.mrb[0].mxu0
        %v705 = vadd.f32 %v476, %v704
        %v706 = vpop.f32.mrb[0].mxu0
        %707 = vmatprep.mubr.f32.mxu0 0.0
        %708 = vmatmul.mubr.f32.gmra.mrb[0].mxu0 %v497
        %v709 = vpop.f32.mrb[0].mxu0
        %v710 = vadd.f32 %v476, %v709
        %v711 = vpop.f32.mrb[0].mxu0
        %712 = vmatprep.mubr.f32.mxu0 0.0
        %713 = vmatmul.mubr.f32.gmra.mrb[0].mxu0 %v500
        %v714 = vpop.f32.mrb[0].mxu0
        %v715 = vadd.f32 %v476, %v714
        %v716 = vpop.f32.mrb[0].mxu0
        %717 = vmatprep.mubr.f32.mxu0 0.0
        %718 = vmatmul.mubr.f32.gmra.mrb[0].mxu0 %v503
        %v719 = vpop.f32.mrb[0].mxu0
        %v720 = vadd.f32 %v476, %v719
        %v721 = vpop.f32.mrb[0].mxu0
        %722 = vdwg.mxu0
        %723 = vst [vmem:[#allocation2] sm:$0xff] %v572
        %724 = vst [vmem:[#allocation2 + $0x8] sm:$0xff] %v574
        %725 = vst [vmem:[#allocation2 + $0x10] sm:$0xff] %v685
        %726 = vst [vmem:[#allocation2 + $0x18] sm:$0xff] %v578
        %727 = vst [vmem:[#allocation2 + $0x20] sm:$0xff] %v580
        %728 = vst [vmem:[#allocation2 + $0x28] sm:$0xff] %v690
        %729 = vst [vmem:[#allocation2 + $0x30] sm:$0xff] %v584
        %730 = vst [vmem:[#allocation2 + $0x38] sm:$0xff] %v586
        %731 = vst [vmem:[#allocation2 + $0x40] sm:$0xff] %v695
        %732 = vst [vmem:[#allocation2 + $0x48] sm:$0xff] %v590
        %733 = vst [vmem:[#allocation2 + $0x50] sm:$0xff] %v592
        %734 = vst [vmem:[#allocation2 + $0x58] sm:$0xff] %v700
        %735 = vst [vmem:[#allocation2 + $0x60] sm:$0xff] %v596
        %736 = vst [vmem:[#allocation2 + $0x68] sm:$0xff] %v598
        %737 = vst [vmem:[#allocation2 + $0x70] sm:$0xff] %v705
        %738 = vst [vmem:[#allocation2 + $0x78] sm:$0xff] %v602
        %739 = vst [vmem:[#allocation2 + $0x80] sm:$0xff] %v604
        %740 = vst [vmem:[#allocation2 + $0x88] sm:$0xff] %v710
        %741 = vst [vmem:[#allocation2 + $0x90] sm:$0xff] %v608
        %742 = vst [vmem:[#allocation2 + $0x98] sm:$0xff] %v610
        %743 = vst [vmem:[#allocation2 + $0xa0] sm:$0xff] %v715
        %744 = vst [vmem:[#allocation2 + $0xa8] sm:$0xff] %v614
        %745 = vst [vmem:[#allocation2 + $0xb0] sm:$0xff] %v616
        %746 = vst [vmem:[#allocation2 + $0xb8] sm:$0xff] %v720
        %v747 = vld [vmem:[%s4] sm:$0x1]
        %v749 = vlaneseq
        %v750 = vshrl.u32 %v749, 7
        %v751 = vsub.s32 0, %v750
        %v752 = vrot.slane %v747, %v751
        %v754 = vld [vmem:[#allocation2] sm:$0xff]
        %v755 = vld [vmem:[#allocation2 + $0x8] sm:$0xff]
        %v756 = vld [vmem:[#allocation2 + $0x10] sm:$0xff]
        %v757 = vld [vmem:[%s2] sm:$0xff]
        %v758 = vld [vmem:[%s2 + $0x8] sm:$0xff]
        %v759 = vld [vmem:[%s2 + $0x10] sm:$0xff]
        %v760 = vld [vmem:[%s2 + $0x18] sm:$0xff]
        %v761 = vld [vmem:[%s2 + $0x20] sm:$0xff]
        %v762 = vld [vmem:[%s2 + $0x28] sm:$0xff]
        %v763 = vld [vmem:[%s2 + $0x30] sm:$0xff]
        %v764 = vld [vmem:[%s2 + $0x38] sm:$0xff]
        %v765 = vld [vmem:[%s2 + $0x40] sm:$0xff]
        %v766 = vld [vmem:[%s2 + $0x48] sm:$0xff]
        %v767 = vld [vmem:[%s2 + $0x50] sm:$0xff]
        %v768 = vld [vmem:[%s2 + $0x58] sm:$0xff]
        %v769 = vld [vmem:[%s2 + $0x60] sm:$0xff]
        %v770 = vld [vmem:[%s2 + $0x68] sm:$0xff]
        %v771 = vld [vmem:[%s2 + $0x70] sm:$0xff]
        %v772 = vld [vmem:[%s2 + $0x78] sm:$0xff]
        %v773 = vld [vmem:[%s2 + $0x80] sm:$0xff]
        %v774 = vld [vmem:[%s2 + $0x88] sm:$0xff]
        %v775 = vld [vmem:[%s2 + $0x90] sm:$0xff]
        %v776 = vld [vmem:[%s2 + $0x98] sm:$0xff]
        %v777 = vld [vmem:[%s2 + $0xa0] sm:$0xff]
        %v778 = vld [vmem:[%s2 + $0xa8] sm:$0xff]
        %v779 = vld [vmem:[%s2 + $0xb0] sm:$0xff]
        %v780 = vld [vmem:[%s2 + $0xb8] sm:$0xff]
        %v781 = vld [vmem:[%s2 + $0xc0] sm:$0xff]
        %v782 = vld [vmem:[%s2 + $0xc8] sm:$0xff]
        %v783 = vld [vmem:[%s2 + $0xd0] sm:$0xff]
        %v784 = vld [vmem:[%s2 + $0xd8] sm:$0xff]
        %v785 = vld [vmem:[%s2 + $0xe0] sm:$0xff]
        %v786 = vld [vmem:[%s2 + $0xe8] sm:$0xff]
        %v787 = vld [vmem:[%s2 + $0xf0] sm:$0xff]
        %v788 = vld [vmem:[%s2 + $0xf8] sm:$0xff]
        %v789 = vld [vmem:[%s2 + $0x100] sm:$0xff]
        %v790 = vld [vmem:[%s2 + $0x108] sm:$0xff]
        %v791 = vld [vmem:[%s2 + $0x110] sm:$0xff]
        %v792 = vld [vmem:[%s2 + $0x118] sm:$0xff]
        %v793 = vld [vmem:[%s2 + $0x120] sm:$0xff]
        %v794 = vld [vmem:[%s2 + $0x128] sm:$0xff]
        %v795 = vld [vmem:[%s2 + $0x130] sm:$0xff]
        %v796 = vld [vmem:[%s2 + $0x138] sm:$0xff]
        %v797 = vld [vmem:[%s2 + $0x140] sm:$0xff]
        %v798 = vld [vmem:[%s2 + $0x148] sm:$0xff]
        %v799 = vld [vmem:[%s2 + $0x150] sm:$0xff]
        %v800 = vld [vmem:[%s2 + $0x158] sm:$0xff]
        %v801 = vld [vmem:[%s2 + $0x160] sm:$0xff]
        %v802 = vld [vmem:[%s2 + $0x168] sm:$0xff]
        %v803 = vld [vmem:[%s2 + $0x170] sm:$0xff]
        %v804 = vld [vmem:[%s2 + $0x178] sm:$0xff]
        %805 = vmatprep.subr.mxu0 %v758
        %806 = vmatpush1.msra.mxu0 %v757
        %807 = vmatprep.subr.mxu0 %v761
        %808 = vmatpush1.msra.mxu0 %v760
        %809 = vmatprep.subr.mxu0 %v764
        %810 = vmatpush1.msra.mxu0 %v763
        %811 = vmatprep.subr.mxu0 %v767
        %812 = vmatpush1.msra.mxu0 %v766
        %813 = vmatprep.subr.mxu0 %v770
        %814 = vmatpush1.msra.mxu0 %v769
        %815 = vmatprep.subr.mxu0 %v773
        %816 = vmatpush1.msra.mxu0 %v772
        %817 = vmatprep.subr.mxu0 %v776
        %818 = vmatpush1.msra.mxu0 %v775
        %819 = vmatprep.subr.mxu0 %v779
        %820 = vmatpush1.msra.mxu0 %v778
        %821 = vmatprep.subr.mxu0 %v782
        %822 = vmatpush1.msra.mxu0 %v781
        %823 = vmatprep.subr.mxu0 %v785
        %824 = vmatpush1.msra.mxu0 %v784
        %825 = vmatprep.subr.mxu0 %v788
        %826 = vmatpush1.msra.mxu0 %v787
        %827 = vmatprep.subr.mxu0 %v791
        %828 = vmatpush1.msra.mxu0 %v790
        %829 = vmatprep.subr.mxu0 %v794
        %830 = vmatpush1.msra.mxu0 %v793
        %831 = vmatprep.subr.mxu0 %v797
        %832 = vmatpush1.msra.mxu0 %v796
        %833 = vmatprep.subr.mxu0 %v800
        %834 = vmatpush1.msra.mxu0 %v799
        %835 = vmatprep.subr.mxu0 %v803
        %836 = vmatpush1.msra.mxu0 %v802
        %837 = vmatprep.subr.mxu0 0.0
        %838 = vmatpush1.msra.mxu0 0.0
        %839 = vmatprep.subr.mxu0 0.0
        %840 = vmatpush1.msra.mxu0 0.0
        %841 = vmatprep.subr.mxu0 0.0
        %842 = vmatpush1.msra.mxu0 0.0
        %843 = vmatprep.subr.mxu0 0.0
        %844 = vmatpush1.msra.mxu0 0.0
        %845 = vmatprep.subr.mxu0 0.0
        %846 = vmatpush1.msra.mxu0 0.0
        %847 = vmatprep.subr.mxu0 0.0
        %848 = vmatpush1.msra.mxu0 0.0
        %849 = vmatprep.subr.mxu0 0.0
        %850 = vmatpush1.msra.mxu0 0.0
        %851 = vmatprep.subr.mxu0 0.0
        %852 = vmatpush1.msra.mxu0 0.0
        %853 = vmatprep.subr.mxu0 0.0
        %854 = vmatpush1.msra.mxu0 0.0
        %855 = vmatprep.subr.mxu0 0.0
        %856 = vmatpush1.msra.mxu0 0.0
        %857 = vmatprep.subr.mxu0 0.0
        %858 = vmatpush1.msra.mxu0 0.0
        %859 = vmatprep.subr.mxu0 0.0
        %860 = vmatpush1.msra.mxu0 0.0
        %861 = vmatprep.subr.mxu0 0.0
        %862 = vmatpush1.msra.mxu0 0.0
        %863 = vmatprep.subr.mxu0 0.0
        %864 = vmatpush1.msra.mxu0 0.0
        %865 = vmatprep.subr.mxu0 0.0
        %866 = vmatpush1.msra.mxu0 0.0
        %867 = vmatprep.subr.mxu0 0.0
        %868 = vmatpush1.msra.mxu0 0.0
        %869 = vmatprep.mubr.f32.mxu0 0.0
        %870 = vmatmul.mubr.f32.gmra.mrb[0].mxu0 0.0
        %v871 = vpop.f32.mrb[0].mxu0
        %v872 = vadd.f32 0.0, %v871
        %v873 = vpop.f32.mrb[0].mxu0
        %v874 = vadd.f32 0.0, %v873
        %875 = vdwg.mxu0
        %876 = vmatprep.subr.mxu0 0.0
        %877 = vmatpush1.msra.mxu0 %v759
        %878 = vmatprep.subr.mxu0 0.0
        %879 = vmatpush1.msra.mxu0 %v762
        %880 = vmatprep.subr.mxu0 0.0
        %881 = vmatpush1.msra.mxu0 %v765
        %882 = vmatprep.subr.mxu0 0.0
        %883 = vmatpush1.msra.mxu0 %v768
        %884 = vmatprep.subr.mxu0 0.0
        %885 = vmatpush1.msra.mxu0 %v771
        %886 = vmatprep.subr.mxu0 0.0
        %887 = vmatpush1.msra.mxu0 %v774
        %888 = vmatprep.subr.mxu0 0.0
        %889 = vmatpush1.msra.mxu0 %v777
        %890 = vmatprep.subr.mxu0 0.0
        %891 = vmatpush1.msra.mxu0 %v780
        %892 = vmatprep.subr.mxu0 0.0
        %893 = vmatpush1.msra.mxu0 %v783
        %894 = vmatprep.subr.mxu0 0.0
        %895 = vmatpush1.msra.mxu0 %v786
        %896 = vmatprep.subr.mxu0 0.0
        %897 = vmatpush1.msra.mxu0 %v789
        %898 = vmatprep.subr.mxu0 0.0
        %899 = vmatpush1.msra.mxu0 %v792
        %900 = vmatprep.subr.mxu0 0.0
        %901 = vmatpush1.msra.mxu0 %v795
        %902 = vmatprep.subr.mxu0 0.0
        %903 = vmatpush1.msra.mxu0 %v798
        %904 = vmatprep.subr.mxu0 0.0
        %905 = vmatpush1.msra.mxu0 %v801
        %906 = vmatprep.subr.mxu0 0.0
        %907 = vmatpush1.msra.mxu0 %v804
        %908 = vmatprep.subr.mxu0 0.0
        %909 = vmatpush1.msra.mxu0 0.0
        %910 = vmatprep.subr.mxu0 0.0
        %911 = vmatpush1.msra.mxu0 0.0
        %912 = vmatprep.subr.mxu0 0.0
        %913 = vmatpush1.msra.mxu0 0.0
        %914 = vmatprep.subr.mxu0 0.0
        %915 = vmatpush1.msra.mxu0 0.0
        %916 = vmatprep.subr.mxu0 0.0
        %917 = vmatpush1.msra.mxu0 0.0
        %918 = vmatprep.subr.mxu0 0.0
        %919 = vmatpush1.msra.mxu0 0.0
        %920 = vmatprep.subr.mxu0 0.0
        %921 = vmatpush1.msra.mxu0 0.0
        %922 = vmatprep.subr.mxu0 0.0
        %923 = vmatpush1.msra.mxu0 0.0
        %924 = vmatprep.subr.mxu0 0.0
        %925 = vmatpush1.msra.mxu0 0.0
        %926 = vmatprep.subr.mxu0 0.0
        %927 = vmatpush1.msra.mxu0 0.0
        %928 = vmatprep.subr.mxu0 0.0
        %929 = vmatpush1.msra.mxu0 0.0
        %930 = vmatprep.subr.mxu0 0.0
        %931 = vmatpush1.msra.mxu0 0.0
        %932 = vmatprep.subr.mxu0 0.0
        %933 = vmatpush1.msra.mxu0 0.0
        %934 = vmatprep.subr.mxu0 0.0
        %935 = vmatpush1.msra.mxu0 0.0
        %936 = vmatprep.subr.mxu0 0.0
        %937 = vmatpush1.msra.mxu0 0.0
        %938 = vmatprep.subr.mxu0 0.0
        %939 = vmatpush1.msra.mxu0 0.0
        %940 = vmatprep.mubr.f32.mxu0 0.0
        %941 = vmatmul.mubr.f32.gmra.mrb[0].mxu0 0.0
        %v942 = vpop.f32.mrb[0].mxu0
        %v943 = vadd.f32 0.0, %v942
        %v944 = vpop.f32.mrb[0].mxu0
        %945 = vdwg.mxu0
        %v946 = vadd.f32 %v754, %v872
        %v947 = vxor.u32 %v946, 2147483648
        %v948 = vmul.f32 %v947, 1.442695
        %v949 = vpow.pop %v948
        %v950 = vadd.f32 %v949, 1.0
        %v951 = vrcp.pop %v950
        %v952 = vmul.f32 1.0, %v951
        %v953 = vadd.f32 %v755, %v874
        %v954 = vxor.u32 %v953, 2147483648
        %v955 = vmul.f32 %v954, 1.442695
        %v956 = vpow.pop %v955
        %v957 = vadd.f32 %v956, 1.0
        %v958 = vrcp.pop %v957
        %v959 = vmul.f32 1.0, %v958
        %v960 = vadd.f32 %v943, %v752
        %v961 = vmul.f32 %v952, %v960
        %v962 = vadd.f32 %v756, %v961
        %v963 = vtanh.pop %v962
        %v964 = vsub.f32 1.0, %v959
        %v965 = vmul.f32 %v964, %v963
        %v966 = vmul.f32 %v959, 0.0
        %v967 = vadd.f32 %v965, %v966
        %968 = vst [vmem:[#allocation3] sm:$0xff] %v967
        %s969 = scalar_lea.vmem [#allocation2], 24
        %v970 = vld [vmem:[%s969] sm:$0xff]
        %v971 = vld [vmem:[%s969 + $0x8] sm:$0xff]
        %v972 = vld [vmem:[%s969 + $0x10] sm:$0xff]
        %v973 = vld [vmem:[%s2] sm:$0xff]
        %v974 = vld [vmem:[%s2 + $0x8] sm:$0xff]
        %v975 = vld [vmem:[%s2 + $0x10] sm:$0xff]
        %v976 = vld [vmem:[%s2 + $0x18] sm:$0xff]
        %v977 = vld [vmem:[%s2 + $0x20] sm:$0xff]
        %v978 = vld [vmem:[%s2 + $0x28] sm:$0xff]
        %v979 = vld [vmem:[%s2 + $0x30] sm:$0xff]
        %v980 = vld [vmem:[%s2 + $0x38] sm:$0xff]
        %v981 = vld [vmem:[%s2 + $0x40] sm:$0xff]
        %v982 = vld [vmem:[%s2 + $0x48] sm:$0xff]
        %v983 = vld [vmem:[%s2 + $0x50] sm:$0xff]
        %v984 = vld [vmem:[%s2 + $0x58] sm:$0xff]
        %v985 = vld [vmem:[%s2 + $0x60] sm:$0xff]
        %v986 = vld [vmem:[%s2 + $0x68] sm:$0xff]
        %v987 = vld [vmem:[%s2 + $0x70] sm:$0xff]
        %v988 = vld [vmem:[%s2 + $0x78] sm:$0xff]
        %v989 = vld [vmem:[%s2 + $0x80] sm:$0xff]
        %v990 = vld [vmem:[%s2 + $0x88] sm:$0xff]
        %v991 = vld [vmem:[%s2 + $0x90] sm:$0xff]
        %v992 = vld [vmem:[%s2 + $0x98] sm:$0xff]
        %v993 = vld [vmem:[%s2 + $0xa0] sm:$0xff]
        %v994 = vld [vmem:[%s2 + $0xa8] sm:$0xff]
        %v995 = vld [vmem:[%s2 + $0xb0] sm:$0xff]
        %v996 = vld [vmem:[%s2 + $0xb8] sm:$0xff]
        %v997 = vld [vmem:[%s2 + $0xc0] sm:$0xff]
        %v998 = vld [vmem:[%s2 + $0xc8] sm:$0xff]
        %v999 = vld [vmem:[%s2 + $0xd0] sm:$0xff]
        %v1000 = vld [vmem:[%s2 + $0xd8] sm:$0xff]
        %v1001 = vld [vmem:[%s2 + $0xe0] sm:$0xff]
        %v1002 = vld [vmem:[%s2 + $0xe8] sm:$0xff]
        %v1003 = vld [vmem:[%s2 + $0xf0] sm:$0xff]
        %v1004 = vld [vmem:[%s2 + $0xf8] sm:$0xff]
        %v1005 = vld [vmem:[%s2 + $0x100] sm:$0xff]
        %v1006 = vld [vmem:[%s2 + $0x108] sm:$0xff]
        %v1007 = vld [vmem:[%s2 + $0x110] sm:$0xff]
        %v1008 = vld [vmem:[%s2 + $0x118] sm:$0xff]
        %v1009 = vld [vmem:[%s2 + $0x120] sm:$0xff]
        %v1010 = vld [vmem:[%s2 + $0x128] sm:$0xff]
        %v1011 = vld [vmem:[%s2 + $0x130] sm:$0xff]
        %v1012 = vld [vmem:[%s2 + $0x138] sm:$0xff]
        %v1013 = vld [vmem:[%s2 + $0x140] sm:$0xff]
        %v1014 = vld [vmem:[%s2 + $0x148] sm:$0xff]
        %v1015 = vld [vmem:[%s2 + $0x150] sm:$0xff]
        %v1016 = vld [vmem:[%s2 + $0x158] sm:$0xff]
        %v1017 = vld [vmem:[%s2 + $0x160] sm:$0xff]
        %v1018 = vld [vmem:[%s2 + $0x168] sm:$0xff]
        %v1019 = vld [vmem:[%s2 + $0x170] sm:$0xff]
        %v1020 = vld [vmem:[%s2 + $0x178] sm:$0xff]
        %1021 = vmatprep.subr.mxu0 %v974
        %1022 = vmatpush1.msra.mxu0 %v973
        %1023 = vmatprep.subr.mxu0 %v977
        %1024 = vmatpush1.msra.mxu0 %v976
        %1025 = vmatprep.subr.mxu0 %v980
        %1026 = vmatpush1.msra.mxu0 %v979
        %1027 = vmatprep.subr.mxu0 %v983
        %1028 = vmatpush1.msra.mxu0 %v982
        %1029 = vmatprep.subr.mxu0 %v986
        %1030 = vmatpush1.msra.mxu0 %v985
        %1031 = vmatprep.subr.mxu0 %v989
        %1032 = vmatpush1.msra.mxu0 %v988
        %1033 = vmatprep.subr.mxu0 %v992
        %1034 = vmatpush1.msra.mxu0 %v991
        %1035 = vmatprep.subr.mxu0 %v995
        %1036 = vmatpush1.msra.mxu0 %v994
        %1037 = vmatprep.subr.mxu0 %v998
        %1038 = vmatpush1.msra.mxu0 %v997
        %1039 = vmatprep.subr.mxu0 %v1001
        %1040 = vmatpush1.msra.mxu0 %v1000
        %1041 = vmatprep.subr.mxu0 %v1004
        %1042 = vmatpush1.msra.mxu0 %v1003
        %1043 = vmatprep.subr.mxu0 %v1007
        %1044 = vmatpush1.msra.mxu0 %v1006
        %1045 = vmatprep.subr.mxu0 %v1010
        %1046 = vmatpush1.msra.mxu0 %v1009
        %1047 = vmatprep.subr.mxu0 %v1013
        %1048 = vmatpush1.msra.mxu0 %v1012
        %1049 = vmatprep.subr.mxu0 %v1016
        %1050 = vmatpush1.msra.mxu0 %v1015
        %1051 = vmatprep.subr.mxu0 %v1019
        %1052 = vmatpush1.msra.mxu0 %v1018
        %1053 = vmatprep.subr.mxu0 0.0
        %1054 = vmatpush1.msra.mxu0 0.0
        %1055 = vmatprep.subr.mxu0 0.0
        %1056 = vmatpush1.msra.mxu0 0.0
        %1057 = vmatprep.subr.mxu0 0.0
        %1058 = vmatpush1.msra.mxu0 0.0
        %1059 = vmatprep.subr.mxu0 0.0
        %1060 = vmatpush1.msra.mxu0 0.0
        %1061 = vmatprep.subr.mxu0 0.0
        %1062 = vmatpush1.msra.mxu0 0.0
        %1063 = vmatprep.subr.mxu0 0.0
        %1064 = vmatpush1.msra.mxu0 0.0
        %1065 = vmatprep.subr.mxu0 0.0
        %1066 = vmatpush1.msra.mxu0 0.0
        %1067 = vmatprep.subr.mxu0 0.0
        %1068 = vmatpush1.msra.mxu0 0.0
        %1069 = vmatprep.subr.mxu0 0.0
        %1070 = vmatpush1.msra.mxu0 0.0
        %1071 = vmatprep.subr.mxu0 0.0
        %1072 = vmatpush1.msra.mxu0 0.0
        %1073 = vmatprep.subr.mxu0 0.0
        %1074 = vmatpush1.msra.mxu0 0.0
        %1075 = vmatprep.subr.mxu0 0.0
        %1076 = vmatpush1.msra.mxu0 0.0
        %1077 = vmatprep.subr.mxu0 0.0
        %1078 = vmatpush1.msra.mxu0 0.0
        %1079 = vmatprep.subr.mxu0 0.0
        %1080 = vmatpush1.msra.mxu0 0.0
        %1081 = vmatprep.subr.mxu0 0.0
        %1082 = vmatpush1.msra.mxu0 0.0
        %1083 = vmatprep.subr.mxu0 0.0
        %1084 = vmatpush1.msra.mxu0 0.0
        %1085 = vmatprep.mubr.f32.mxu0 0.0
        %1086 = vmatmul.mubr.f32.gmra.mrb[0].mxu0 %v967
        %v1087 = vpop.f32.mrb[0].mxu0
        %v1088 = vadd.f32 0.0, %v1087
        %v1089 = vpop.f32.mrb[0].mxu0
        %v1090 = vadd.f32 0.0, %v1089
        %1091 = vdwg.mxu0
        %1092 = vmatprep.subr.mxu0 0.0
        %1093 = vmatpush1.msra.mxu0 %v975
        %1094 = vmatprep.subr.mxu0 0.0
        %1095 = vmatpush1.msra.mxu0 %v978
        %1096 = vmatprep.subr.mxu0 0.0
        %1097 = vmatpush1.msra.mxu0 %v981
        %1098 = vmatprep.subr.mxu0 0.0
        %1099 = vmatpush1.msra.mxu0 %v984
        %1100 = vmatprep.subr.mxu0 0.0
        %1101 = vmatpush1.msra.mxu0 %v987
        %1102 = vmatprep.subr.mxu0 0.0
        %1103 = vmatpush1.msra.mxu0 %v990
        %1104 = vmatprep.subr.mxu0 0.0
        %1105 = vmatpush1.msra.mxu0 %v993
        %1106 = vmatprep.subr.mxu0 0.0
        %1107 = vmatpush1.msra.mxu0 %v996
        %1108 = vmatprep.subr.mxu0 0.0
        %1109 = vmatpush1.msra.mxu0 %v999
        %1110 = vmatprep.subr.mxu0 0.0
        %1111 = vmatpush1.msra.mxu0 %v1002
        %1112 = vmatprep.subr.mxu0 0.0
        %1113 = vmatpush1.msra.mxu0 %v1005
        %1114 = vmatprep.subr.mxu0 0.0
        %1115 = vmatpush1.msra.mxu0 %v1008
        %1116 = vmatprep.subr.mxu0 0.0
        %1117 = vmatpush1.msra.mxu0 %v1011
        %1118 = vmatprep.subr.mxu0 0.0
        %1119 = vmatpush1.msra.mxu0 %v1014
        %1120 = vmatprep.subr.mxu0 0.0
        %1121 = vmatpush1.msra.mxu0 %v1017
        %1122 = vmatprep.subr.mxu0 0.0
        %1123 = vmatpush1.msra.mxu0 %v1020
        %1124 = vmatprep.subr.mxu0 0.0
        %1125 = vmatpush1.msra.mxu0 0.0
        %1126 = vmatprep.subr.mxu0 0.0
        %1127 = vmatpush1.msra.mxu0 0.0
        %1128 = vmatprep.subr.mxu0 0.0
        %1129 = vmatpush1.msra.mxu0 0.0
        %1130 = vmatprep.subr.mxu0 0.0
        %1131 = vmatpush1.msra.mxu0 0.0
        %1132 = vmatprep.subr.mxu0 0.0
        %1133 = vmatpush1.msra.mxu0 0.0
        %1134 = vmatprep.subr.mxu0 0.0
        %1135 = vmatpush1.msra.mxu0 0.0
        %1136 = vmatprep.subr.mxu0 0.0
        %1137 = vmatpush1.msra.mxu0 0.0
        %1138 = vmatprep.subr.mxu0 0.0
        %1139 = vmatpush1.msra.mxu0 0.0
        %1140 = vmatprep.subr.mxu0 0.0
        %1141 = vmatpush1.msra.mxu0 0.0
        %1142 = vmatprep.subr.mxu0 0.0
        %1143 = vmatpush1.msra.mxu0 0.0
        %1144 = vmatprep.subr.mxu0 0.0
        %1145 = vmatpush1.msra.mxu0 0.0
        %1146 = vmatprep.subr.mxu0 0.0
        %1147 = vmatpush1.msra.mxu0 0.0
        %1148 = vmatprep.subr.mxu0 0.0
        %1149 = vmatpush1.msra.mxu0 0.0
        %1150 = vmatprep.subr.mxu0 0.0
        %1151 = vmatpush1.msra.mxu0 0.0
        %1152 = vmatprep.subr.mxu0 0.0
        %1153 = vmatpush1.msra.mxu0 0.0
        %1154 = vmatprep.subr.mxu0 0.0
        %1155 = vmatpush1.msra.mxu0 0.0
        %1156 = vmatprep.mubr.f32.mxu0 0.0
        %1157 = vmatmul.mubr.f32.gmra.mrb[0].mxu0 %v967
        %v1158 = vpop.f32.mrb[0].mxu0
        %v1159 = vadd.f32 0.0, %v1158
        %v1160 = vpop.f32.mrb[0].mxu0
        %1161 = vdwg.mxu0
        %v1162 = vadd.f32 %v970, %v1088
        %v1163 = vxor.u32 %v1162, 2147483648
        %v1164 = vmul.f32 %v1163, 1.442695
        %v1165 = vpow.pop %v1164
        %v1166 = vadd.f32 %v1165, 1.0
        %v1167 = vrcp.pop %v1166
        %v1168 = vmul.f32 1.0, %v1167
        %v1169 = vadd.f32 %v971, %v1090
        %v1170 = vxor.u32 %v1169, 2147483648
        %v1171 = vmul.f32 %v1170, 1.442695
        %v1172 = vpow.pop %v1171
        %v1173 = vadd.f32 %v1172, 1.0
        %v1174 = vrcp.pop %v1173
        %v1175 = vmul.f32 1.0, %v1174
        %v1176 = vadd.f32 %v1159, %v752
        %v1177 = vmul.f32 %v1168, %v1176
        %v1178 = vadd.f32 %v972, %v1177
        %v1179 = vtanh.pop %v1178
        %v1180 = vsub.f32 1.0, %v1175
        %v1181 = vmul.f32 %v1180, %v1179
        %v1182 = vmul.f32 %v1175, %v967
        %v1183 = vadd.f32 %v1181, %v1182
        %s1184 = scalar_lea.vmem [#allocation3], 8
        %1185 = vst [vmem:[%s1184] sm:$0xff] %v1183
        %s1186 = scalar_lea.vmem [#allocation2], 48
        %v1187 = vld [vmem:[%s1186] sm:$0xff]
        %v1188 = vld [vmem:[%s1186 + $0x8] sm:$0xff]
        %v1189 = vld [vmem:[%s1186 + $0x10] sm:$0xff]
        %v1190 = vld [vmem:[%s2] sm:$0xff]
        %v1191 = vld [vmem:[%s2 + $0x8] sm:$0xff]
        %v1192 = vld [vmem:[%s2 + $0x10] sm:$0xff]
        %v1193 = vld [vmem:[%s2 + $0x18] sm:$0xff]
        %v1194 = vld [vmem:[%s2 + $0x20] sm:$0xff]
        %v1195 = vld [vmem:[%s2 + $0x28] sm:$0xff]
        %v1196 = vld [vmem:[%s2 + $0x30] sm:$0xff]
        %v1197 = vld [vmem:[%s2 + $0x38] sm:$0xff]
        %v1198 = vld [vmem:[%s2 + $0x40] sm:$0xff]
        %v1199 = vld [vmem:[%s2 + $0x48] sm:$0xff]
        %v1200 = vld [vmem:[%s2 + $0x50] sm:$0xff]
        %v1201 = vld [vmem:[%s2 + $0x58] sm:$0xff]
        %v1202 = vld [vmem:[%s2 + $0x60] sm:$0xff]
        %v1203 = vld [vmem:[%s2 + $0x68] sm:$0xff]
        %v1204 = vld [vmem:[%s2 + $0x70] sm:$0xff]
        %v1205 = vld [vmem:[%s2 + $0x78] sm:$0xff]
        %v1206 = vld [vmem:[%s2 + $0x80] sm:$0xff]
        %v1207 = vld [vmem:[%s2 + $0x88] sm:$0xff]
        %v1208 = vld [vmem:[%s2 + $0x90] sm:$0xff]
        %v1209 = vld [vmem:[%s2 + $0x98] sm:$0xff]
        %v1210 = vld [vmem:[%s2 + $0xa0] sm:$0xff]
        %v1211 = vld [vmem:[%s2 + $0xa8] sm:$0xff]
        %v1212 = vld [vmem:[%s2 + $0xb0] sm:$0xff]
        %v1213 = vld [vmem:[%s2 + $0xb8] sm:$0xff]
        %v1214 = vld [vmem:[%s2 + $0xc0] sm:$0xff]
        %v1215 = vld [vmem:[%s2 + $0xc8] sm:$0xff]
        %v1216 = vld [vmem:[%s2 + $0xd0] sm:$0xff]
        %v1217 = vld [vmem:[%s2 + $0xd8] sm:$0xff]
        %v1218 = vld [vmem:[%s2 + $0xe0] sm:$0xff]
        %v1219 = vld [vmem:[%s2 + $0xe8] sm:$0xff]
        %v1220 = vld [vmem:[%s2 + $0xf0] sm:$0xff]
        %v1221 = vld [vmem:[%s2 + $0xf8] sm:$0xff]
        %v1222 = vld [vmem:[%s2 + $0x100] sm:$0xff]
        %v1223 = vld [vmem:[%s2 + $0x108] sm:$0xff]
        %v1224 = vld [vmem:[%s2 + $0x110] sm:$0xff]
        %v1225 = vld [vmem:[%s2 + $0x118] sm:$0xff]
        %v1226 = vld [vmem:[%s2 + $0x120] sm:$0xff]
        %v1227 = vld [vmem:[%s2 + $0x128] sm:$0xff]
        %v1228 = vld [vmem:[%s2 + $0x130] sm:$0xff]
        %v1229 = vld [vmem:[%s2 + $0x138] sm:$0xff]
        %v1230 = vld [vmem:[%s2 + $0x140] sm:$0xff]
        %v1231 = vld [vmem:[%s2 + $0x148] sm:$0xff]
        %v1232 = vld [vmem:[%s2 + $0x150] sm:$0xff]
        %v1233 = vld [vmem:[%s2 + $0x158] sm:$0xff]
        %v1234 = vld [vmem:[%s2 + $0x160] sm:$0xff]
        %v1235 = vld [vmem:[%s2 + $0x168] sm:$0xff]
        %v1236 = vld [vmem:[%s2 + $0x170] sm:$0xff]
        %v1237 = vld [vmem:[%s2 + $0x178] sm:$0xff]
        %1238 = vmatprep.subr.mxu0 %v1191
        %1239 = vmatpush1.msra.mxu0 %v1190
        %1240 = vmatprep.subr.mxu0 %v1194
        %1241 = vmatpush1.msra.mxu0 %v1193
        %1242 = vmatprep.subr.mxu0 %v1197
        %1243 = vmatpush1.msra.mxu0 %v1196
        %1244 = vmatprep.subr.mxu0 %v1200
        %1245 = vmatpush1.msra.mxu0 %v1199
        %1246 = vmatprep.subr.mxu0 %v1203
        %1247 = vmatpush1.msra.mxu0 %v1202
        %1248 = vmatprep.subr.mxu0 %v1206
        %1249 = vmatpush1.msra.mxu0 %v1205
        %1250 = vmatprep.subr.mxu0 %v1209
        %1251 = vmatpush1.msra.mxu0 %v1208
        %1252 = vmatprep.subr.mxu0 %v1212
        %1253 = vmatpush1.msra.mxu0 %v1211
        %1254 = vmatprep.subr.mxu0 %v1215
        %1255 = vmatpush1.msra.mxu0 %v1214
        %1256 = vmatprep.subr.mxu0 %v1218
        %1257 = vmatpush1.msra.mxu0 %v1217
        %1258 = vmatprep.subr.mxu0 %v1221
        %1259 = vmatpush1.msra.mxu0 %v1220
        %1260 = vmatprep.subr.mxu0 %v1224
        %1261 = vmatpush1.msra.mxu0 %v1223
        %1262 = vmatprep.subr.mxu0 %v1227
        %1263 = vmatpush1.msra.mxu0 %v1226
        %1264 = vmatprep.subr.mxu0 %v1230
        %1265 = vmatpush1.msra.mxu0 %v1229
        %1266 = vmatprep.subr.mxu0 %v1233
        %1267 = vmatpush1.msra.mxu0 %v1232
        %1268 = vmatprep.subr.mxu0 %v1236
        %1269 = vmatpush1.msra.mxu0 %v1235
        %1270 = vmatprep.subr.mxu0 0.0
        %1271 = vmatpush1.msra.mxu0 0.0
        %1272 = vmatprep.subr.mxu0 0.0
        %1273 = vmatpush1.msra.mxu0 0.0
        %1274 = vmatprep.subr.mxu0 0.0
        %1275 = vmatpush1.msra.mxu0 0.0
        %1276 = vmatprep.subr.mxu0 0.0
        %1277 = vmatpush1.msra.mxu0 0.0
        %1278 = vmatprep.subr.mxu0 0.0
        %1279 = vmatpush1.msra.mxu0 0.0
        %1280 = vmatprep.subr.mxu0 0.0
        %1281 = vmatpush1.msra.mxu0 0.0
        %1282 = vmatprep.subr.mxu0 0.0
        %1283 = vmatpush1.msra.mxu0 0.0
        %1284 = vmatprep.subr.mxu0 0.0
        %1285 = vmatpush1.msra.mxu0 0.0
        %1286 = vmatprep.subr.mxu0 0.0
        %1287 = vmatpush1.msra.mxu0 0.0
        %1288 = vmatprep.subr.mxu0 0.0
        %1289 = vmatpush1.msra.mxu0 0.0
        %1290 = vmatprep.subr.mxu0 0.0
        %1291 = vmatpush1.msra.mxu0 0.0
        %1292 = vmatprep.subr.mxu0 0.0
        %1293 = vmatpush1.msra.mxu0 0.0
        %1294 = vmatprep.subr.mxu0 0.0
        %1295 = vmatpush1.msra.mxu0 0.0
        %1296 = vmatprep.subr.mxu0 0.0
        %1297 = vmatpush1.msra.mxu0 0.0
        %1298 = vmatprep.subr.mxu0 0.0
        %1299 = vmatpush1.msra.mxu0 0.0
        %1300 = vmatprep.subr.mxu0 0.0
        %1301 = vmatpush1.msra.mxu0 0.0
        %1302 = vmatprep.mubr.f32.mxu0 0.0
        %1303 = vmatmul.mubr.f32.gmra.mrb[0].mxu0 %v1183
        %v1304 = vpop.f32.mrb[0].mxu0
        %v1305 = vadd.f32 0.0, %v1304
        %v1306 = vpop.f32.mrb[0].mxu0
        %v1307 = vadd.f32 0.0, %v1306
        %1308 = vdwg.mxu0
        %1309 = vmatprep.subr.mxu0 0.0
        %1310 = vmatpush1.msra.mxu0 %v1192
        %1311 = vmatprep.subr.mxu0 0.0
        %1312 = vmatpush1.msra.mxu0 %v1195
        %1313 = vmatprep.subr.mxu0 0.0
        %1314 = vmatpush1.msra.mxu0 %v1198
        %1315 = vmatprep.subr.mxu0 0.0
        %1316 = vmatpush1.msra.mxu0 %v1201
        %1317 = vmatprep.subr.mxu0 0.0
        %1318 = vmatpush1.msra.mxu0 %v1204
        %1319 = vmatprep.subr.mxu0 0.0
        %1320 = vmatpush1.msra.mxu0 %v1207
        %1321 = vmatprep.subr.mxu0 0.0
        %1322 = vmatpush1.msra.mxu0 %v1210
        %1323 = vmatprep.subr.mxu0 0.0
        %1324 = vmatpush1.msra.mxu0 %v1213
        %1325 = vmatprep.subr.mxu0 0.0
        %1326 = vmatpush1.msra.mxu0 %v1216
        %1327 = vmatprep.subr.mxu0 0.0
        %1328 = vmatpush1.msra.mxu0 %v1219
        %1329 = vmatprep.subr.mxu0 0.0
        %1330 = vmatpush1.msra.mxu0 %v1222
        %1331 = vmatprep.subr.mxu0 0.0
        %1332 = vmatpush1.msra.mxu0 %v1225
        %1333 = vmatprep.subr.mxu0 0.0
        %1334 = vmatpush1.msra.mxu0 %v1228
        %1335 = vmatprep.subr.mxu0 0.0
        %1336 = vmatpush1.msra.mxu0 %v1231
        %1337 = vmatprep.subr.mxu0 0.0
        %1338 = vmatpush1.msra.mxu0 %v1234
        %1339 = vmatprep.subr.mxu0 0.0
        %1340 = vmatpush1.msra.mxu0 %v1237
        %1341 = vmatprep.subr.mxu0 0.0
        %1342 = vmatpush1.msra.mxu0 0.0
        %1343 = vmatprep.subr.mxu0 0.0
        %1344 = vmatpush1.msra.mxu0 0.0
        %1345 = vmatprep.subr.mxu0 0.0
        %1346 = vmatpush1.msra.mxu0 0.0
        %1347 = vmatprep.subr.mxu0 0.0
        %1348 = vmatpush1.msra.mxu0 0.0
        %1349 = vmatprep.subr.mxu0 0.0
        %1350 = vmatpush1.msra.mxu0 0.0
        %1351 = vmatprep.subr.mxu0 0.0
        %1352 = vmatpush1.msra.mxu0 0.0
        %1353 = vmatprep.subr.mxu0 0.0
        %1354 = vmatpush1.msra.mxu0 0.0
        %1355 = vmatprep.subr.mxu0 0.0
        %1356 = vmatpush1.msra.mxu0 0.0
        %1357 = vmatprep.subr.mxu0 0.0
        %1358 = vmatpush1.msra.mxu0 0.0
        %1359 = vmatprep.subr.mxu0 0.0
        %1360 = vmatpush1.msra.mxu0 0.0
        %1361 = vmatprep.subr.mxu0 0.0
        %1362 = vmatpush1.msra.mxu0 0.0
        %1363 = vmatprep.subr.mxu0 0.0
        %1364 = vmatpush1.msra.mxu0 0.0
        %1365 = vmatprep.subr.mxu0 0.0
        %1366 = vmatpush1.msra.mxu0 0.0
        %1367 = vmatprep.subr.mxu0 0.0
        %1368 = vmatpush1.msra.mxu0 0.0
        %1369 = vmatprep.subr.mxu0 0.0
        %1370 = vmatpush1.msra.mxu0 0.0
        %1371 = vmatprep.subr.mxu0 0.0
        %1372 = vmatpush1.msra.mxu0 0.0
        %1373 = vmatprep.mubr.f32.mxu0 0.0
        %1374 = vmatmul.mubr.f32.gmra.mrb[0].mxu0 %v1183
        %v1375 = vpop.f32.mrb[0].mxu0
        %v1376 = vadd.f32 0.0, %v1375
        %v1377 = vpop.f32.mrb[0].mxu0
        %1378 = vdwg.mxu0
        %v1379 = vadd.f32 %v1187, %v1305
        %v1380 = vxor.u32 %v1379, 2147483648
        %v1381 = vmul.f32 %v1380, 1.442695
        %v1382 = vpow.pop %v1381
        %v1383 = vadd.f32 %v1382, 1.0
        %v1384 = vrcp.pop %v1383
        %v1385 = vmul.f32 1.0, %v1384
        %v1386 = vadd.f32 %v1188, %v1307
        %v1387 = vxor.u32 %v1386, 2147483648
        %v1388 = vmul.f32 %v1387, 1.442695
        %v1389 = vpow.pop %v1388
        %v1390 = vadd.f32 %v1389, 1.0
        %v1391 = vrcp.pop %v1390
        %v1392 = vmul.f32 1.0, %v1391
        %v1393 = vadd.f32 %v1376, %v752
        %v1394 = vmul.f32 %v1385, %v1393
        %v1395 = vadd.f32 %v1189, %v1394
        %v1396 = vtanh.pop %v1395
        %v1397 = vsub.f32 1.0, %v1392
        %v1398 = vmul.f32 %v1397, %v1396
        %v1399 = vmul.f32 %v1392, %v1183
        %v1400 = vadd.f32 %v1398, %v1399
        %s1401 = scalar_lea.vmem [#allocation3], 16
        %1402 = vst [vmem:[%s1401] sm:$0xff] %v1400
        %s1403 = scalar_lea.vmem [#allocation2], 72
        %v1404 = vld [vmem:[%s1403] sm:$0xff]
        %v1405 = vld [vmem:[%s1403 + $0x8] sm:$0xff]
        %v1406 = vld [vmem:[%s1403 + $0x10] sm:$0xff]
        %v1407 = vld [vmem:[%s2] sm:$0xff]
        %v1408 = vld [vmem:[%s2 + $0x8] sm:$0xff]
        %v1409 = vld [vmem:[%s2 + $0x10] sm:$0xff]
        %v1410 = vld [vmem:[%s2 + $0x18] sm:$0xff]
        %v1411 = vld [vmem:[%s2 + $0x20] sm:$0xff]
        %v1412 = vld [vmem:[%s2 + $0x28] sm:$0xff]
        %v1413 = vld [vmem:[%s2 + $0x30] sm:$0xff]
        %v1414 = vld [vmem:[%s2 + $0x38] sm:$0xff]
        %v1415 = vld [vmem:[%s2 + $0x40] sm:$0xff]
        %v1416 = vld [vmem:[%s2 + $0x48] sm:$0xff]
        %v1417 = vld [vmem:[%s2 + $0x50] sm:$0xff]
        %v1418 = vld [vmem:[%s2 + $0x58] sm:$0xff]
        %v1419 = vld [vmem:[%s2 + $0x60] sm:$0xff]
        %v1420 = vld [vmem:[%s2 + $0x68] sm:$0xff]
        %v1421 = vld [vmem:[%s2 + $0x70] sm:$0xff]
        %v1422 = vld [vmem:[%s2 + $0x78] sm:$0xff]
        %v1423 = vld [vmem:[%s2 + $0x80] sm:$0xff]
        %v1424 = vld [vmem:[%s2 + $0x88] sm:$0xff]
        %v1425 = vld [vmem:[%s2 + $0x90] sm:$0xff]
        %v1426 = vld [vmem:[%s2 + $0x98] sm:$0xff]
        %v1427 = vld [vmem:[%s2 + $0xa0] sm:$0xff]
        %v1428 = vld [vmem:[%s2 + $0xa8] sm:$0xff]
        %v1429 = vld [vmem:[%s2 + $0xb0] sm:$0xff]
        %v1430 = vld [vmem:[%s2 + $0xb8] sm:$0xff]
        %v1431 = vld [vmem:[%s2 + $0xc0] sm:$0xff]
        %v1432 = vld [vmem:[%s2 + $0xc8] sm:$0xff]
        %v1433 = vld [vmem:[%s2 + $0xd0] sm:$0xff]
        %v1434 = vld [vmem:[%s2 + $0xd8] sm:$0xff]
        %v1435 = vld [vmem:[%s2 + $0xe0] sm:$0xff]
        %v1436 = vld [vmem:[%s2 + $0xe8] sm:$0xff]
        %v1437 = vld [vmem:[%s2 + $0xf0] sm:$0xff]
        %v1438 = vld [vmem:[%s2 + $0xf8] sm:$0xff]
        %v1439 = vld [vmem:[%s2 + $0x100] sm:$0xff]
        %v1440 = vld [vmem:[%s2 + $0x108] sm:$0xff]
        %v1441 = vld [vmem:[%s2 + $0x110] sm:$0xff]
        %v1442 = vld [vmem:[%s2 + $0x118] sm:$0xff]
        %v1443 = vld [vmem:[%s2 + $0x120] sm:$0xff]
        %v1444 = vld [vmem:[%s2 + $0x128] sm:$0xff]
        %v1445 = vld [vmem:[%s2 + $0x130] sm:$0xff]
        %v1446 = vld [vmem:[%s2 + $0x138] sm:$0xff]
        %v1447 = vld [vmem:[%s2 + $0x140] sm:$0xff]
        %v1448 = vld [vmem:[%s2 + $0x148] sm:$0xff]
        %v1449 = vld [vmem:[%s2 + $0x150] sm:$0xff]
        %v1450 = vld [vmem:[%s2 + $0x158] sm:$0xff]
        %v1451 = vld [vmem:[%s2 + $0x160] sm:$0xff]
        %v1452 = vld [vmem:[%s2 + $0x168] sm:$0xff]
        %v1453 = vld [vmem:[%s2 + $0x170] sm:$0xff]
        %v1454 = vld [vmem:[%s2 + $0x178] sm:$0xff]
        %1455 = vmatprep.subr.mxu0 %v1408
        %1456 = vmatpush1.msra.mxu0 %v1407
        %1457 = vmatprep.subr.mxu0 %v1411
        %1458 = vmatpush1.msra.mxu0 %v1410
        %1459 = vmatprep.subr.mxu0 %v1414
        %1460 = vmatpush1.msra.mxu0 %v1413
        %1461 = vmatprep.subr.mxu0 %v1417
        %1462 = vmatpush1.msra.mxu0 %v1416
        %1463 = vmatprep.subr.mxu0 %v1420
        %1464 = vmatpush1.msra.mxu0 %v1419
        %1465 = vmatprep.subr.mxu0 %v1423
        %1466 = vmatpush1.msra.mxu0 %v1422
        %1467 = vmatprep.subr.mxu0 %v1426
        %1468 = vmatpush1.msra.mxu0 %v1425
        %1469 = vmatprep.subr.mxu0 %v1429
        %1470 = vmatpush1.msra.mxu0 %v1428
        %1471 = vmatprep.subr.mxu0 %v1432
        %1472 = vmatpush1.msra.mxu0 %v1431
        %1473 = vmatprep.subr.mxu0 %v1435
        %1474 = vmatpush1.msra.mxu0 %v1434
        %1475 = vmatprep.subr.mxu0 %v1438
        %1476 = vmatpush1.msra.mxu0 %v1437
        %1477 = vmatprep.subr.mxu0 %v1441
        %1478 = vmatpush1.msra.mxu0 %v1440
        %1479 = vmatprep.subr.mxu0 %v1444
        %1480 = vmatpush1.msra.mxu0 %v1443
        %1481 = vmatprep.subr.mxu0 %v1447
        %1482 = vmatpush1.msra.mxu0 %v1446
        %1483 = vmatprep.subr.mxu0 %v1450
        %1484 = vmatpush1.msra.mxu0 %v1449
        %1485 = vmatprep.subr.mxu0 %v1453
        %1486 = vmatpush1.msra.mxu0 %v1452
        %1487 = vmatprep.subr.mxu0 0.0
        %1488 = vmatpush1.msra.mxu0 0.0
        %1489 = vmatprep.subr.mxu0 0.0
        %1490 = vmatpush1.msra.mxu0 0.0
        %1491 = vmatprep.subr.mxu0 0.0
        %1492 = vmatpush1.msra.mxu0 0.0
        %1493 = vmatprep.subr.mxu0 0.0
        %1494 = vmatpush1.msra.mxu0 0.0
        %1495 = vmatprep.subr.mxu0 0.0
        %1496 = vmatpush1.msra.mxu0 0.0
        %1497 = vmatprep.subr.mxu0 0.0
        %1498 = vmatpush1.msra.mxu0 0.0
        %1499 = vmatprep.subr.mxu0 0.0
        %1500 = vmatpush1.msra.mxu0 0.0
        %1501 = vmatprep.subr.mxu0 0.0
        %1502 = vmatpush1.msra.mxu0 0.0
        %1503 = vmatprep.subr.mxu0 0.0
        %1504 = vmatpush1.msra.mxu0 0.0
        %1505 = vmatprep.subr.mxu0 0.0
        %1506 = vmatpush1.msra.mxu0 0.0
        %1507 = vmatprep.subr.mxu0 0.0
        %1508 = vmatpush1.msra.mxu0 0.0
        %1509 = vmatprep.subr.mxu0 0.0
        %1510 = vmatpush1.msra.mxu0 0.0
        %1511 = vmatprep.subr.mxu0 0.0
        %1512 = vmatpush1.msra.mxu0 0.0
        %1513 = vmatprep.subr.mxu0 0.0
        %1514 = vmatpush1.msra.mxu0 0.0
        %1515 = vmatprep.subr.mxu0 0.0
        %1516 = vmatpush1.msra.mxu0 0.0
        %1517 = vmatprep.subr.mxu0 0.0
        %1518 = vmatpush1.msra.mxu0 0.0
        %1519 = vmatprep.mubr.f32.mxu0 0.0
        %1520 = vmatmul.mubr.f32.gmra.mrb[0].mxu0 %v1400
        %v1521 = vpop.f32.mrb[0].mxu0
        %v1522 = vadd.f32 0.0, %v1521
        %v1523 = vpop.f32.mrb[0].mxu0
        %v1524 = vadd.f32 0.0, %v1523
        %1525 = vdwg.mxu0
        %1526 = vmatprep.subr.mxu0 0.0
        %1527 = vmatpush1.msra.mxu0 %v1409
        %1528 = vmatprep.subr.mxu0 0.0
        %1529 = vmatpush1.msra.mxu0 %v1412
        %1530 = vmatprep.subr.mxu0 0.0
        %1531 = vmatpush1.msra.mxu0 %v1415
        %1532 = vmatprep.subr.mxu0 0.0
        %1533 = vmatpush1.msra.mxu0 %v1418
        %1534 = vmatprep.subr.mxu0 0.0
        %1535 = vmatpush1.msra.mxu0 %v1421
        %1536 = vmatprep.subr.mxu0 0.0
        %1537 = vmatpush1.msra.mxu0 %v1424
        %1538 = vmatprep.subr.mxu0 0.0
        %1539 = vmatpush1.msra.mxu0 %v1427
        %1540 = vmatprep.subr.mxu0 0.0
        %1541 = vmatpush1.msra.mxu0 %v1430
        %1542 = vmatprep.subr.mxu0 0.0
        %1543 = vmatpush1.msra.mxu0 %v1433
        %1544 = vmatprep.subr.mxu0 0.0
        %1545 = vmatpush1.msra.mxu0 %v1436
        %1546 = vmatprep.subr.mxu0 0.0
        %1547 = vmatpush1.msra.mxu0 %v1439
        %1548 = vmatprep.subr.mxu0 0.0
        %1549 = vmatpush1.msra.mxu0 %v1442
        %1550 = vmatprep.subr.mxu0 0.0
        %1551 = vmatpush1.msra.mxu0 %v1445
        %1552 = vmatprep.subr.mxu0 0.0
        %1553 = vmatpush1.msra.mxu0 %v1448
        %1554 = vmatprep.subr.mxu0 0.0
        %1555 = vmatpush1.msra.mxu0 %v1451
        %1556 = vmatprep.subr.mxu0 0.0
        %1557 = vmatpush1.msra.mxu0 %v1454
        %1558 = vmatprep.subr.mxu0 0.0
        %1559 = vmatpush1.msra.mxu0 0.0
        %1560 = vmatprep.subr.mxu0 0.0
        %1561 = vmatpush1.msra.mxu0 0.0
        %1562 = vmatprep.subr.mxu0 0.0
        %1563 = vmatpush1.msra.mxu0 0.0
        %1564 = vmatprep.subr.mxu0 0.0
        %1565 = vmatpush1.msra.mxu0 0.0
        %1566 = vmatprep.subr.mxu0 0.0
        %1567 = vmatpush1.msra.mxu0 0.0
        %1568 = vmatprep.subr.mxu0 0.0
        %1569 = vmatpush1.msra.mxu0 0.0
        %1570 = vmatprep.subr.mxu0 0.0
        %1571 = vmatpush1.msra.mxu0 0.0
        %1572 = vmatprep.subr.mxu0 0.0
        %1573 = vmatpush1.msra.mxu0 0.0
        %1574 = vmatprep.subr.mxu0 0.0
        %1575 = vmatpush1.msra.mxu0 0.0
        %1576 = vmatprep.subr.mxu0 0.0
        %1577 = vmatpush1.msra.mxu0 0.0
        %1578 = vmatprep.subr.mxu0 0.0
        %1579 = vmatpush1.msra.mxu0 0.0
        %1580 = vmatprep.subr.mxu0 0.0
        %1581 = vmatpush1.msra.mxu0 0.0
        %1582 = vmatprep.subr.mxu0 0.0
        %1583 = vmatpush1.msra.mxu0 0.0
        %1584 = vmatprep.subr.mxu0 0.0
        %1585 = vmatpush1.msra.mxu0 0.0
        %1586 = vmatprep.subr.mxu0 0.0
        %1587 = vmatpush1.msra.mxu0 0.0
        %1588 = vmatprep.subr.mxu0 0.0
        %1589 = vmatpush1.msra.mxu0 0.0
        %1590 = vmatprep.mubr.f32.mxu0 0.0
        %1591 = vmatmul.mubr.f32.gmra.mrb[0].mxu0 %v1400
        %v1592 = vpop.f32.mrb[0].mxu0
        %v1593 = vadd.f32 0.0, %v1592
        %v1594 = vpop.f32.mrb[0].mxu0
        %1595 = vdwg.mxu0
        %v1596 = vadd.f32 %v1404, %v1522
        %v1597 = vxor.u32 %v1596, 2147483648
        %v1598 = vmul.f32 %v1597, 1.442695
        %v1599 = vpow.pop %v1598
        %v1600 = vadd.f32 %v1599, 1.0
        %v1601 = vrcp.pop %v1600
        %v1602 = vmul.f32 1.0, %v1601
        %v1603 = vadd.f32 %v1405, %v1524
        %v1604 = vxor.u32 %v1603, 2147483648
        %v1605 = vmul.f32 %v1604, 1.442695
        %v1606 = vpow.pop %v1605
        %v1607 = vadd.f32 %v1606, 1.0
        %v1608 = vrcp.pop %v1607
        %v1609 = vmul.f32 1.0, %v1608
        %v1610 = vadd.f32 %v1593, %v752
        %v1611 = vmul.f32 %v1602, %v1610
        %v1612 = vadd.f32 %v1406, %v1611
        %v1613 = vtanh.pop %v1612
        %v1614 = vsub.f32 1.0, %v1609
        %v1615 = vmul.f32 %v1614, %v1613
        %v1616 = vmul.f32 %v1609, %v1400
        %v1617 = vadd.f32 %v1615, %v1616
        %s1618 = scalar_lea.vmem [#allocation3], 24
        %1619 = vst [vmem:[%s1618] sm:$0xff] %v1617
        %s1620 = scalar_lea.vmem [#allocation2], 96
        %v1621 = vld [vmem:[%s1620] sm:$0xff]
        %v1622 = vld [vmem:[%s1620 + $0x8] sm:$0xff]
        %v1623 = vld [vmem:[%s1620 + $0x10] sm:$0xff]
        %v1624 = vld [vmem:[%s2] sm:$0xff]
        %v1625 = vld [vmem:[%s2 + $0x8] sm:$0xff]
        %v1626 = vld [vmem:[%s2 + $0x10] sm:$0xff]
        %v1627 = vld [vmem:[%s2 + $0x18] sm:$0xff]
        %v1628 = vld [vmem:[%s2 + $0x20] sm:$0xff]
        %v1629 = vld [vmem:[%s2 + $0x28] sm:$0xff]
        %v1630 = vld [vmem:[%s2 + $0x30] sm:$0xff]
        %v1631 = vld [vmem:[%s2 + $0x38] sm:$0xff]
        %v1632 = vld [vmem:[%s2 + $0x40] sm:$0xff]
        %v1633 = vld [vmem:[%s2 + $0x48] sm:$0xff]
        %v1634 = vld [vmem:[%s2 + $0x50] sm:$0xff]
        %v1635 = vld [vmem:[%s2 + $0x58] sm:$0xff]
        %v1636 = vld [vmem:[%s2 + $0x60] sm:$0xff]
        %v1637 = vld [vmem:[%s2 + $0x68] sm:$0xff]
        %v1638 = vld [vmem:[%s2 + $0x70] sm:$0xff]
        %v1639 = vld [vmem:[%s2 + $0x78] sm:$0xff]
        %v1640 = vld [vmem:[%s2 + $0x80] sm:$0xff]
        %v1641 = vld [vmem:[%s2 + $0x88] sm:$0xff]
        %v1642 = vld [vmem:[%s2 + $0x90] sm:$0xff]
        %v1643 = vld [vmem:[%s2 + $0x98] sm:$0xff]
        %v1644 = vld [vmem:[%s2 + $0xa0] sm:$0xff]
        %v1645 = vld [vmem:[%s2 + $0xa8] sm:$0xff]
        %v1646 = vld [vmem:[%s2 + $0xb0] sm:$0xff]
        %v1647 = vld [vmem:[%s2 + $0xb8] sm:$0xff]
        %v1648 = vld [vmem:[%s2 + $0xc0] sm:$0xff]
        %v1649 = vld [vmem:[%s2 + $0xc8] sm:$0xff]
        %v1650 = vld [vmem:[%s2 + $0xd0] sm:$0xff]
        %v1651 = vld [vmem:[%s2 + $0xd8] sm:$0xff]
        %v1652 = vld [vmem:[%s2 + $0xe0] sm:$0xff]
        %v1653 = vld [vmem:[%s2 + $0xe8] sm:$0xff]
        %v1654 = vld [vmem:[%s2 + $0xf0] sm:$0xff]
        %v1655 = vld [vmem:[%s2 + $0xf8] sm:$0xff]
        %v1656 = vld [vmem:[%s2 + $0x100] sm:$0xff]
        %v1657 = vld [vmem:[%s2 + $0x108] sm:$0xff]
        %v1658 = vld [vmem:[%s2 + $0x110] sm:$0xff]
        %v1659 = vld [vmem:[%s2 + $0x118] sm:$0xff]
        %v1660 = vld [vmem:[%s2 + $0x120] sm:$0xff]
        %v1661 = vld [vmem:[%s2 + $0x128] sm:$0xff]
        %v1662 = vld [vmem:[%s2 + $0x130] sm:$0xff]
        %v1663 = vld [vmem:[%s2 + $0x138] sm:$0xff]
        %v1664 = vld [vmem:[%s2 + $0x140] sm:$0xff]
        %v1665 = vld [vmem:[%s2 + $0x148] sm:$0xff]
        %v1666 = vld [vmem:[%s2 + $0x150] sm:$0xff]
        %v1667 = vld [vmem:[%s2 + $0x158] sm:$0xff]
        %v1668 = vld [vmem:[%s2 + $0x160] sm:$0xff]
        %v1669 = vld [vmem:[%s2 + $0x168] sm:$0xff]
        %v1670 = vld [vmem:[%s2 + $0x170] sm:$0xff]
        %v1671 = vld [vmem:[%s2 + $0x178] sm:$0xff]
        %1672 = vmatprep.subr.mxu0 %v1625
        %1673 = vmatpush1.msra.mxu0 %v1624
        %1674 = vmatprep.subr.mxu0 %v1628
        %1675 = vmatpush1.msra.mxu0 %v1627
        %1676 = vmatprep.subr.mxu0 %v1631
        %1677 = vmatpush1.msra.mxu0 %v1630
        %1678 = vmatprep.subr.mxu0 %v1634
        %1679 = vmatpush1.msra.mxu0 %v1633
        %1680 = vmatprep.subr.mxu0 %v1637
        %1681 = vmatpush1.msra.mxu0 %v1636
        %1682 = vmatprep.subr.mxu0 %v1640
        %1683 = vmatpush1.msra.mxu0 %v1639
        %1684 = vmatprep.subr.mxu0 %v1643
        %1685 = vmatpush1.msra.mxu0 %v1642
        %1686 = vmatprep.subr.mxu0 %v1646
        %1687 = vmatpush1.msra.mxu0 %v1645
        %1688 = vmatprep.subr.mxu0 %v1649
        %1689 = vmatpush1.msra.mxu0 %v1648
        %1690 = vmatprep.subr.mxu0 %v1652
        %1691 = vmatpush1.msra.mxu0 %v1651
        %1692 = vmatprep.subr.mxu0 %v1655
        %1693 = vmatpush1.msra.mxu0 %v1654
        %1694 = vmatprep.subr.mxu0 %v1658
        %1695 = vmatpush1.msra.mxu0 %v1657
        %1696 = vmatprep.subr.mxu0 %v1661
        %1697 = vmatpush1.msra.mxu0 %v1660
        %1698 = vmatprep.subr.mxu0 %v1664
        %1699 = vmatpush1.msra.mxu0 %v1663
        %1700 = vmatprep.subr.mxu0 %v1667
        %1701 = vmatpush1.msra.mxu0 %v1666
        %1702 = vmatprep.subr.mxu0 %v1670
        %1703 = vmatpush1.msra.mxu0 %v1669
        %1704 = vmatprep.subr.mxu0 0.0
        %1705 = vmatpush1.msra.mxu0 0.0
        %1706 = vmatprep.subr.mxu0 0.0
        %1707 = vmatpush1.msra.mxu0 0.0
        %1708 = vmatprep.subr.mxu0 0.0
        %1709 = vmatpush1.msra.mxu0 0.0
        %1710 = vmatprep.subr.mxu0 0.0
        %1711 = vmatpush1.msra.mxu0 0.0
        %1712 = vmatprep.subr.mxu0 0.0
        %1713 = vmatpush1.msra.mxu0 0.0
        %1714 = vmatprep.subr.mxu0 0.0
        %1715 = vmatpush1.msra.mxu0 0.0
        %1716 = vmatprep.subr.mxu0 0.0
        %1717 = vmatpush1.msra.mxu0 0.0
        %1718 = vmatprep.subr.mxu0 0.0
        %1719 = vmatpush1.msra.mxu0 0.0
        %1720 = vmatprep.subr.mxu0 0.0
        %1721 = vmatpush1.msra.mxu0 0.0
        %1722 = vmatprep.subr.mxu0 0.0
        %1723 = vmatpush1.msra.mxu0 0.0
        %1724 = vmatprep.subr.mxu0 0.0
        %1725 = vmatpush1.msra.mxu0 0.0
        %1726 = vmatprep.subr.mxu0 0.0
        %1727 = vmatpush1.msra.mxu0 0.0
        %1728 = vmatprep.subr.mxu0 0.0
        %1729 = vmatpush1.msra.mxu0 0.0
        %1730 = vmatprep.subr.mxu0 0.0
        %1731 = vmatpush1.msra.mxu0 0.0
        %1732 = vmatprep.subr.mxu0 0.0
        %1733 = vmatpush1.msra.mxu0 0.0
        %1734 = vmatprep.subr.mxu0 0.0
        %1735 = vmatpush1.msra.mxu0 0.0
        %1736 = vmatprep.mubr.f32.mxu0 0.0
        %1737 = vmatmul.mubr.f32.gmra.mrb[0].mxu0 %v1617
        %v1738 = vpop.f32.mrb[0].mxu0
        %v1739 = vadd.f32 0.0, %v1738
        %v1740 = vpop.f32.mrb[0].mxu0
        %v1741 = vadd.f32 0.0, %v1740
        %1742 = vdwg.mxu0
        %1743 = vmatprep.subr.mxu0 0.0
        %1744 = vmatpush1.msra.mxu0 %v1626
        %1745 = vmatprep.subr.mxu0 0.0
        %1746 = vmatpush1.msra.mxu0 %v1629
        %1747 = vmatprep.subr.mxu0 0.0
        %1748 = vmatpush1.msra.mxu0 %v1632
        %1749 = vmatprep.subr.mxu0 0.0
        %1750 = vmatpush1.msra.mxu0 %v1635
        %1751 = vmatprep.subr.mxu0 0.0
        %1752 = vmatpush1.msra.mxu0 %v1638
        %1753 = vmatprep.subr.mxu0 0.0
        %1754 = vmatpush1.msra.mxu0 %v1641
        %1755 = vmatprep.subr.mxu0 0.0
        %1756 = vmatpush1.msra.mxu0 %v1644
        %1757 = vmatprep.subr.mxu0 0.0
        %1758 = vmatpush1.msra.mxu0 %v1647
        %1759 = vmatprep.subr.mxu0 0.0
        %1760 = vmatpush1.msra.mxu0 %v1650
        %1761 = vmatprep.subr.mxu0 0.0
        %1762 = vmatpush1.msra.mxu0 %v1653
        %1763 = vmatprep.subr.mxu0 0.0
        %1764 = vmatpush1.msra.mxu0 %v1656
        %1765 = vmatprep.subr.mxu0 0.0
        %1766 = vmatpush1.msra.mxu0 %v1659
        %1767 = vmatprep.subr.mxu0 0.0
        %1768 = vmatpush1.msra.mxu0 %v1662
        %1769 = vmatprep.subr.mxu0 0.0
        %1770 = vmatpush1.msra.mxu0 %v1665
        %1771 = vmatprep.subr.mxu0 0.0
        %1772 = vmatpush1.msra.mxu0 %v1668
        %1773 = vmatprep.subr.mxu0 0.0
        %1774 = vmatpush1.msra.mxu0 %v1671
        %1775 = vmatprep.subr.mxu0 0.0
        %1776 = vmatpush1.msra.mxu0 0.0
        %1777 = vmatprep.subr.mxu0 0.0
        %1778 = vmatpush1.msra.mxu0 0.0
        %1779 = vmatprep.subr.mxu0 0.0
        %1780 = vmatpush1.msra.mxu0 0.0
        %1781 = vmatprep.subr.mxu0 0.0
        %1782 = vmatpush1.msra.mxu0 0.0
        %1783 = vmatprep.subr.mxu0 0.0
        %1784 = vmatpush1.msra.mxu0 0.0
        %1785 = vmatprep.subr.mxu0 0.0
        %1786 = vmatpush1.msra.mxu0 0.0
        %1787 = vmatprep.subr.mxu0 0.0
        %1788 = vmatpush1.msra.mxu0 0.0
        %1789 = vmatprep.subr.mxu0 0.0
        %1790 = vmatpush1.msra.mxu0 0.0
        %1791 = vmatprep.subr.mxu0 0.0
        %1792 = vmatpush1.msra.mxu0 0.0
        %1793 = vmatprep.subr.mxu0 0.0
        %1794 = vmatpush1.msra.mxu0 0.0
        %1795 = vmatprep.subr.mxu0 0.0
        %1796 = vmatpush1.msra.mxu0 0.0
        %1797 = vmatprep.subr.mxu0 0.0
        %1798 = vmatpush1.msra.mxu0 0.0
        %1799 = vmatprep.subr.mxu0 0.0
        %1800 = vmatpush1.msra.mxu0 0.0
        %1801 = vmatprep.subr.mxu0 0.0
        %1802 = vmatpush1.msra.mxu0 0.0
        %1803 = vmatprep.subr.mxu0 0.0
        %1804 = vmatpush1.msra.mxu0 0.0
        %1805 = vmatprep.subr.mxu0 0.0
        %1806 = vmatpush1.msra.mxu0 0.0
        %1807 = vmatprep.mubr.f32.mxu0 0.0
        %1808 = vmatmul.mubr.f32.gmra.mrb[0].mxu0 %v1617
        %v1809 = vpop.f32.mrb[0].mxu0
        %v1810 = vadd.f32 0.0, %v1809
        %v1811 = vpop.f32.mrb[0].mxu0
        %1812 = vdwg.mxu0
        %v1813 = vadd.f32 %v1621, %v1739
        %v1814 = vxor.u32 %v1813, 2147483648
        %v1815 = vmul.f32 %v1814, 1.442695
        %v1816 = vpow.pop %v1815
        %v1817 = vadd.f32 %v1816, 1.0
        %v1818 = vrcp.pop %v1817
        %v1819 = vmul.f32 1.0, %v1818
        %v1820 = vadd.f32 %v1622, %v1741
        %v1821 = vxor.u32 %v1820, 2147483648
        %v1822 = vmul.f32 %v1821, 1.442695
        %v1823 = vpow.pop %v1822
        %v1824 = vadd.f32 %v1823, 1.0
        %v1825 = vrcp.pop %v1824
        %v1826 = vmul.f32 1.0, %v1825
        %v1827 = vadd.f32 %v1810, %v752
        %v1828 = vmul.f32 %v1819, %v1827
        %v1829 = vadd.f32 %v1623, %v1828
        %v1830 = vtanh.pop %v1829
        %v1831 = vsub.f32 1.0, %v1826
        %v1832 = vmul.f32 %v1831, %v1830
        %v1833 = vmul.f32 %v1826, %v1617
        %v1834 = vadd.f32 %v1832, %v1833
        %s1835 = scalar_lea.vmem [#allocation3], 32
        %1836 = vst [vmem:[%s1835] sm:$0xff] %v1834
        %s1837 = scalar_lea.vmem [#allocation2], 120
        %v1838 = vld [vmem:[%s1837] sm:$0xff]
        %v1839 = vld [vmem:[%s1837 + $0x8] sm:$0xff]
        %v1840 = vld [vmem:[%s1837 + $0x10] sm:$0xff]
        %v1841 = vld [vmem:[%s2] sm:$0xff]
        %v1842 = vld [vmem:[%s2 + $0x8] sm:$0xff]
        %v1843 = vld [vmem:[%s2 + $0x10] sm:$0xff]
        %v1844 = vld [vmem:[%s2 + $0x18] sm:$0xff]
        %v1845 = vld [vmem:[%s2 + $0x20] sm:$0xff]
        %v1846 = vld [vmem:[%s2 + $0x28] sm:$0xff]
        %v1847 = vld [vmem:[%s2 + $0x30] sm:$0xff]
        %v1848 = vld [vmem:[%s2 + $0x38] sm:$0xff]
        %v1849 = vld [vmem:[%s2 + $0x40] sm:$0xff]
        %v1850 = vld [vmem:[%s2 + $0x48] sm:$0xff]
        %v1851 = vld [vmem:[%s2 + $0x50] sm:$0xff]
        %v1852 = vld [vmem:[%s2 + $0x58] sm:$0xff]
        %v1853 = vld [vmem:[%s2 + $0x60] sm:$0xff]
        %v1854 = vld [vmem:[%s2 + $0x68] sm:$0xff]
        %v1855 = vld [vmem:[%s2 + $0x70] sm:$0xff]
        %v1856 = vld [vmem:[%s2 + $0x78] sm:$0xff]
        %v1857 = vld [vmem:[%s2 + $0x80] sm:$0xff]
        %v1858 = vld [vmem:[%s2 + $0x88] sm:$0xff]
        %v1859 = vld [vmem:[%s2 + $0x90] sm:$0xff]
        %v1860 = vld [vmem:[%s2 + $0x98] sm:$0xff]
        %v1861 = vld [vmem:[%s2 + $0xa0] sm:$0xff]
        %v1862 = vld [vmem:[%s2 + $0xa8] sm:$0xff]
        %v1863 = vld [vmem:[%s2 + $0xb0] sm:$0xff]
        %v1864 = vld [vmem:[%s2 + $0xb8] sm:$0xff]
        %v1865 = vld [vmem:[%s2 + $0xc0] sm:$0xff]
        %v1866 = vld [vmem:[%s2 + $0xc8] sm:$0xff]
        %v1867 = vld [vmem:[%s2 + $0xd0] sm:$0xff]
        %v1868 = vld [vmem:[%s2 + $0xd8] sm:$0xff]
        %v1869 = vld [vmem:[%s2 + $0xe0] sm:$0xff]
        %v1870 = vld [vmem:[%s2 + $0xe8] sm:$0xff]
        %v1871 = vld [vmem:[%s2 + $0xf0] sm:$0xff]
        %v1872 = vld [vmem:[%s2 + $0xf8] sm:$0xff]
        %v1873 = vld [vmem:[%s2 + $0x100] sm:$0xff]
        %v1874 = vld [vmem:[%s2 + $0x108] sm:$0xff]
        %v1875 = vld [vmem:[%s2 + $0x110] sm:$0xff]
        %v1876 = vld [vmem:[%s2 + $0x118] sm:$0xff]
        %v1877 = vld [vmem:[%s2 + $0x120] sm:$0xff]
        %v1878 = vld [vmem:[%s2 + $0x128] sm:$0xff]
        %v1879 = vld [vmem:[%s2 + $0x130] sm:$0xff]
        %v1880 = vld [vmem:[%s2 + $0x138] sm:$0xff]
        %v1881 = vld [vmem:[%s2 + $0x140] sm:$0xff]
        %v1882 = vld [vmem:[%s2 + $0x148] sm:$0xff]
        %v1883 = vld [vmem:[%s2 + $0x150] sm:$0xff]
        %v1884 = vld [vmem:[%s2 + $0x158] sm:$0xff]
        %v1885 = vld [vmem:[%s2 + $0x160] sm:$0xff]
        %v1886 = vld [vmem:[%s2 + $0x168] sm:$0xff]
        %v1887 = vld [vmem:[%s2 + $0x170] sm:$0xff]
        %v1888 = vld [vmem:[%s2 + $0x178] sm:$0xff]
        %1889 = vmatprep.subr.mxu0 %v1842
        %1890 = vmatpush1.msra.mxu0 %v1841
        %1891 = vmatprep.subr.mxu0 %v1845
        %1892 = vmatpush1.msra.mxu0 %v1844
        %1893 = vmatprep.subr.mxu0 %v1848
        %1894 = vmatpush1.msra.mxu0 %v1847
        %1895 = vmatprep.subr.mxu0 %v1851
        %1896 = vmatpush1.msra.mxu0 %v1850
        %1897 = vmatprep.subr.mxu0 %v1854
        %1898 = vmatpush1.msra.mxu0 %v1853
        %1899 = vmatprep.subr.mxu0 %v1857
        %1900 = vmatpush1.msra.mxu0 %v1856
        %1901 = vmatprep.subr.mxu0 %v1860
        %1902 = vmatpush1.msra.mxu0 %v1859
        %1903 = vmatprep.subr.mxu0 %v1863
        %1904 = vmatpush1.msra.mxu0 %v1862
        %1905 = vmatprep.subr.mxu0 %v1866
        %1906 = vmatpush1.msra.mxu0 %v1865
        %1907 = vmatprep.subr.mxu0 %v1869
        %1908 = vmatpush1.msra.mxu0 %v1868
        %1909 = vmatprep.subr.mxu0 %v1872
        %1910 = vmatpush1.msra.mxu0 %v1871
        %1911 = vmatprep.subr.mxu0 %v1875
        %1912 = vmatpush1.msra.mxu0 %v1874
        %1913 = vmatprep.subr.mxu0 %v1878
        %1914 = vmatpush1.msra.mxu0 %v1877
        %1915 = vmatprep.subr.mxu0 %v1881
        %1916 = vmatpush1.msra.mxu0 %v1880
        %1917 = vmatprep.subr.mxu0 %v1884
        %1918 = vmatpush1.msra.mxu0 %v1883
        %1919 = vmatprep.subr.mxu0 %v1887
        %1920 = vmatpush1.msra.mxu0 %v1886
        %1921 = vmatprep.subr.mxu0 0.0
        %1922 = vmatpush1.msra.mxu0 0.0
        %1923 = vmatprep.subr.mxu0 0.0
        %1924 = vmatpush1.msra.mxu0 0.0
        %1925 = vmatprep.subr.mxu0 0.0
        %1926 = vmatpush1.msra.mxu0 0.0
        %1927 = vmatprep.subr.mxu0 0.0
        %1928 = vmatpush1.msra.mxu0 0.0
        %1929 = vmatprep.subr.mxu0 0.0
        %1930 = vmatpush1.msra.mxu0 0.0
        %1931 = vmatprep.subr.mxu0 0.0
        %1932 = vmatpush1.msra.mxu0 0.0
        %1933 = vmatprep.subr.mxu0 0.0
        %1934 = vmatpush1.msra.mxu0 0.0
        %1935 = vmatprep.subr.mxu0 0.0
        %1936 = vmatpush1.msra.mxu0 0.0
        %1937 = vmatprep.subr.mxu0 0.0
        %1938 = vmatpush1.msra.mxu0 0.0
        %1939 = vmatprep.subr.mxu0 0.0
        %1940 = vmatpush1.msra.mxu0 0.0
        %1941 = vmatprep.subr.mxu0 0.0
        %1942 = vmatpush1.msra.mxu0 0.0
        %1943 = vmatprep.subr.mxu0 0.0
        %1944 = vmatpush1.msra.mxu0 0.0
        %1945 = vmatprep.subr.mxu0 0.0
        %1946 = vmatpush1.msra.mxu0 0.0
        %1947 = vmatprep.subr.mxu0 0.0
        %1948 = vmatpush1.msra.mxu0 0.0
        %1949 = vmatprep.subr.mxu0 0.0
        %1950 = vmatpush1.msra.mxu0 0.0
        %1951 = vmatprep.subr.mxu0 0.0
        %1952 = vmatpush1.msra.mxu0 0.0
        %1953 = vmatprep.mubr.f32.mxu0 0.0
        %1954 = vmatmul.mubr.f32.gmra.mrb[0].mxu0 %v1834
        %v1955 = vpop.f32.mrb[0].mxu0
        %v1956 = vadd.f32 0.0, %v1955
        %v1957 = vpop.f32.mrb[0].mxu0
        %v1958 = vadd.f32 0.0, %v1957
        %1959 = vdwg.mxu0
        %1960 = vmatprep.subr.mxu0 0.0
        %1961 = vmatpush1.msra.mxu0 %v1843
        %1962 = vmatprep.subr.mxu0 0.0
        %1963 = vmatpush1.msra.mxu0 %v1846
        %1964 = vmatprep.subr.mxu0 0.0
        %1965 = vmatpush1.msra.mxu0 %v1849
        %1966 = vmatprep.subr.mxu0 0.0
        %1967 = vmatpush1.msra.mxu0 %v1852
        %1968 = vmatprep.subr.mxu0 0.0
        %1969 = vmatpush1.msra.mxu0 %v1855
        %1970 = vmatprep.subr.mxu0 0.0
        %1971 = vmatpush1.msra.mxu0 %v1858
        %1972 = vmatprep.subr.mxu0 0.0
        %1973 = vmatpush1.msra.mxu0 %v1861
        %1974 = vmatprep.subr.mxu0 0.0
        %1975 = vmatpush1.msra.mxu0 %v1864
        %1976 = vmatprep.subr.mxu0 0.0
        %1977 = vmatpush1.msra.mxu0 %v1867
        %1978 = vmatprep.subr.mxu0 0.0
        %1979 = vmatpush1.msra.mxu0 %v1870
        %1980 = vmatprep.subr.mxu0 0.0
        %1981 = vmatpush1.msra.mxu0 %v1873
        %1982 = vmatprep.subr.mxu0 0.0
        %1983 = vmatpush1.msra.mxu0 %v1876
        %1984 = vmatprep.subr.mxu0 0.0
        %1985 = vmatpush1.msra.mxu0 %v1879
        %1986 = vmatprep.subr.mxu0 0.0
        %1987 = vmatpush1.msra.mxu0 %v1882
        %1988 = vmatprep.subr.mxu0 0.0
        %1989 = vmatpush1.msra.mxu0 %v1885
        %1990 = vmatprep.subr.mxu0 0.0
        %1991 = vmatpush1.msra.mxu0 %v1888
        %1992 = vmatprep.subr.mxu0 0.0
        %1993 = vmatpush1.msra.mxu0 0.0
        %1994 = vmatprep.subr.mxu0 0.0
        %1995 = vmatpush1.msra.mxu0 0.0
        %1996 = vmatprep.subr.mxu0 0.0
        %1997 = vmatpush1.msra.mxu0 0.0
        %1998 = vmatprep.subr.mxu0 0.0
        %1999 = vmatpush1.msra.mxu0 0.0
        %2000 = vmatprep.subr.mxu0 0.0
        %2001 = vmatpush1.msra.mxu0 0.0
        %2002 = vmatprep.subr.mxu0 0.0
        %2003 = vmatpush1.msra.mxu0 0.0
        %2004 = vmatprep.subr.mxu0 0.0
        %2005 = vmatpush1.msra.mxu0 0.0
        %2006 = vmatprep.subr.mxu0 0.0
        %2007 = vmatpush1.msra.mxu0 0.0
        %2008 = vmatprep.subr.mxu0 0.0
        %2009 = vmatpush1.msra.mxu0 0.0
        %2010 = vmatprep.subr.mxu0 0.0
        %2011 = vmatpush1.msra.mxu0 0.0
        %2012 = vmatprep.subr.mxu0 0.0
        %2013 = vmatpush1.msra.mxu0 0.0
        %2014 = vmatprep.subr.mxu0 0.0
        %2015 = vmatpush1.msra.mxu0 0.0
        %2016 = vmatprep.subr.mxu0 0.0
        %2017 = vmatpush1.msra.mxu0 0.0
        %2018 = vmatprep.subr.mxu0 0.0
        %2019 = vmatpush1.msra.mxu0 0.0
        %2020 = vmatprep.subr.mxu0 0.0
        %2021 = vmatpush1.msra.mxu0 0.0
        %2022 = vmatprep.subr.mxu0 0.0
        %2023 = vmatpush1.msra.mxu0 0.0
        %2024 = vmatprep.mubr.f32.mxu0 0.0
        %2025 = vmatmul.mubr.f32.gmra.mrb[0].mxu0 %v1834
        %v2026 = vpop.f32.mrb[0].mxu0
        %v2027 = vadd.f32 0.0, %v2026
        %v2028 = vpop.f32.mrb[0].mxu0
        %2029 = vdwg.mxu0
        %v2030 = vadd.f32 %v1838, %v1956
        %v2031 = vxor.u32 %v2030, 2147483648
        %v2032 = vmul.f32 %v2031, 1.442695
        %v2033 = vpow.pop %v2032
        %v2034 = vadd.f32 %v2033, 1.0
        %v2035 = vrcp.pop %v2034
        %v2036 = vmul.f32 1.0, %v2035
        %v2037 = vadd.f32 %v1839, %v1958
        %v2038 = vxor.u32 %v2037, 2147483648
        %v2039 = vmul.f32 %v2038, 1.442695
        %v2040 = vpow.pop %v2039
        %v2041 = vadd.f32 %v2040, 1.0
        %v2042 = vrcp.pop %v2041
        %v2043 = vmul.f32 1.0, %v2042
        %v2044 = vadd.f32 %v2027, %v752
        %v2045 = vmul.f32 %v2036, %v2044
        %v2046 = vadd.f32 %v1840, %v2045
        %v2047 = vtanh.pop %v2046
        %v2048 = vsub.f32 1.0, %v2043
        %v2049 = vmul.f32 %v2048, %v2047
        %v2050 = vmul.f32 %v2043, %v1834
        %v2051 = vadd.f32 %v2049, %v2050
        %s2052 = scalar_lea.vmem [#allocation3], 40
        %2053 = vst [vmem:[%s2052] sm:$0xff] %v2051
        %s2054 = scalar_lea.vmem [#allocation2], 144
        %v2055 = vld [vmem:[%s2054] sm:$0xff]
        %v2056 = vld [vmem:[%s2054 + $0x8] sm:$0xff]
        %v2057 = vld [vmem:[%s2054 + $0x10] sm:$0xff]
        %v2058 = vld [vmem:[%s2] sm:$0xff]
        %v2059 = vld [vmem:[%s2 + $0x8] sm:$0xff]
        %v2060 = vld [vmem:[%s2 + $0x10] sm:$0xff]
        %v2061 = vld [vmem:[%s2 + $0x18] sm:$0xff]
        %v2062 = vld [vmem:[%s2 + $0x20] sm:$0xff]
        %v2063 = vld [vmem:[%s2 + $0x28] sm:$0xff]
        %v2064 = vld [vmem:[%s2 + $0x30] sm:$0xff]
        %v2065 = vld [vmem:[%s2 + $0x38] sm:$0xff]
        %v2066 = vld [vmem:[%s2 + $0x40] sm:$0xff]
        %v2067 = vld [vmem:[%s2 + $0x48] sm:$0xff]
        %v2068 = vld [vmem:[%s2 + $0x50] sm:$0xff]
        %v2069 = vld [vmem:[%s2 + $0x58] sm:$0xff]
        %v2070 = vld [vmem:[%s2 + $0x60] sm:$0xff]
        %v2071 = vld [vmem:[%s2 + $0x68] sm:$0xff]
        %v2072 = vld [vmem:[%s2 + $0x70] sm:$0xff]
        %v2073 = vld [vmem:[%s2 + $0x78] sm:$0xff]
        %v2074 = vld [vmem:[%s2 + $0x80] sm:$0xff]
        %v2075 = vld [vmem:[%s2 + $0x88] sm:$0xff]
        %v2076 = vld [vmem:[%s2 + $0x90] sm:$0xff]
        %v2077 = vld [vmem:[%s2 + $0x98] sm:$0xff]
        %v2078 = vld [vmem:[%s2 + $0xa0] sm:$0xff]
        %v2079 = vld [vmem:[%s2 + $0xa8] sm:$0xff]
        %v2080 = vld [vmem:[%s2 + $0xb0] sm:$0xff]
        %v2081 = vld [vmem:[%s2 + $0xb8] sm:$0xff]
        %v2082 = vld [vmem:[%s2 + $0xc0] sm:$0xff]
        %v2083 = vld [vmem:[%s2 + $0xc8] sm:$0xff]
        %v2084 = vld [vmem:[%s2 + $0xd0] sm:$0xff]
        %v2085 = vld [vmem:[%s2 + $0xd8] sm:$0xff]
        %v2086 = vld [vmem:[%s2 + $0xe0] sm:$0xff]
        %v2087 = vld [vmem:[%s2 + $0xe8] sm:$0xff]
        %v2088 = vld [vmem:[%s2 + $0xf0] sm:$0xff]
        %v2089 = vld [vmem:[%s2 + $0xf8] sm:$0xff]
        %v2090 = vld [vmem:[%s2 + $0x100] sm:$0xff]
        %v2091 = vld [vmem:[%s2 + $0x108] sm:$0xff]
        %v2092 = vld [vmem:[%s2 + $0x110] sm:$0xff]
        %v2093 = vld [vmem:[%s2 + $0x118] sm:$0xff]
        %v2094 = vld [vmem:[%s2 + $0x120] sm:$0xff]
        %v2095 = vld [vmem:[%s2 + $0x128] sm:$0xff]
        %v2096 = vld [vmem:[%s2 + $0x130] sm:$0xff]
        %v2097 = vld [vmem:[%s2 + $0x138] sm:$0xff]
        %v2098 = vld [vmem:[%s2 + $0x140] sm:$0xff]
        %v2099 = vld [vmem:[%s2 + $0x148] sm:$0xff]
        %v2100 = vld [vmem:[%s2 + $0x150] sm:$0xff]
        %v2101 = vld [vmem:[%s2 + $0x158] sm:$0xff]
        %v2102 = vld [vmem:[%s2 + $0x160] sm:$0xff]
        %v2103 = vld [vmem:[%s2 + $0x168] sm:$0xff]
        %v2104 = vld [vmem:[%s2 + $0x170] sm:$0xff]
        %v2105 = vld [vmem:[%s2 + $0x178] sm:$0xff]
        %2106 = vmatprep.subr.mxu0 %v2059
        %2107 = vmatpush1.msra.mxu0 %v2058
        %2108 = vmatprep.subr.mxu0 %v2062
        %2109 = vmatpush1.msra.mxu0 %v2061
        %2110 = vmatprep.subr.mxu0 %v2065
        %2111 = vmatpush1.msra.mxu0 %v2064
        %2112 = vmatprep.subr.mxu0 %v2068
        %2113 = vmatpush1.msra.mxu0 %v2067
        %2114 = vmatprep.subr.mxu0 %v2071
        %2115 = vmatpush1.msra.mxu0 %v2070
        %2116 = vmatprep.subr.mxu0 %v2074
        %2117 = vmatpush1.msra.mxu0 %v2073
        %2118 = vmatprep.subr.mxu0 %v2077
        %2119 = vmatpush1.msra.mxu0 %v2076
        %2120 = vmatprep.subr.mxu0 %v2080
        %2121 = vmatpush1.msra.mxu0 %v2079
        %2122 = vmatprep.subr.mxu0 %v2083
        %2123 = vmatpush1.msra.mxu0 %v2082
        %2124 = vmatprep.subr.mxu0 %v2086
        %2125 = vmatpush1.msra.mxu0 %v2085
        %2126 = vmatprep.subr.mxu0 %v2089
        %2127 = vmatpush1.msra.mxu0 %v2088
        %2128 = vmatprep.subr.mxu0 %v2092
        %2129 = vmatpush1.msra.mxu0 %v2091
        %2130 = vmatprep.subr.mxu0 %v2095
        %2131 = vmatpush1.msra.mxu0 %v2094
        %2132 = vmatprep.subr.mxu0 %v2098
        %2133 = vmatpush1.msra.mxu0 %v2097
        %2134 = vmatprep.subr.mxu0 %v2101
        %2135 = vmatpush1.msra.mxu0 %v2100
        %2136 = vmatprep.subr.mxu0 %v2104
        %2137 = vmatpush1.msra.mxu0 %v2103
        %2138 = vmatprep.subr.mxu0 0.0
        %2139 = vmatpush1.msra.mxu0 0.0
        %2140 = vmatprep.subr.mxu0 0.0
        %2141 = vmatpush1.msra.mxu0 0.0
        %2142 = vmatprep.subr.mxu0 0.0
        %2143 = vmatpush1.msra.mxu0 0.0
        %2144 = vmatprep.subr.mxu0 0.0
        %2145 = vmatpush1.msra.mxu0 0.0
        %2146 = vmatprep.subr.mxu0 0.0
        %2147 = vmatpush1.msra.mxu0 0.0
        %2148 = vmatprep.subr.mxu0 0.0
        %2149 = vmatpush1.msra.mxu0 0.0
        %2150 = vmatprep.subr.mxu0 0.0
        %2151 = vmatpush1.msra.mxu0 0.0
        %2152 = vmatprep.subr.mxu0 0.0
        %2153 = vmatpush1.msra.mxu0 0.0
        %2154 = vmatprep.subr.mxu0 0.0
        %2155 = vmatpush1.msra.mxu0 0.0
        %2156 = vmatprep.subr.mxu0 0.0
        %2157 = vmatpush1.msra.mxu0 0.0
        %2158 = vmatprep.subr.mxu0 0.0
        %2159 = vmatpush1.msra.mxu0 0.0
        %2160 = vmatprep.subr.mxu0 0.0
        %2161 = vmatpush1.msra.mxu0 0.0
        %2162 = vmatprep.subr.mxu0 0.0
        %2163 = vmatpush1.msra.mxu0 0.0
        %2164 = vmatprep.subr.mxu0 0.0
        %2165 = vmatpush1.msra.mxu0 0.0
        %2166 = vmatprep.subr.mxu0 0.0
        %2167 = vmatpush1.msra.mxu0 0.0
        %2168 = vmatprep.subr.mxu0 0.0
        %2169 = vmatpush1.msra.mxu0 0.0
        %2170 = vmatprep.mubr.f32.mxu0 0.0
        %2171 = vmatmul.mubr.f32.gmra.mrb[0].mxu0 %v2051
        %v2172 = vpop.f32.mrb[0].mxu0
        %v2173 = vadd.f32 0.0, %v2172
        %v2174 = vpop.f32.mrb[0].mxu0
        %v2175 = vadd.f32 0.0, %v2174
        %2176 = vdwg.mxu0
        %2177 = vmatprep.subr.mxu0 0.0
        %2178 = vmatpush1.msra.mxu0 %v2060
        %2179 = vmatprep.subr.mxu0 0.0
        %2180 = vmatpush1.msra.mxu0 %v2063
        %2181 = vmatprep.subr.mxu0 0.0
        %2182 = vmatpush1.msra.mxu0 %v2066
        %2183 = vmatprep.subr.mxu0 0.0
        %2184 = vmatpush1.msra.mxu0 %v2069
        %2185 = vmatprep.subr.mxu0 0.0
        %2186 = vmatpush1.msra.mxu0 %v2072
        %2187 = vmatprep.subr.mxu0 0.0
        %2188 = vmatpush1.msra.mxu0 %v2075
        %2189 = vmatprep.subr.mxu0 0.0
        %2190 = vmatpush1.msra.mxu0 %v2078
        %2191 = vmatprep.subr.mxu0 0.0
        %2192 = vmatpush1.msra.mxu0 %v2081
        %2193 = vmatprep.subr.mxu0 0.0
        %2194 = vmatpush1.msra.mxu0 %v2084
        %2195 = vmatprep.subr.mxu0 0.0
        %2196 = vmatpush1.msra.mxu0 %v2087
        %2197 = vmatprep.subr.mxu0 0.0
        %2198 = vmatpush1.msra.mxu0 %v2090
        %2199 = vmatprep.subr.mxu0 0.0
        %2200 = vmatpush1.msra.mxu0 %v2093
        %2201 = vmatprep.subr.mxu0 0.0
        %2202 = vmatpush1.msra.mxu0 %v2096
        %2203 = vmatprep.subr.mxu0 0.0
        %2204 = vmatpush1.msra.mxu0 %v2099
        %2205 = vmatprep.subr.mxu0 0.0
        %2206 = vmatpush1.msra.mxu0 %v2102
        %2207 = vmatprep.subr.mxu0 0.0
        %2208 = vmatpush1.msra.mxu0 %v2105
        %2209 = vmatprep.subr.mxu0 0.0
        %2210 = vmatpush1.msra.mxu0 0.0
        %2211 = vmatprep.subr.mxu0 0.0
        %2212 = vmatpush1.msra.mxu0 0.0
        %2213 = vmatprep.subr.mxu0 0.0
        %2214 = vmatpush1.msra.mxu0 0.0
        %2215 = vmatprep.subr.mxu0 0.0
        %2216 = vmatpush1.msra.mxu0 0.0
        %2217 = vmatprep.subr.mxu0 0.0
        %2218 = vmatpush1.msra.mxu0 0.0
        %2219 = vmatprep.subr.mxu0 0.0
        %2220 = vmatpush1.msra.mxu0 0.0
        %2221 = vmatprep.subr.mxu0 0.0
        %2222 = vmatpush1.msra.mxu0 0.0
        %2223 = vmatprep.subr.mxu0 0.0
        %2224 = vmatpush1.msra.mxu0 0.0
        %2225 = vmatprep.subr.mxu0 0.0
        %2226 = vmatpush1.msra.mxu0 0.0
        %2227 = vmatprep.subr.mxu0 0.0
        %2228 = vmatpush1.msra.mxu0 0.0
        %2229 = vmatprep.subr.mxu0 0.0
        %2230 = vmatpush1.msra.mxu0 0.0
        %2231 = vmatprep.subr.mxu0 0.0
        %2232 = vmatpush1.msra.mxu0 0.0
        %2233 = vmatprep.subr.mxu0 0.0
        %2234 = vmatpush1.msra.mxu0 0.0
        %2235 = vmatprep.subr.mxu0 0.0
        %2236 = vmatpush1.msra.mxu0 0.0
        %2237 = vmatprep.subr.mxu0 0.0
        %2238 = vmatpush1.msra.mxu0 0.0
        %2239 = vmatprep.subr.mxu0 0.0
        %2240 = vmatpush1.msra.mxu0 0.0
        %2241 = vmatprep.mubr.f32.mxu0 0.0
        %2242 = vmatmul.mubr.f32.gmra.mrb[0].mxu0 %v2051
        %v2243 = vpop.f32.mrb[0].mxu0
        %v2244 = vadd.f32 0.0, %v2243
        %v2245 = vpop.f32.mrb[0].mxu0
        %2246 = vdwg.mxu0
        %v2247 = vadd.f32 %v2055, %v2173
        %v2248 = vxor.u32 %v2247, 2147483648
        %v2249 = vmul.f32 %v2248, 1.442695
        %v2250 = vpow.pop %v2249
        %v2251 = vadd.f32 %v2250, 1.0
        %v2252 = vrcp.pop %v2251
        %v2253 = vmul.f32 1.0, %v2252
        %v2254 = vadd.f32 %v2056, %v2175
        %v2255 = vxor.u32 %v2254, 2147483648
        %v2256 = vmul.f32 %v2255, 1.442695
        %v2257 = vpow.pop %v2256
        %v2258 = vadd.f32 %v2257, 1.0
        %v2259 = vrcp.pop %v2258
        %v2260 = vmul.f32 1.0, %v2259
        %v2261 = vadd.f32 %v2244, %v752
        %v2262 = vmul.f32 %v2253, %v2261
        %v2263 = vadd.f32 %v2057, %v2262
        %v2264 = vtanh.pop %v2263
        %v2265 = vsub.f32 1.0, %v2260
        %v2266 = vmul.f32 %v2265, %v2264
        %v2267 = vmul.f32 %v2260, %v2051
        %v2268 = vadd.f32 %v2266, %v2267
        %s2269 = scalar_lea.vmem [#allocation3], 48
        %2270 = vst [vmem:[%s2269] sm:$0xff] %v2268
        %s2271 = scalar_lea.vmem [#allocation2], 168
        %v2272 = vld [vmem:[%s2271] sm:$0xff]
        %v2273 = vld [vmem:[%s2271 + $0x8] sm:$0xff]
        %v2274 = vld [vmem:[%s2271 + $0x10] sm:$0xff]
        %v2275 = vld [vmem:[%s2] sm:$0xff]
        %v2276 = vld [vmem:[%s2 + $0x8] sm:$0xff]
        %v2277 = vld [vmem:[%s2 + $0x10] sm:$0xff]
        %v2278 = vld [vmem:[%s2 + $0x18] sm:$0xff]
        %v2279 = vld [vmem:[%s2 + $0x20] sm:$0xff]
        %v2280 = vld [vmem:[%s2 + $0x28] sm:$0xff]
        %v2281 = vld [vmem:[%s2 + $0x30] sm:$0xff]
        %v2282 = vld [vmem:[%s2 + $0x38] sm:$0xff]
        %v2283 = vld [vmem:[%s2 + $0x40] sm:$0xff]
        %v2284 = vld [vmem:[%s2 + $0x48] sm:$0xff]
        %v2285 = vld [vmem:[%s2 + $0x50] sm:$0xff]
        %v2286 = vld [vmem:[%s2 + $0x58] sm:$0xff]
        %v2287 = vld [vmem:[%s2 + $0x60] sm:$0xff]
        %v2288 = vld [vmem:[%s2 + $0x68] sm:$0xff]
        %v2289 = vld [vmem:[%s2 + $0x70] sm:$0xff]
        %v2290 = vld [vmem:[%s2 + $0x78] sm:$0xff]
        %v2291 = vld [vmem:[%s2 + $0x80] sm:$0xff]
        %v2292 = vld [vmem:[%s2 + $0x88] sm:$0xff]
        %v2293 = vld [vmem:[%s2 + $0x90] sm:$0xff]
        %v2294 = vld [vmem:[%s2 + $0x98] sm:$0xff]
        %v2295 = vld [vmem:[%s2 + $0xa0] sm:$0xff]
        %v2296 = vld [vmem:[%s2 + $0xa8] sm:$0xff]
        %v2297 = vld [vmem:[%s2 + $0xb0] sm:$0xff]
        %v2298 = vld [vmem:[%s2 + $0xb8] sm:$0xff]
        %v2299 = vld [vmem:[%s2 + $0xc0] sm:$0xff]
        %v2300 = vld [vmem:[%s2 + $0xc8] sm:$0xff]
        %v2301 = vld [vmem:[%s2 + $0xd0] sm:$0xff]
        %v2302 = vld [vmem:[%s2 + $0xd8] sm:$0xff]
        %v2303 = vld [vmem:[%s2 + $0xe0] sm:$0xff]
        %v2304 = vld [vmem:[%s2 + $0xe8] sm:$0xff]
        %v2305 = vld [vmem:[%s2 + $0xf0] sm:$0xff]
        %v2306 = vld [vmem:[%s2 + $0xf8] sm:$0xff]
        %v2307 = vld [vmem:[%s2 + $0x100] sm:$0xff]
        %v2308 = vld [vmem:[%s2 + $0x108] sm:$0xff]
        %v2309 = vld [vmem:[%s2 + $0x110] sm:$0xff]
        %v2310 = vld [vmem:[%s2 + $0x118] sm:$0xff]
        %v2311 = vld [vmem:[%s2 + $0x120] sm:$0xff]
        %v2312 = vld [vmem:[%s2 + $0x128] sm:$0xff]
        %v2313 = vld [vmem:[%s2 + $0x130] sm:$0xff]
        %v2314 = vld [vmem:[%s2 + $0x138] sm:$0xff]
        %v2315 = vld [vmem:[%s2 + $0x140] sm:$0xff]
        %v2316 = vld [vmem:[%s2 + $0x148] sm:$0xff]
        %v2317 = vld [vmem:[%s2 + $0x150] sm:$0xff]
        %v2318 = vld [vmem:[%s2 + $0x158] sm:$0xff]
        %v2319 = vld [vmem:[%s2 + $0x160] sm:$0xff]
        %v2320 = vld [vmem:[%s2 + $0x168] sm:$0xff]
        %v2321 = vld [vmem:[%s2 + $0x170] sm:$0xff]
        %v2322 = vld [vmem:[%s2 + $0x178] sm:$0xff]
        %2323 = vmatprep.subr.mxu0 %v2276
        %2324 = vmatpush1.msra.mxu0 %v2275
        %2325 = vmatprep.subr.mxu0 %v2279
        %2326 = vmatpush1.msra.mxu0 %v2278
        %2327 = vmatprep.subr.mxu0 %v2282
        %2328 = vmatpush1.msra.mxu0 %v2281
        %2329 = vmatprep.subr.mxu0 %v2285
        %2330 = vmatpush1.msra.mxu0 %v2284
        %2331 = vmatprep.subr.mxu0 %v2288
        %2332 = vmatpush1.msra.mxu0 %v2287
        %2333 = vmatprep.subr.mxu0 %v2291
        %2334 = vmatpush1.msra.mxu0 %v2290
        %2335 = vmatprep.subr.mxu0 %v2294
        %2336 = vmatpush1.msra.mxu0 %v2293
        %2337 = vmatprep.subr.mxu0 %v2297
        %2338 = vmatpush1.msra.mxu0 %v2296
        %2339 = vmatprep.subr.mxu0 %v2300
        %2340 = vmatpush1.msra.mxu0 %v2299
        %2341 = vmatprep.subr.mxu0 %v2303
        %2342 = vmatpush1.msra.mxu0 %v2302
        %2343 = vmatprep.subr.mxu0 %v2306
        %2344 = vmatpush1.msra.mxu0 %v2305
        %2345 = vmatprep.subr.mxu0 %v2309
        %2346 = vmatpush1.msra.mxu0 %v2308
        %2347 = vmatprep.subr.mxu0 %v2312
        %2348 = vmatpush1.msra.mxu0 %v2311
        %2349 = vmatprep.subr.mxu0 %v2315
        %2350 = vmatpush1.msra.mxu0 %v2314
        %2351 = vmatprep.subr.mxu0 %v2318
        %2352 = vmatpush1.msra.mxu0 %v2317
        %2353 = vmatprep.subr.mxu0 %v2321
        %2354 = vmatpush1.msra.mxu0 %v2320
        %2355 = vmatprep.subr.mxu0 0.0
        %2356 = vmatpush1.msra.mxu0 0.0
        %2357 = vmatprep.subr.mxu0 0.0
        %2358 = vmatpush1.msra.mxu0 0.0
        %2359 = vmatprep.subr.mxu0 0.0
        %2360 = vmatpush1.msra.mxu0 0.0
        %2361 = vmatprep.subr.mxu0 0.0
        %2362 = vmatpush1.msra.mxu0 0.0
        %2363 = vmatprep.subr.mxu0 0.0
        %2364 = vmatpush1.msra.mxu0 0.0
        %2365 = vmatprep.subr.mxu0 0.0
        %2366 = vmatpush1.msra.mxu0 0.0
        %2367 = vmatprep.subr.mxu0 0.0
        %2368 = vmatpush1.msra.mxu0 0.0
        %2369 = vmatprep.subr.mxu0 0.0
        %2370 = vmatpush1.msra.mxu0 0.0
        %2371 = vmatprep.subr.mxu0 0.0
        %2372 = vmatpush1.msra.mxu0 0.0
        %2373 = vmatprep.subr.mxu0 0.0
        %2374 = vmatpush1.msra.mxu0 0.0
        %2375 = vmatprep.subr.mxu0 0.0
        %2376 = vmatpush1.msra.mxu0 0.0
        %2377 = vmatprep.subr.mxu0 0.0
        %2378 = vmatpush1.msra.mxu0 0.0
        %2379 = vmatprep.subr.mxu0 0.0
        %2380 = vmatpush1.msra.mxu0 0.0
        %2381 = vmatprep.subr.mxu0 0.0
        %2382 = vmatpush1.msra.mxu0 0.0
        %2383 = vmatprep.subr.mxu0 0.0
        %2384 = vmatpush1.msra.mxu0 0.0
        %2385 = vmatprep.subr.mxu0 0.0
        %2386 = vmatpush1.msra.mxu0 0.0
        %2387 = vmatprep.mubr.f32.mxu0 0.0
        %2388 = vmatmul.mubr.f32.gmra.mrb[0].mxu0 %v2268
        %v2389 = vpop.f32.mrb[0].mxu0
        %v2390 = vadd.f32 0.0, %v2389
        %v2391 = vpop.f32.mrb[0].mxu0
        %v2392 = vadd.f32 0.0, %v2391
        %2393 = vdwg.mxu0
        %2394 = vmatprep.subr.mxu0 0.0
        %2395 = vmatpush1.msra.mxu0 %v2277
        %2396 = vmatprep.subr.mxu0 0.0
        %2397 = vmatpush1.msra.mxu0 %v2280
        %2398 = vmatprep.subr.mxu0 0.0
        %2399 = vmatpush1.msra.mxu0 %v2283
        %2400 = vmatprep.subr.mxu0 0.0
        %2401 = vmatpush1.msra.mxu0 %v2286
        %2402 = vmatprep.subr.mxu0 0.0
        %2403 = vmatpush1.msra.mxu0 %v2289
        %2404 = vmatprep.subr.mxu0 0.0
        %2405 = vmatpush1.msra.mxu0 %v2292
        %2406 = vmatprep.subr.mxu0 0.0
        %2407 = vmatpush1.msra.mxu0 %v2295
        %2408 = vmatprep.subr.mxu0 0.0
        %2409 = vmatpush1.msra.mxu0 %v2298
        %2410 = vmatprep.subr.mxu0 0.0
        %2411 = vmatpush1.msra.mxu0 %v2301
        %2412 = vmatprep.subr.mxu0 0.0
        %2413 = vmatpush1.msra.mxu0 %v2304
        %2414 = vmatprep.subr.mxu0 0.0
        %2415 = vmatpush1.msra.mxu0 %v2307
        %2416 = vmatprep.subr.mxu0 0.0
        %2417 = vmatpush1.msra.mxu0 %v2310
        %2418 = vmatprep.subr.mxu0 0.0
        %2419 = vmatpush1.msra.mxu0 %v2313
        %2420 = vmatprep.subr.mxu0 0.0
        %2421 = vmatpush1.msra.mxu0 %v2316
        %2422 = vmatprep.subr.mxu0 0.0
        %2423 = vmatpush1.msra.mxu0 %v2319
        %2424 = vmatprep.subr.mxu0 0.0
        %2425 = vmatpush1.msra.mxu0 %v2322
        %2426 = vmatprep.subr.mxu0 0.0
        %2427 = vmatpush1.msra.mxu0 0.0
        %2428 = vmatprep.subr.mxu0 0.0
        %2429 = vmatpush1.msra.mxu0 0.0
        %2430 = vmatprep.subr.mxu0 0.0
        %2431 = vmatpush1.msra.mxu0 0.0
        %2432 = vmatprep.subr.mxu0 0.0
        %2433 = vmatpush1.msra.mxu0 0.0
        %2434 = vmatprep.subr.mxu0 0.0
        %2435 = vmatpush1.msra.mxu0 0.0
        %2436 = vmatprep.subr.mxu0 0.0
        %2437 = vmatpush1.msra.mxu0 0.0
        %2438 = vmatprep.subr.mxu0 0.0
        %2439 = vmatpush1.msra.mxu0 0.0
        %2440 = vmatprep.subr.mxu0 0.0
        %2441 = vmatpush1.msra.mxu0 0.0
        %2442 = vmatprep.subr.mxu0 0.0
        %2443 = vmatpush1.msra.mxu0 0.0
        %2444 = vmatprep.subr.mxu0 0.0
        %2445 = vmatpush1.msra.mxu0 0.0
        %2446 = vmatprep.subr.mxu0 0.0
        %2447 = vmatpush1.msra.mxu0 0.0
        %2448 = vmatprep.subr.mxu0 0.0
        %2449 = vmatpush1.msra.mxu0 0.0
        %2450 = vmatprep.subr.mxu0 0.0
        %2451 = vmatpush1.msra.mxu0 0.0
        %2452 = vmatprep.subr.mxu0 0.0
        %2453 = vmatpush1.msra.mxu0 0.0
        %2454 = vmatprep.subr.mxu0 0.0
        %2455 = vmatpush1.msra.mxu0 0.0
        %2456 = vmatprep.subr.mxu0 0.0
        %2457 = vmatpush1.msra.mxu0 0.0
        %2458 = vmatprep.mubr.f32.mxu0 0.0
        %2459 = vmatmul.mubr.f32.gmra.mrb[0].mxu0 %v2268
        %v2460 = vpop.f32.mrb[0].mxu0
        %v2461 = vadd.f32 0.0, %v2460
        %v2462 = vpop.f32.mrb[0].mxu0
        %2463 = vdwg.mxu0
        %v2464 = vadd.f32 %v2272, %v2390
        %v2465 = vxor.u32 %v2464, 2147483648
        %v2466 = vmul.f32 %v2465, 1.442695
        %v2467 = vpow.pop %v2466
        %v2468 = vadd.f32 %v2467, 1.0
        %v2469 = vrcp.pop %v2468
        %v2470 = vmul.f32 1.0, %v2469
        %v2471 = vadd.f32 %v2273, %v2392
        %v2472 = vxor.u32 %v2471, 2147483648
        %v2473 = vmul.f32 %v2472, 1.442695
        %v2474 = vpow.pop %v2473
        %v2475 = vadd.f32 %v2474, 1.0
        %v2476 = vrcp.pop %v2475
        %v2477 = vmul.f32 1.0, %v2476
        %v2478 = vadd.f32 %v2461, %v752
        %v2479 = vmul.f32 %v2470, %v2478
        %v2480 = vadd.f32 %v2274, %v2479
        %v2481 = vtanh.pop %v2480
        %v2482 = vsub.f32 1.0, %v2477
        %v2483 = vmul.f32 %v2482, %v2481
        %v2484 = vmul.f32 %v2477, %v2268
        %v2485 = vadd.f32 %v2483, %v2484
        %s2486 = scalar_lea.vmem [#allocation3], 56
        %2487 = vst [vmem:[%s2486] sm:$0xff] %v2485
        %v2488 = vld [vmem:[%s5] sm:$0xff]
        %v2489 = vld [vmem:[%s5 + $0x8] sm:$0xff]
        %v2490 = vld [vmem:[%s5 + $0x10] sm:$0xff]
        %v2491 = vld [vmem:[%s5 + $0x18] sm:$0xff]
        %v2492 = vld [vmem:[%s5 + $0x20] sm:$0xff]
        %v2493 = vld [vmem:[%s5 + $0x28] sm:$0xff]
        %v2494 = vld [vmem:[%s5 + $0x30] sm:$0xff]
        %v2495 = vld [vmem:[%s5 + $0x38] sm:$0xff]
        %v2496 = vld [vmem:[%s5 + $0x40] sm:$0xff]
        %v2497 = vld [vmem:[%s5 + $0x48] sm:$0xff]
        %v2498 = vld [vmem:[%s5 + $0x50] sm:$0xff]
        %v2499 = vld [vmem:[%s5 + $0x58] sm:$0xff]
        %v2500 = vld [vmem:[%s5 + $0x60] sm:$0xff]
        %v2501 = vld [vmem:[%s5 + $0x68] sm:$0xff]
        %v2502 = vld [vmem:[%s5 + $0x70] sm:$0xff]
        %v2503 = vld [vmem:[%s5 + $0x78] sm:$0xff]
        %v2504 = vld [vmem:[%s5 + $0x80] sm:$0xff]
        %v2505 = vld [vmem:[%s5 + $0x88] sm:$0xff]
        %v2506 = vld [vmem:[%s5 + $0x90] sm:$0xff]
        %v2507 = vld [vmem:[%s5 + $0x98] sm:$0xff]
        %v2508 = vld [vmem:[%s5 + $0xa0] sm:$0xff]
        %v2509 = vld [vmem:[%s5 + $0xa8] sm:$0xff]
        %v2510 = vld [vmem:[%s5 + $0xb0] sm:$0xff]
        %v2511 = vld [vmem:[%s5 + $0xb8] sm:$0xff]
        %v2512 = vld [vmem:[%s5 + $0xc0] sm:$0xff]
        %v2513 = vld [vmem:[%s5 + $0xc8] sm:$0xff]
        %v2514 = vld [vmem:[%s5 + $0xd0] sm:$0xff]
        %v2515 = vld [vmem:[%s5 + $0xd8] sm:$0xff]
        %v2516 = vld [vmem:[%s5 + $0xe0] sm:$0xff]
        %v2517 = vld [vmem:[%s5 + $0xe8] sm:$0xff]
        %v2518 = vld [vmem:[%s5 + $0xf0] sm:$0xff]
        %v2519 = vld [vmem:[%s5 + $0xf8] sm:$0xff]
        %v2520 = vld [vmem:[%s5 + $0x100] sm:$0xff]
        %v2521 = vld [vmem:[%s5 + $0x108] sm:$0xff]
        %v2522 = vld [vmem:[%s5 + $0x110] sm:$0xff]
        %v2523 = vld [vmem:[%s5 + $0x118] sm:$0xff]
        %v2524 = vld [vmem:[%s5 + $0x120] sm:$0xff]
        %v2525 = vld [vmem:[%s5 + $0x128] sm:$0xff]
        %v2526 = vld [vmem:[%s5 + $0x130] sm:$0xff]
        %v2527 = vld [vmem:[%s5 + $0x138] sm:$0xff]
        %v2528 = vld [vmem:[%s5 + $0x140] sm:$0xff]
        %v2529 = vld [vmem:[%s5 + $0x148] sm:$0xff]
        %v2530 = vld [vmem:[%s5 + $0x150] sm:$0xff]
        %v2531 = vld [vmem:[%s5 + $0x158] sm:$0xff]
        %v2532 = vld [vmem:[%s5 + $0x160] sm:$0xff]
        %v2533 = vld [vmem:[%s5 + $0x168] sm:$0xff]
        %v2534 = vld [vmem:[%s5 + $0x170] sm:$0xff]
        %v2535 = vld [vmem:[%s5 + $0x178] sm:$0xff]
        %v2536 = vld [vmem:[#allocation3] sm:$0xff]
        %v2537 = vld [vmem:[#allocation3 + $0x8] sm:$0xff]
        %v2538 = vld [vmem:[#allocation3 + $0x10] sm:$0xff]
        %v2539 = vld [vmem:[#allocation3 + $0x18] sm:$0xff]
        %v2540 = vld [vmem:[#allocation3 + $0x20] sm:$0xff]
        %v2541 = vld [vmem:[#allocation3 + $0x28] sm:$0xff]
        %v2542 = vld [vmem:[#allocation3 + $0x30] sm:$0xff]
        %v2543 = vld [vmem:[#allocation3 + $0x38] sm:$0xff]
        %v2544 = vld [vmem:[%s7] sm:$0x7]
        %v2546 = vlaneseq
        %v2547 = vshrl.u32 %v2546, 7
        %v2548 = vsub.s32 0, %v2547
        %v2549 = vrot.slane %v2544, %v2548
        %v2550 = vlaneseq
        %v2551 = vshrl.u32 %v2550, 7
        %v2552 = vsub.s32 1, %v2551
        %v2553 = vrot.slane %v2544, %v2552
        %v2554 = vlaneseq
        %v2555 = vshrl.u32 %v2554, 7
        %v2556 = vsub.s32 2, %v2555
        %v2557 = vrot.slane %v2544, %v2556
        %2561 = vmatprep.subr.mxu0 %v2489
        %2562 = vmatpush1.msra.mxu0 %v2488
        %2563 = vmatprep.subr.mxu0 %v2492
        %2564 = vmatpush1.msra.mxu0 %v2491
        %2565 = vmatprep.subr.mxu0 %v2495
        %2566 = vmatpush1.msra.mxu0 %v2494
        %2567 = vmatprep.subr.mxu0 %v2498
        %2568 = vmatpush1.msra.mxu0 %v2497
        %2569 = vmatprep.subr.mxu0 %v2501
        %2570 = vmatpush1.msra.mxu0 %v2500
        %2571 = vmatprep.subr.mxu0 %v2504
        %2572 = vmatpush1.msra.mxu0 %v2503
        %2573 = vmatprep.subr.mxu0 %v2507
        %2574 = vmatpush1.msra.mxu0 %v2506
        %2575 = vmatprep.subr.mxu0 %v2510
        %2576 = vmatpush1.msra.mxu0 %v2509
        %2577 = vmatprep.subr.mxu0 %v2513
        %2578 = vmatpush1.msra.mxu0 %v2512
        %2579 = vmatprep.subr.mxu0 %v2516
        %2580 = vmatpush1.msra.mxu0 %v2515
        %2581 = vmatprep.subr.mxu0 %v2519
        %2582 = vmatpush1.msra.mxu0 %v2518
        %2583 = vmatprep.subr.mxu0 %v2522
        %2584 = vmatpush1.msra.mxu0 %v2521
        %2585 = vmatprep.subr.mxu0 %v2525
        %2586 = vmatpush1.msra.mxu0 %v2524
        %2587 = vmatprep.subr.mxu0 %v2528
        %2588 = vmatpush1.msra.mxu0 %v2527
        %2589 = vmatprep.subr.mxu0 %v2531
        %2590 = vmatpush1.msra.mxu0 %v2530
        %2591 = vmatprep.subr.mxu0 %v2534
        %2592 = vmatpush1.msra.mxu0 %v2533
        %2593 = vmatprep.subr.mxu0 0.0
        %2594 = vmatpush1.msra.mxu0 0.0
        %2595 = vmatprep.subr.mxu0 0.0
        %2596 = vmatpush1.msra.mxu0 0.0
        %2597 = vmatprep.subr.mxu0 0.0
        %2598 = vmatpush1.msra.mxu0 0.0
        %2599 = vmatprep.subr.mxu0 0.0
        %2600 = vmatpush1.msra.mxu0 0.0
        %2601 = vmatprep.subr.mxu0 0.0
        %2602 = vmatpush1.msra.mxu0 0.0
        %2603 = vmatprep.subr.mxu0 0.0
        %2604 = vmatpush1.msra.mxu0 0.0
        %2605 = vmatprep.subr.mxu0 0.0
        %2606 = vmatpush1.msra.mxu0 0.0
        %2607 = vmatprep.subr.mxu0 0.0
        %2608 = vmatpush1.msra.mxu0 0.0
        %2609 = vmatprep.subr.mxu0 0.0
        %2610 = vmatpush1.msra.mxu0 0.0
        %2611 = vmatprep.subr.mxu0 0.0
        %2612 = vmatpush1.msra.mxu0 0.0
        %2613 = vmatprep.subr.mxu0 0.0
        %2614 = vmatpush1.msra.mxu0 0.0
        %2615 = vmatprep.subr.mxu0 0.0
        %2616 = vmatpush1.msra.mxu0 0.0
        %2617 = vmatprep.subr.mxu0 0.0
        %2618 = vmatpush1.msra.mxu0 0.0
        %2619 = vmatprep.subr.mxu0 0.0
        %2620 = vmatpush1.msra.mxu0 0.0
        %2621 = vmatprep.subr.mxu0 0.0
        %2622 = vmatpush1.msra.mxu0 0.0
        %2623 = vmatprep.subr.mxu0 0.0
        %2624 = vmatpush1.msra.mxu0 0.0
        %2625 = vmatprep.mubr.f32.mxu0 0.0
        %2626 = vmatmul.mubr.f32.gmra.mrb[0].mxu0 %v2536
        %v2627 = vpop.f32.mrb[0].mxu0
        %v2628 = vadd.f32 %v2549, %v2627
        %v2629 = vpop.f32.mrb[0].mxu0
        %v2630 = vadd.f32 %v2553, %v2629
        %2631 = vmatprep.mubr.f32.mxu0 0.0
        %2632 = vmatmul.mubr.f32.gmra.mrb[0].mxu0 %v2537
        %v2633 = vpop.f32.mrb[0].mxu0
        %v2634 = vadd.f32 %v2549, %v2633
        %v2635 = vpop.f32.mrb[0].mxu0
        %v2636 = vadd.f32 %v2553, %v2635
        %2637 = vmatprep.mubr.f32.mxu0 0.0
        %2638 = vmatmul.mubr.f32.gmra.mrb[0].mxu0 %v2538
        %v2639 = vpop.f32.mrb[0].mxu0
        %v2640 = vadd.f32 %v2549, %v2639
        %v2641 = vpop.f32.mrb[0].mxu0
        %v2642 = vadd.f32 %v2553, %v2641
        %2643 = vmatprep.mubr.f32.mxu0 0.0
        %2644 = vmatmul.mubr.f32.gmra.mrb[0].mxu0 %v2539
        %v2645 = vpop.f32.mrb[0].mxu0
        %v2646 = vadd.f32 %v2549, %v2645
        %v2647 = vpop.f32.mrb[0].mxu0
        %v2648 = vadd.f32 %v2553, %v2647
        %2649 = vmatprep.mubr.f32.mxu0 0.0
        %2650 = vmatmul.mubr.f32.gmra.mrb[0].mxu0 %v2540
        %v2651 = vpop.f32.mrb[0].mxu0
        %v2652 = vadd.f32 %v2549, %v2651
        %v2653 = vpop.f32.mrb[0].mxu0
        %v2654 = vadd.f32 %v2553, %v2653
        %2655 = vmatprep.mubr.f32.mxu0 0.0
        %2656 = vmatmul.mubr.f32.gmra.mrb[0].mxu0 %v2541
        %v2657 = vpop.f32.mrb[0].mxu0
        %v2658 = vadd.f32 %v2549, %v2657
        %v2659 = vpop.f32.mrb[0].mxu0
        %v2660 = vadd.f32 %v2553, %v2659
        %2661 = vmatprep.mubr.f32.mxu0 0.0
        %2662 = vmatmul.mubr.f32.gmra.mrb[0].mxu0 %v2542
        %v2663 = vpop.f32.mrb[0].mxu0
        %v2664 = vadd.f32 %v2549, %v2663
        %v2665 = vpop.f32.mrb[0].mxu0
        %v2666 = vadd.f32 %v2553, %v2665
        %2667 = vmatprep.mubr.f32.mxu0 0.0
        %2668 = vmatmul.mubr.f32.gmra.mrb[0].mxu0 %v2543
        %v2669 = vpop.f32.mrb[0].mxu0
        %v2670 = vadd.f32 %v2549, %v2669
        %v2671 = vpop.f32.mrb[0].mxu0
        %v2672 = vadd.f32 %v2553, %v2671
        %2673 = vdwg.mxu0
        %2674 = vmatprep.subr.mxu0 0.0
        %2675 = vmatpush1.msra.mxu0 %v2490
        %2676 = vmatprep.subr.mxu0 0.0
        %2677 = vmatpush1.msra.mxu0 %v2493
        %2678 = vmatprep.subr.mxu0 0.0
        %2679 = vmatpush1.msra.mxu0 %v2496
        %2680 = vmatprep.subr.mxu0 0.0
        %2681 = vmatpush1.msra.mxu0 %v2499
        %2682 = vmatprep.subr.mxu0 0.0
        %2683 = vmatpush1.msra.mxu0 %v2502
        %2684 = vmatprep.subr.mxu0 0.0
        %2685 = vmatpush1.msra.mxu0 %v2505
        %2686 = vmatprep.subr.mxu0 0.0
        %2687 = vmatpush1.msra.mxu0 %v2508
        %2688 = vmatprep.subr.mxu0 0.0
        %2689 = vmatpush1.msra.mxu0 %v2511
        %2690 = vmatprep.subr.mxu0 0.0
        %2691 = vmatpush1.msra.mxu0 %v2514
        %2692 = vmatprep.subr.mxu0 0.0
        %2693 = vmatpush1.msra.mxu0 %v2517
        %2694 = vmatprep.subr.mxu0 0.0
        %2695 = vmatpush1.msra.mxu0 %v2520
        %2696 = vmatprep.subr.mxu0 0.0
        %2697 = vmatpush1.msra.mxu0 %v2523
        %2698 = vmatprep.subr.mxu0 0.0
        %2699 = vmatpush1.msra.mxu0 %v2526
        %2700 = vmatprep.subr.mxu0 0.0
        %2701 = vmatpush1.msra.mxu0 %v2529
        %2702 = vmatprep.subr.mxu0 0.0
        %2703 = vmatpush1.msra.mxu0 %v2532
        %2704 = vmatprep.subr.mxu0 0.0
        %2705 = vmatpush1.msra.mxu0 %v2535
        %2706 = vmatprep.subr.mxu0 0.0
        %2707 = vmatpush1.msra.mxu0 0.0
        %2708 = vmatprep.subr.mxu0 0.0
        %2709 = vmatpush1.msra.mxu0 0.0
        %2710 = vmatprep.subr.mxu0 0.0
        %2711 = vmatpush1.msra.mxu0 0.0
        %2712 = vmatprep.subr.mxu0 0.0
        %2713 = vmatpush1.msra.mxu0 0.0
        %2714 = vmatprep.subr.mxu0 0.0
        %2715 = vmatpush1.msra.mxu0 0.0
        %2716 = vmatprep.subr.mxu0 0.0
        %2717 = vmatpush1.msra.mxu0 0.0
        %2718 = vmatprep.subr.mxu0 0.0
        %2719 = vmatpush1.msra.mxu0 0.0
        %2720 = vmatprep.subr.mxu0 0.0
        %2721 = vmatpush1.msra.mxu0 0.0
        %2722 = vmatprep.subr.mxu0 0.0
        %2723 = vmatpush1.msra.mxu0 0.0
        %2724 = vmatprep.subr.mxu0 0.0
        %2725 = vmatpush1.msra.mxu0 0.0
        %2726 = vmatprep.subr.mxu0 0.0
        %2727 = vmatpush1.msra.mxu0 0.0
        %2728 = vmatprep.subr.mxu0 0.0
        %2729 = vmatpush1.msra.mxu0 0.0
        %2730 = vmatprep.subr.mxu0 0.0
        %2731 = vmatpush1.msra.mxu0 0.0
        %2732 = vmatprep.subr.mxu0 0.0
        %2733 = vmatpush1.msra.mxu0 0.0
        %2734 = vmatprep.subr.mxu0 0.0
        %2735 = vmatpush1.msra.mxu0 0.0
        %2736 = vmatprep.subr.mxu0 0.0
        %2737 = vmatpush1.msra.mxu0 0.0
        %2738 = vmatprep.mubr.f32.mxu0 0.0
        %2739 = vmatmul.mubr.f32.gmra.mrb[0].mxu0 %v2536
        %v2740 = vpop.f32.mrb[0].mxu0
        %v2741 = vadd.f32 %v2557, %v2740
        %v2742 = vpop.f32.mrb[0].mxu0
        %2743 = vmatprep.mubr.f32.mxu0 0.0
        %2744 = vmatmul.mubr.f32.gmra.mrb[0].mxu0 %v2537
        %v2745 = vpop.f32.mrb[0].mxu0
        %v2746 = vadd.f32 %v2557, %v2745
        %v2747 = vpop.f32.mrb[0].mxu0
        %2748 = vmatprep.mubr.f32.mxu0 0.0
        %2749 = vmatmul.mubr.f32.gmra.mrb[0].mxu0 %v2538
        %v2750 = vpop.f32.mrb[0].mxu0
        %v2751 = vadd.f32 %v2557, %v2750
        %v2752 = vpop.f32.mrb[0].mxu0
        %2753 = vmatprep.mubr.f32.mxu0 0.0
        %2754 = vmatmul.mubr.f32.gmra.mrb[0].mxu0 %v2539
        %v2755 = vpop.f32.mrb[0].mxu0
        %v2756 = vadd.f32 %v2557, %v2755
        %v2757 = vpop.f32.mrb[0].mxu0
        %2758 = vmatprep.mubr.f32.mxu0 0.0
        %2759 = vmatmul.mubr.f32.gmra.mrb[0].mxu0 %v2540
        %v2760 = vpop.f32.mrb[0].mxu0
        %v2761 = vadd.f32 %v2557, %v2760
        %v2762 = vpop.f32.mrb[0].mxu0
        %2763 = vmatprep.mubr.f32.mxu0 0.0
        %2764 = vmatmul.mubr.f32.gmra.mrb[0].mxu0 %v2541
        %v2765 = vpop.f32.mrb[0].mxu0
        %v2766 = vadd.f32 %v2557, %v2765
        %v2767 = vpop.f32.mrb[0].mxu0
        %2768 = vmatprep.mubr.f32.mxu0 0.0
        %2769 = vmatmul.mubr.f32.gmra.mrb[0].mxu0 %v2542
        %v2770 = vpop.f32.mrb[0].mxu0
        %v2771 = vadd.f32 %v2557, %v2770
        %v2772 = vpop.f32.mrb[0].mxu0
        %2773 = vmatprep.mubr.f32.mxu0 0.0
        %2774 = vmatmul.mubr.f32.gmra.mrb[0].mxu0 %v2543
        %v2775 = vpop.f32.mrb[0].mxu0
        %v2776 = vadd.f32 %v2557, %v2775
        %v2777 = vpop.f32.mrb[0].mxu0
        %2778 = vdwg.mxu0
        %2779 = vst [vmem:[#allocation2] sm:$0xff] %v2628
        %2780 = vst [vmem:[#allocation2 + $0x8] sm:$0xff] %v2630
        %2781 = vst [vmem:[#allocation2 + $0x10] sm:$0xff] %v2741
        %2782 = vst [vmem:[#allocation2 + $0x18] sm:$0xff] %v2634
        %2783 = vst [vmem:[#allocation2 + $0x20] sm:$0xff] %v2636
        %2784 = vst [vmem:[#allocation2 + $0x28] sm:$0xff] %v2746
        %2785 = vst [vmem:[#allocation2 + $0x30] sm:$0xff] %v2640
        %2786 = vst [vmem:[#allocation2 + $0x38] sm:$0xff] %v2642
        %2787 = vst [vmem:[#allocation2 + $0x40] sm:$0xff] %v2751
        %2788 = vst [vmem:[#allocation2 + $0x48] sm:$0xff] %v2646
        %2789 = vst [vmem:[#allocation2 + $0x50] sm:$0xff] %v2648
        %2790 = vst [vmem:[#allocation2 + $0x58] sm:$0xff] %v2756
        %2791 = vst [vmem:[#allocation2 + $0x60] sm:$0xff] %v2652
        %2792 = vst [vmem:[#allocation2 + $0x68] sm:$0xff] %v2654
        %2793 = vst [vmem:[#allocation2 + $0x70] sm:$0xff] %v2761
        %2794 = vst [vmem:[#allocation2 + $0x78] sm:$0xff] %v2658
        %2795 = vst [vmem:[#allocation2 + $0x80] sm:$0xff] %v2660
        %2796 = vst [vmem:[#allocation2 + $0x88] sm:$0xff] %v2766
        %2797 = vst [vmem:[#allocation2 + $0x90] sm:$0xff] %v2664
        %2798 = vst [vmem:[#allocation2 + $0x98] sm:$0xff] %v2666
        %2799 = vst [vmem:[#allocation2 + $0xa0] sm:$0xff] %v2771
        %2800 = vst [vmem:[#allocation2 + $0xa8] sm:$0xff] %v2670
        %2801 = vst [vmem:[#allocation2 + $0xb0] sm:$0xff] %v2672
        %2802 = vst [vmem:[#allocation2 + $0xb8] sm:$0xff] %v2776
        %v2803 = vld [vmem:[%s8] sm:$0x1]
        %v2805 = vlaneseq
        %v2806 = vshrl.u32 %v2805, 7
        %v2807 = vsub.s32 0, %v2806
        %v2808 = vrot.slane %v2803, %v2807
        %v2810 = vld [vmem:[#allocation2] sm:$0xff]
        %v2811 = vld [vmem:[#allocation2 + $0x8] sm:$0xff]
        %v2812 = vld [vmem:[#allocation2 + $0x10] sm:$0xff]
        %v2813 = vld [vmem:[%s6] sm:$0xff]
        %v2814 = vld [vmem:[%s6 + $0x8] sm:$0xff]
        %v2815 = vld [vmem:[%s6 + $0x10] sm:$0xff]
        %v2816 = vld [vmem:[%s6 + $0x18] sm:$0xff]
        %v2817 = vld [vmem:[%s6 + $0x20] sm:$0xff]
        %v2818 = vld [vmem:[%s6 + $0x28] sm:$0xff]
        %v2819 = vld [vmem:[%s6 + $0x30] sm:$0xff]
        %v2820 = vld [vmem:[%s6 + $0x38] sm:$0xff]
        %v2821 = vld [vmem:[%s6 + $0x40] sm:$0xff]
        %v2822 = vld [vmem:[%s6 + $0x48] sm:$0xff]
        %v2823 = vld [vmem:[%s6 + $0x50] sm:$0xff]
        %v2824 = vld [vmem:[%s6 + $0x58] sm:$0xff]
        %v2825 = vld [vmem:[%s6 + $0x60] sm:$0xff]
        %v2826 = vld [vmem:[%s6 + $0x68] sm:$0xff]
        %v2827 = vld [vmem:[%s6 + $0x70] sm:$0xff]
        %v2828 = vld [vmem:[%s6 + $0x78] sm:$0xff]
        %v2829 = vld [vmem:[%s6 + $0x80] sm:$0xff]
        %v2830 = vld [vmem:[%s6 + $0x88] sm:$0xff]
        %v2831 = vld [vmem:[%s6 + $0x90] sm:$0xff]
        %v2832 = vld [vmem:[%s6 + $0x98] sm:$0xff]
        %v2833 = vld [vmem:[%s6 + $0xa0] sm:$0xff]
        %v2834 = vld [vmem:[%s6 + $0xa8] sm:$0xff]
        %v2835 = vld [vmem:[%s6 + $0xb0] sm:$0xff]
        %v2836 = vld [vmem:[%s6 + $0xb8] sm:$0xff]
        %v2837 = vld [vmem:[%s6 + $0xc0] sm:$0xff]
        %v2838 = vld [vmem:[%s6 + $0xc8] sm:$0xff]
        %v2839 = vld [vmem:[%s6 + $0xd0] sm:$0xff]
        %v2840 = vld [vmem:[%s6 + $0xd8] sm:$0xff]
        %v2841 = vld [vmem:[%s6 + $0xe0] sm:$0xff]
        %v2842 = vld [vmem:[%s6 + $0xe8] sm:$0xff]
        %v2843 = vld [vmem:[%s6 + $0xf0] sm:$0xff]
        %v2844 = vld [vmem:[%s6 + $0xf8] sm:$0xff]
        %v2845 = vld [vmem:[%s6 + $0x100] sm:$0xff]
        %v2846 = vld [vmem:[%s6 + $0x108] sm:$0xff]
        %v2847 = vld [vmem:[%s6 + $0x110] sm:$0xff]
        %v2848 = vld [vmem:[%s6 + $0x118] sm:$0xff]
        %v2849 = vld [vmem:[%s6 + $0x120] sm:$0xff]
        %v2850 = vld [vmem:[%s6 + $0x128] sm:$0xff]
        %v2851 = vld [vmem:[%s6 + $0x130] sm:$0xff]
        %v2852 = vld [vmem:[%s6 + $0x138] sm:$0xff]
        %v2853 = vld [vmem:[%s6 + $0x140] sm:$0xff]
        %v2854 = vld [vmem:[%s6 + $0x148] sm:$0xff]
        %v2855 = vld [vmem:[%s6 + $0x150] sm:$0xff]
        %v2856 = vld [vmem:[%s6 + $0x158] sm:$0xff]
        %v2857 = vld [vmem:[%s6 + $0x160] sm:$0xff]
        %v2858 = vld [vmem:[%s6 + $0x168] sm:$0xff]
        %v2859 = vld [vmem:[%s6 + $0x170] sm:$0xff]
        %v2860 = vld [vmem:[%s6 + $0x178] sm:$0xff]
        %2861 = vmatprep.subr.mxu0 %v2814
        %2862 = vmatpush1.msra.mxu0 %v2813
        %2863 = vmatprep.subr.mxu0 %v2817
        %2864 = vmatpush1.msra.mxu0 %v2816
        %2865 = vmatprep.subr.mxu0 %v2820
        %2866 = vmatpush1.msra.mxu0 %v2819
        %2867 = vmatprep.subr.mxu0 %v2823
        %2868 = vmatpush1.msra.mxu0 %v2822
        %2869 = vmatprep.subr.mxu0 %v2826
        %2870 = vmatpush1.msra.mxu0 %v2825
        %2871 = vmatprep.subr.mxu0 %v2829
        %2872 = vmatpush1.msra.mxu0 %v2828
        %2873 = vmatprep.subr.mxu0 %v2832
        %2874 = vmatpush1.msra.mxu0 %v2831
        %2875 = vmatprep.subr.mxu0 %v2835
        %2876 = vmatpush1.msra.mxu0 %v2834
        %2877 = vmatprep.subr.mxu0 %v2838
        %2878 = vmatpush1.msra.mxu0 %v2837
        %2879 = vmatprep.subr.mxu0 %v2841
        %2880 = vmatpush1.msra.mxu0 %v2840
        %2881 = vmatprep.subr.mxu0 %v2844
        %2882 = vmatpush1.msra.mxu0 %v2843
        %2883 = vmatprep.subr.mxu0 %v2847
        %2884 = vmatpush1.msra.mxu0 %v2846
        %2885 = vmatprep.subr.mxu0 %v2850
        %2886 = vmatpush1.msra.mxu0 %v2849
        %2887 = vmatprep.subr.mxu0 %v2853
        %2888 = vmatpush1.msra.mxu0 %v2852
        %2889 = vmatprep.subr.mxu0 %v2856
        %2890 = vmatpush1.msra.mxu0 %v2855
        %2891 = vmatprep.subr.mxu0 %v2859
        %2892 = vmatpush1.msra.mxu0 %v2858
        %2893 = vmatprep.subr.mxu0 0.0
        %2894 = vmatpush1.msra.mxu0 0.0
        %2895 = vmatprep.subr.mxu0 0.0
        %2896 = vmatpush1.msra.mxu0 0.0
        %2897 = vmatprep.subr.mxu0 0.0
        %2898 = vmatpush1.msra.mxu0 0.0
        %2899 = vmatprep.subr.mxu0 0.0
        %2900 = vmatpush1.msra.mxu0 0.0
        %2901 = vmatprep.subr.mxu0 0.0
        %2902 = vmatpush1.msra.mxu0 0.0
        %2903 = vmatprep.subr.mxu0 0.0
        %2904 = vmatpush1.msra.mxu0 0.0
        %2905 = vmatprep.subr.mxu0 0.0
        %2906 = vmatpush1.msra.mxu0 0.0
        %2907 = vmatprep.subr.mxu0 0.0
        %2908 = vmatpush1.msra.mxu0 0.0
        %2909 = vmatprep.subr.mxu0 0.0
        %2910 = vmatpush1.msra.mxu0 0.0
        %2911 = vmatprep.subr.mxu0 0.0
        %2912 = vmatpush1.msra.mxu0 0.0
        %2913 = vmatprep.subr.mxu0 0.0
        %2914 = vmatpush1.msra.mxu0 0.0
        %2915 = vmatprep.subr.mxu0 0.0
        %2916 = vmatpush1.msra.mxu0 0.0
        %2917 = vmatprep.subr.mxu0 0.0
        %2918 = vmatpush1.msra.mxu0 0.0
        %2919 = vmatprep.subr.mxu0 0.0
        %2920 = vmatpush1.msra.mxu0 0.0
        %2921 = vmatprep.subr.mxu0 0.0
        %2922 = vmatpush1.msra.mxu0 0.0
        %2923 = vmatprep.subr.mxu0 0.0
        %2924 = vmatpush1.msra.mxu0 0.0
        %2925 = vmatprep.mubr.f32.mxu0 0.0
        %2926 = vmatmul.mubr.f32.gmra.mrb[0].mxu0 0.0
        %v2927 = vpop.f32.mrb[0].mxu0
        %v2928 = vadd.f32 0.0, %v2927
        %v2929 = vpop.f32.mrb[0].mxu0
        %v2930 = vadd.f32 0.0, %v2929
        %2931 = vdwg.mxu0
        %2932 = vmatprep.subr.mxu0 0.0
        %2933 = vmatpush1.msra.mxu0 %v2815
        %2934 = vmatprep.subr.mxu0 0.0
        %2935 = vmatpush1.msra.mxu0 %v2818
        %2936 = vmatprep.subr.mxu0 0.0
        %2937 = vmatpush1.msra.mxu0 %v2821
        %2938 = vmatprep.subr.mxu0 0.0
        %2939 = vmatpush1.msra.mxu0 %v2824
        %2940 = vmatprep.subr.mxu0 0.0
        %2941 = vmatpush1.msra.mxu0 %v2827
        %2942 = vmatprep.subr.mxu0 0.0
        %2943 = vmatpush1.msra.mxu0 %v2830
        %2944 = vmatprep.subr.mxu0 0.0
        %2945 = vmatpush1.msra.mxu0 %v2833
        %2946 = vmatprep.subr.mxu0 0.0
        %2947 = vmatpush1.msra.mxu0 %v2836
        %2948 = vmatprep.subr.mxu0 0.0
        %2949 = vmatpush1.msra.mxu0 %v2839
        %2950 = vmatprep.subr.mxu0 0.0
        %2951 = vmatpush1.msra.mxu0 %v2842
        %2952 = vmatprep.subr.mxu0 0.0
        %2953 = vmatpush1.msra.mxu0 %v2845
        %2954 = vmatprep.subr.mxu0 0.0
        %2955 = vmatpush1.msra.mxu0 %v2848
        %2956 = vmatprep.subr.mxu0 0.0
        %2957 = vmatpush1.msra.mxu0 %v2851
        %2958 = vmatprep.subr.mxu0 0.0
        %2959 = vmatpush1.msra.mxu0 %v2854
        %2960 = vmatprep.subr.mxu0 0.0
        %2961 = vmatpush1.msra.mxu0 %v2857
        %2962 = vmatprep.subr.mxu0 0.0
        %2963 = vmatpush1.msra.mxu0 %v2860
        %2964 = vmatprep.subr.mxu0 0.0
        %2965 = vmatpush1.msra.mxu0 0.0
        %2966 = vmatprep.subr.mxu0 0.0
        %2967 = vmatpush1.msra.mxu0 0.0
        %2968 = vmatprep.subr.mxu0 0.0
        %2969 = vmatpush1.msra.mxu0 0.0
        %2970 = vmatprep.subr.mxu0 0.0
        %2971 = vmatpush1.msra.mxu0 0.0
        %2972 = vmatprep.subr.mxu0 0.0
        %2973 = vmatpush1.msra.mxu0 0.0
        %2974 = vmatprep.subr.mxu0 0.0
        %2975 = vmatpush1.msra.mxu0 0.0
        %2976 = vmatprep.subr.mxu0 0.0
        %2977 = vmatpush1.msra.mxu0 0.0
        %2978 = vmatprep.subr.mxu0 0.0
        %2979 = vmatpush1.msra.mxu0 0.0
        %2980 = vmatprep.subr.mxu0 0.0
        %2981 = vmatpush1.msra.mxu0 0.0
        %2982 = vmatprep.subr.mxu0 0.0
        %2983 = vmatpush1.msra.mxu0 0.0
        %2984 = vmatprep.subr.mxu0 0.0
        %2985 = vmatpush1.msra.mxu0 0.0
        %2986 = vmatprep.subr.mxu0 0.0
        %2987 = vmatpush1.msra.mxu0 0.0
        %2988 = vmatprep.subr.mxu0 0.0
        %2989 = vmatpush1.msra.mxu0 0.0
        %2990 = vmatprep.subr.mxu0 0.0
        %2991 = vmatpush1.msra.mxu0 0.0
        %2992 = vmatprep.subr.mxu0 0.0
        %2993 = vmatpush1.msra.mxu0 0.0
        %2994 = vmatprep.subr.mxu0 0.0
        %2995 = vmatpush1.msra.mxu0 0.0
        %2996 = vmatprep.mubr.f32.mxu0 0.0
        %2997 = vmatmul.mubr.f32.gmra.mrb[0].mxu0 0.0
        %v2998 = vpop.f32.mrb[0].mxu0
        %v2999 = vadd.f32 0.0, %v2998
        %v3000 = vpop.f32.mrb[0].mxu0
        %3001 = vdwg.mxu0
        %v3002 = vadd.f32 %v2810, %v2928
        %v3003 = vxor.u32 %v3002, 2147483648
        %v3004 = vmul.f32 %v3003, 1.442695
        %v3005 = vpow.pop %v3004
        %v3006 = vadd.f32 %v3005, 1.0
        %v3007 = vrcp.pop %v3006
        %v3008 = vmul.f32 1.0, %v3007
        %v3009 = vadd.f32 %v2811, %v2930
        %v3010 = vxor.u32 %v3009, 2147483648
        %v3011 = vmul.f32 %v3010, 1.442695
        %v3012 = vpow.pop %v3011
        %v3013 = vadd.f32 %v3012, 1.0
        %v3014 = vrcp.pop %v3013
        %v3015 = vmul.f32 1.0, %v3014
        %v3016 = vadd.f32 %v2999, %v2808
        %v3017 = vmul.f32 %v3008, %v3016
        %v3018 = vadd.f32 %v2812, %v3017
        %v3019 = vtanh.pop %v3018
        %v3020 = vsub.f32 1.0, %v3015
        %v3021 = vmul.f32 %v3020, %v3019
        %v3022 = vmul.f32 %v3015, 0.0
        %v3023 = vadd.f32 %v3021, %v3022
        %v3024 = vld [vmem:[%s969] sm:$0xff]
        %v3025 = vld [vmem:[%s969 + $0x8] sm:$0xff]
        %v3026 = vld [vmem:[%s969 + $0x10] sm:$0xff]
        %3027 = vmatprep.subr.mxu0 %v2814
        %3028 = vmatpush1.msra.mxu0 %v2813
        %3029 = vmatprep.subr.mxu0 %v2817
        %3030 = vmatpush1.msra.mxu0 %v2816
        %3031 = vmatprep.subr.mxu0 %v2820
        %3032 = vmatpush1.msra.mxu0 %v2819
        %3033 = vmatprep.subr.mxu0 %v2823
        %3034 = vmatpush1.msra.mxu0 %v2822
        %3035 = vmatprep.subr.mxu0 %v2826
        %3036 = vmatpush1.msra.mxu0 %v2825
        %3037 = vmatprep.subr.mxu0 %v2829
        %3038 = vmatpush1.msra.mxu0 %v2828
        %3039 = vmatprep.subr.mxu0 %v2832
        %3040 = vmatpush1.msra.mxu0 %v2831
        %3041 = vmatprep.subr.mxu0 %v2835
        %3042 = vmatpush1.msra.mxu0 %v2834
        %3043 = vmatprep.subr.mxu0 %v2838
        %3044 = vmatpush1.msra.mxu0 %v2837
        %3045 = vmatprep.subr.mxu0 %v2841
        %3046 = vmatpush1.msra.mxu0 %v2840
        %3047 = vmatprep.subr.mxu0 %v2844
        %3048 = vmatpush1.msra.mxu0 %v2843
        %3049 = vmatprep.subr.mxu0 %v2847
        %3050 = vmatpush1.msra.mxu0 %v2846
        %3051 = vmatprep.subr.mxu0 %v2850
        %3052 = vmatpush1.msra.mxu0 %v2849
        %3053 = vmatprep.subr.mxu0 %v2853
        %3054 = vmatpush1.msra.mxu0 %v2852
        %3055 = vmatprep.subr.mxu0 %v2856
        %3056 = vmatpush1.msra.mxu0 %v2855
        %3057 = vmatprep.subr.mxu0 %v2859
        %3058 = vmatpush1.msra.mxu0 %v2858
        %3059 = vmatprep.subr.mxu0 0.0
        %3060 = vmatpush1.msra.mxu0 0.0
        %3061 = vmatprep.subr.mxu0 0.0
        %3062 = vmatpush1.msra.mxu0 0.0
        %3063 = vmatprep.subr.mxu0 0.0
        %3064 = vmatpush1.msra.mxu0 0.0
        %3065 = vmatprep.subr.mxu0 0.0
        %3066 = vmatpush1.msra.mxu0 0.0
        %3067 = vmatprep.subr.mxu0 0.0
        %3068 = vmatpush1.msra.mxu0 0.0
        %3069 = vmatprep.subr.mxu0 0.0
        %3070 = vmatpush1.msra.mxu0 0.0
        %3071 = vmatprep.subr.mxu0 0.0
        %3072 = vmatpush1.msra.mxu0 0.0
        %3073 = vmatprep.subr.mxu0 0.0
        %3074 = vmatpush1.msra.mxu0 0.0
        %3075 = vmatprep.subr.mxu0 0.0
        %3076 = vmatpush1.msra.mxu0 0.0
        %3077 = vmatprep.subr.mxu0 0.0
        %3078 = vmatpush1.msra.mxu0 0.0
        %3079 = vmatprep.subr.mxu0 0.0
        %3080 = vmatpush1.msra.mxu0 0.0
        %3081 = vmatprep.subr.mxu0 0.0
        %3082 = vmatpush1.msra.mxu0 0.0
        %3083 = vmatprep.subr.mxu0 0.0
        %3084 = vmatpush1.msra.mxu0 0.0
        %3085 = vmatprep.subr.mxu0 0.0
        %3086 = vmatpush1.msra.mxu0 0.0
        %3087 = vmatprep.subr.mxu0 0.0
        %3088 = vmatpush1.msra.mxu0 0.0
        %3089 = vmatprep.subr.mxu0 0.0
        %3090 = vmatpush1.msra.mxu0 0.0
        %3091 = vmatprep.mubr.f32.mxu0 0.0
        %3092 = vmatmul.mubr.f32.gmra.mrb[0].mxu0 %v3023
        %v3093 = vpop.f32.mrb[0].mxu0
        %v3094 = vadd.f32 0.0, %v3093
        %v3095 = vpop.f32.mrb[0].mxu0
        %v3096 = vadd.f32 0.0, %v3095
        %3097 = vdwg.mxu0
        %3098 = vmatprep.subr.mxu0 0.0
        %3099 = vmatpush1.msra.mxu0 %v2815
        %3100 = vmatprep.subr.mxu0 0.0
        %3101 = vmatpush1.msra.mxu0 %v2818
        %3102 = vmatprep.subr.mxu0 0.0
        %3103 = vmatpush1.msra.mxu0 %v2821
        %3104 = vmatprep.subr.mxu0 0.0
        %3105 = vmatpush1.msra.mxu0 %v2824
        %3106 = vmatprep.subr.mxu0 0.0
        %3107 = vmatpush1.msra.mxu0 %v2827
        %3108 = vmatprep.subr.mxu0 0.0
        %3109 = vmatpush1.msra.mxu0 %v2830
        %3110 = vmatprep.subr.mxu0 0.0
        %3111 = vmatpush1.msra.mxu0 %v2833
        %3112 = vmatprep.subr.mxu0 0.0
        %3113 = vmatpush1.msra.mxu0 %v2836
        %3114 = vmatprep.subr.mxu0 0.0
        %3115 = vmatpush1.msra.mxu0 %v2839
        %3116 = vmatprep.subr.mxu0 0.0
        %3117 = vmatpush1.msra.mxu0 %v2842
        %3118 = vmatprep.subr.mxu0 0.0
        %3119 = vmatpush1.msra.mxu0 %v2845
        %3120 = vmatprep.subr.mxu0 0.0
        %3121 = vmatpush1.msra.mxu0 %v2848
        %3122 = vmatprep.subr.mxu0 0.0
        %3123 = vmatpush1.msra.mxu0 %v2851
        %3124 = vmatprep.subr.mxu0 0.0
        %3125 = vmatpush1.msra.mxu0 %v2854
        %3126 = vmatprep.subr.mxu0 0.0
        %3127 = vmatpush1.msra.mxu0 %v2857
        %3128 = vmatprep.subr.mxu0 0.0
        %3129 = vmatpush1.msra.mxu0 %v2860
        %3130 = vmatprep.subr.mxu0 0.0
        %3131 = vmatpush1.msra.mxu0 0.0
        %3132 = vmatprep.subr.mxu0 0.0
        %3133 = vmatpush1.msra.mxu0 0.0
        %3134 = vmatprep.subr.mxu0 0.0
        %3135 = vmatpush1.msra.mxu0 0.0
        %3136 = vmatprep.subr.mxu0 0.0
        %3137 = vmatpush1.msra.mxu0 0.0
        %3138 = vmatprep.subr.mxu0 0.0
        %3139 = vmatpush1.msra.mxu0 0.0
        %3140 = vmatprep.subr.mxu0 0.0
        %3141 = vmatpush1.msra.mxu0 0.0
        %3142 = vmatprep.subr.mxu0 0.0
        %3143 = vmatpush1.msra.mxu0 0.0
        %3144 = vmatprep.subr.mxu0 0.0
        %3145 = vmatpush1.msra.mxu0 0.0
        %3146 = vmatprep.subr.mxu0 0.0
        %3147 = vmatpush1.msra.mxu0 0.0
        %3148 = vmatprep.subr.mxu0 0.0
        %3149 = vmatpush1.msra.mxu0 0.0
        %3150 = vmatprep.subr.mxu0 0.0
        %3151 = vmatpush1.msra.mxu0 0.0
        %3152 = vmatprep.subr.mxu0 0.0
        %3153 = vmatpush1.msra.mxu0 0.0
        %3154 = vmatprep.subr.mxu0 0.0
        %3155 = vmatpush1.msra.mxu0 0.0
        %3156 = vmatprep.subr.mxu0 0.0
        %3157 = vmatpush1.msra.mxu0 0.0
        %3158 = vmatprep.subr.mxu0 0.0
        %3159 = vmatpush1.msra.mxu0 0.0
        %3160 = vmatprep.subr.mxu0 0.0
        %3161 = vmatpush1.msra.mxu0 0.0
        %3162 = vmatprep.mubr.f32.mxu0 0.0
        %3163 = vmatmul.mubr.f32.gmra.mrb[0].mxu0 %v3023
        %v3164 = vpop.f32.mrb[0].mxu0
        %v3165 = vadd.f32 0.0, %v3164
        %v3166 = vpop.f32.mrb[0].mxu0
        %3167 = vdwg.mxu0
        %v3168 = vadd.f32 %v3024, %v3094
        %v3169 = vxor.u32 %v3168, 2147483648
        %v3170 = vmul.f32 %v3169, 1.442695
        %v3171 = vpow.pop %v3170
        %v3172 = vadd.f32 %v3171, 1.0
        %v3173 = vrcp.pop %v3172
        %v3174 = vmul.f32 1.0, %v3173
        %v3175 = vadd.f32 %v3025, %v3096
        %v3176 = vxor.u32 %v3175, 2147483648
        %v3177 = vmul.f32 %v3176, 1.442695
        %v3178 = vpow.pop %v3177
        %v3179 = vadd.f32 %v3178, 1.0
        %v3180 = vrcp.pop %v3179
        %v3181 = vmul.f32 1.0, %v3180
        %v3182 = vadd.f32 %v3165, %v2808
        %v3183 = vmul.f32 %v3174, %v3182
        %v3184 = vadd.f32 %v3026, %v3183
        %v3185 = vtanh.pop %v3184
        %v3186 = vsub.f32 1.0, %v3181
        %v3187 = vmul.f32 %v3186, %v3185
        %v3188 = vmul.f32 %v3181, %v3023
        %v3189 = vadd.f32 %v3187, %v3188
        %v3190 = vld [vmem:[%s1186] sm:$0xff]
        %v3191 = vld [vmem:[%s1186 + $0x8] sm:$0xff]
        %v3192 = vld [vmem:[%s1186 + $0x10] sm:$0xff]
        %3193 = vmatprep.subr.mxu0 %v2814
        %3194 = vmatpush1.msra.mxu0 %v2813
        %3195 = vmatprep.subr.mxu0 %v2817
        %3196 = vmatpush1.msra.mxu0 %v2816
        %3197 = vmatprep.subr.mxu0 %v2820
        %3198 = vmatpush1.msra.mxu0 %v2819
        %3199 = vmatprep.subr.mxu0 %v2823
        %3200 = vmatpush1.msra.mxu0 %v2822
        %3201 = vmatprep.subr.mxu0 %v2826
        %3202 = vmatpush1.msra.mxu0 %v2825
        %3203 = vmatprep.subr.mxu0 %v2829
        %3204 = vmatpush1.msra.mxu0 %v2828
        %3205 = vmatprep.subr.mxu0 %v2832
        %3206 = vmatpush1.msra.mxu0 %v2831
        %3207 = vmatprep.subr.mxu0 %v2835
        %3208 = vmatpush1.msra.mxu0 %v2834
        %3209 = vmatprep.subr.mxu0 %v2838
        %3210 = vmatpush1.msra.mxu0 %v2837
        %3211 = vmatprep.subr.mxu0 %v2841
        %3212 = vmatpush1.msra.mxu0 %v2840
        %3213 = vmatprep.subr.mxu0 %v2844
        %3214 = vmatpush1.msra.mxu0 %v2843
        %3215 = vmatprep.subr.mxu0 %v2847
        %3216 = vmatpush1.msra.mxu0 %v2846
        %3217 = vmatprep.subr.mxu0 %v2850
        %3218 = vmatpush1.msra.mxu0 %v2849
        %3219 = vmatprep.subr.mxu0 %v2853
        %3220 = vmatpush1.msra.mxu0 %v2852
        %3221 = vmatprep.subr.mxu0 %v2856
        %3222 = vmatpush1.msra.mxu0 %v2855
        %3223 = vmatprep.subr.mxu0 %v2859
        %3224 = vmatpush1.msra.mxu0 %v2858
        %3225 = vmatprep.subr.mxu0 0.0
        %3226 = vmatpush1.msra.mxu0 0.0
        %3227 = vmatprep.subr.mxu0 0.0
        %3228 = vmatpush1.msra.mxu0 0.0
        %3229 = vmatprep.subr.mxu0 0.0
        %3230 = vmatpush1.msra.mxu0 0.0
        %3231 = vmatprep.subr.mxu0 0.0
        %3232 = vmatpush1.msra.mxu0 0.0
        %3233 = vmatprep.subr.mxu0 0.0
        %3234 = vmatpush1.msra.mxu0 0.0
        %3235 = vmatprep.subr.mxu0 0.0
        %3236 = vmatpush1.msra.mxu0 0.0
        %3237 = vmatprep.subr.mxu0 0.0
        %3238 = vmatpush1.msra.mxu0 0.0
        %3239 = vmatprep.subr.mxu0 0.0
        %3240 = vmatpush1.msra.mxu0 0.0
        %3241 = vmatprep.subr.mxu0 0.0
        %3242 = vmatpush1.msra.mxu0 0.0
        %3243 = vmatprep.subr.mxu0 0.0
        %3244 = vmatpush1.msra.mxu0 0.0
        %3245 = vmatprep.subr.mxu0 0.0
        %3246 = vmatpush1.msra.mxu0 0.0
        %3247 = vmatprep.subr.mxu0 0.0
        %3248 = vmatpush1.msra.mxu0 0.0
        %3249 = vmatprep.subr.mxu0 0.0
        %3250 = vmatpush1.msra.mxu0 0.0
        %3251 = vmatprep.subr.mxu0 0.0
        %3252 = vmatpush1.msra.mxu0 0.0
        %3253 = vmatprep.subr.mxu0 0.0
        %3254 = vmatpush1.msra.mxu0 0.0
        %3255 = vmatprep.subr.mxu0 0.0
        %3256 = vmatpush1.msra.mxu0 0.0
        %3257 = vmatprep.mubr.f32.mxu0 0.0
        %3258 = vmatmul.mubr.f32.gmra.mrb[0].mxu0 %v3189
        %v3259 = vpop.f32.mrb[0].mxu0
        %v3260 = vadd.f32 0.0, %v3259
        %v3261 = vpop.f32.mrb[0].mxu0
        %v3262 = vadd.f32 0.0, %v3261
        %3263 = vdwg.mxu0
        %3264 = vmatprep.subr.mxu0 0.0
        %3265 = vmatpush1.msra.mxu0 %v2815
        %3266 = vmatprep.subr.mxu0 0.0
        %3267 = vmatpush1.msra.mxu0 %v2818
        %3268 = vmatprep.subr.mxu0 0.0
        %3269 = vmatpush1.msra.mxu0 %v2821
        %3270 = vmatprep.subr.mxu0 0.0
        %3271 = vmatpush1.msra.mxu0 %v2824
        %3272 = vmatprep.subr.mxu0 0.0
        %3273 = vmatpush1.msra.mxu0 %v2827
        %3274 = vmatprep.subr.mxu0 0.0
        %3275 = vmatpush1.msra.mxu0 %v2830
        %3276 = vmatprep.subr.mxu0 0.0
        %3277 = vmatpush1.msra.mxu0 %v2833
        %3278 = vmatprep.subr.mxu0 0.0
        %3279 = vmatpush1.msra.mxu0 %v2836
        %3280 = vmatprep.subr.mxu0 0.0
        %3281 = vmatpush1.msra.mxu0 %v2839
        %3282 = vmatprep.subr.mxu0 0.0
        %3283 = vmatpush1.msra.mxu0 %v2842
        %3284 = vmatprep.subr.mxu0 0.0
        %3285 = vmatpush1.msra.mxu0 %v2845
        %3286 = vmatprep.subr.mxu0 0.0
        %3287 = vmatpush1.msra.mxu0 %v2848
        %3288 = vmatprep.subr.mxu0 0.0
        %3289 = vmatpush1.msra.mxu0 %v2851
        %3290 = vmatprep.subr.mxu0 0.0
        %3291 = vmatpush1.msra.mxu0 %v2854
        %3292 = vmatprep.subr.mxu0 0.0
        %3293 = vmatpush1.msra.mxu0 %v2857
        %3294 = vmatprep.subr.mxu0 0.0
        %3295 = vmatpush1.msra.mxu0 %v2860
        %3296 = vmatprep.subr.mxu0 0.0
        %3297 = vmatpush1.msra.mxu0 0.0
        %3298 = vmatprep.subr.mxu0 0.0
        %3299 = vmatpush1.msra.mxu0 0.0
        %3300 = vmatprep.subr.mxu0 0.0
        %3301 = vmatpush1.msra.mxu0 0.0
        %3302 = vmatprep.subr.mxu0 0.0
        %3303 = vmatpush1.msra.mxu0 0.0
        %3304 = vmatprep.subr.mxu0 0.0
        %3305 = vmatpush1.msra.mxu0 0.0
        %3306 = vmatprep.subr.mxu0 0.0
        %3307 = vmatpush1.msra.mxu0 0.0
        %3308 = vmatprep.subr.mxu0 0.0
        %3309 = vmatpush1.msra.mxu0 0.0
        %3310 = vmatprep.subr.mxu0 0.0
        %3311 = vmatpush1.msra.mxu0 0.0
        %3312 = vmatprep.subr.mxu0 0.0
        %3313 = vmatpush1.msra.mxu0 0.0
        %3314 = vmatprep.subr.mxu0 0.0
        %3315 = vmatpush1.msra.mxu0 0.0
        %3316 = vmatprep.subr.mxu0 0.0
        %3317 = vmatpush1.msra.mxu0 0.0
        %3318 = vmatprep.subr.mxu0 0.0
        %3319 = vmatpush1.msra.mxu0 0.0
        %3320 = vmatprep.subr.mxu0 0.0
        %3321 = vmatpush1.msra.mxu0 0.0
        %3322 = vmatprep.subr.mxu0 0.0
        %3323 = vmatpush1.msra.mxu0 0.0
        %3324 = vmatprep.subr.mxu0 0.0
        %3325 = vmatpush1.msra.mxu0 0.0
        %3326 = vmatprep.subr.mxu0 0.0
        %3327 = vmatpush1.msra.mxu0 0.0
        %3328 = vmatprep.mubr.f32.mxu0 0.0
        %3329 = vmatmul.mubr.f32.gmra.mrb[0].mxu0 %v3189
        %v3330 = vpop.f32.mrb[0].mxu0
        %v3331 = vadd.f32 0.0, %v3330
        %v3332 = vpop.f32.mrb[0].mxu0
        %3333 = vdwg.mxu0
        %v3334 = vadd.f32 %v3190, %v3260
        %v3335 = vxor.u32 %v3334, 2147483648
        %v3336 = vmul.f32 %v3335, 1.442695
        %v3337 = vpow.pop %v3336
        %v3338 = vadd.f32 %v3337, 1.0
        %v3339 = vrcp.pop %v3338
        %v3340 = vmul.f32 1.0, %v3339
        %v3341 = vadd.f32 %v3191, %v3262
        %v3342 = vxor.u32 %v3341, 2147483648
        %v3343 = vmul.f32 %v3342, 1.442695
        %v3344 = vpow.pop %v3343
        %v3345 = vadd.f32 %v3344, 1.0
        %v3346 = vrcp.pop %v3345
        %v3347 = vmul.f32 1.0, %v3346
        %v3348 = vadd.f32 %v3331, %v2808
        %v3349 = vmul.f32 %v3340, %v3348
        %v3350 = vadd.f32 %v3192, %v3349
        %v3351 = vtanh.pop %v3350
        %v3352 = vsub.f32 1.0, %v3347
        %v3353 = vmul.f32 %v3352, %v3351
        %v3354 = vmul.f32 %v3347, %v3189
        %v3355 = vadd.f32 %v3353, %v3354
        %v3356 = vld [vmem:[%s1403] sm:$0xff]
        %v3357 = vld [vmem:[%s1403 + $0x8] sm:$0xff]
        %v3358 = vld [vmem:[%s1403 + $0x10] sm:$0xff]
        %3359 = vmatprep.subr.mxu0 %v2814
        %3360 = vmatpush1.msra.mxu0 %v2813
        %3361 = vmatprep.subr.mxu0 %v2817
        %3362 = vmatpush1.msra.mxu0 %v2816
        %3363 = vmatprep.subr.mxu0 %v2820
        %3364 = vmatpush1.msra.mxu0 %v2819
        %3365 = vmatprep.subr.mxu0 %v2823
        %3366 = vmatpush1.msra.mxu0 %v2822
        %3367 = vmatprep.subr.mxu0 %v2826
        %3368 = vmatpush1.msra.mxu0 %v2825
        %3369 = vmatprep.subr.mxu0 %v2829
        %3370 = vmatpush1.msra.mxu0 %v2828
        %3371 = vmatprep.subr.mxu0 %v2832
        %3372 = vmatpush1.msra.mxu0 %v2831
        %3373 = vmatprep.subr.mxu0 %v2835
        %3374 = vmatpush1.msra.mxu0 %v2834
        %3375 = vmatprep.subr.mxu0 %v2838
        %3376 = vmatpush1.msra.mxu0 %v2837
        %3377 = vmatprep.subr.mxu0 %v2841
        %3378 = vmatpush1.msra.mxu0 %v2840
        %3379 = vmatprep.subr.mxu0 %v2844
        %3380 = vmatpush1.msra.mxu0 %v2843
        %3381 = vmatprep.subr.mxu0 %v2847
        %3382 = vmatpush1.msra.mxu0 %v2846
        %3383 = vmatprep.subr.mxu0 %v2850
        %3384 = vmatpush1.msra.mxu0 %v2849
        %3385 = vmatprep.subr.mxu0 %v2853
        %3386 = vmatpush1.msra.mxu0 %v2852
        %3387 = vmatprep.subr.mxu0 %v2856
        %3388 = vmatpush1.msra.mxu0 %v2855
        %3389 = vmatprep.subr.mxu0 %v2859
        %3390 = vmatpush1.msra.mxu0 %v2858
        %3391 = vmatprep.subr.mxu0 0.0
        %3392 = vmatpush1.msra.mxu0 0.0
        %3393 = vmatprep.subr.mxu0 0.0
        %3394 = vmatpush1.msra.mxu0 0.0
        %3395 = vmatprep.subr.mxu0 0.0
        %3396 = vmatpush1.msra.mxu0 0.0
        %3397 = vmatprep.subr.mxu0 0.0
        %3398 = vmatpush1.msra.mxu0 0.0
        %3399 = vmatprep.subr.mxu0 0.0
        %3400 = vmatpush1.msra.mxu0 0.0
        %3401 = vmatprep.subr.mxu0 0.0
        %3402 = vmatpush1.msra.mxu0 0.0
        %3403 = vmatprep.subr.mxu0 0.0
        %3404 = vmatpush1.msra.mxu0 0.0
        %3405 = vmatprep.subr.mxu0 0.0
        %3406 = vmatpush1.msra.mxu0 0.0
        %3407 = vmatprep.subr.mxu0 0.0
        %3408 = vmatpush1.msra.mxu0 0.0
        %3409 = vmatprep.subr.mxu0 0.0
        %3410 = vmatpush1.msra.mxu0 0.0
        %3411 = vmatprep.subr.mxu0 0.0
        %3412 = vmatpush1.msra.mxu0 0.0
        %3413 = vmatprep.subr.mxu0 0.0
        %3414 = vmatpush1.msra.mxu0 0.0
        %3415 = vmatprep.subr.mxu0 0.0
        %3416 = vmatpush1.msra.mxu0 0.0
        %3417 = vmatprep.subr.mxu0 0.0
        %3418 = vmatpush1.msra.mxu0 0.0
        %3419 = vmatprep.subr.mxu0 0.0
        %3420 = vmatpush1.msra.mxu0 0.0
        %3421 = vmatprep.subr.mxu0 0.0
        %3422 = vmatpush1.msra.mxu0 0.0
        %3423 = vmatprep.mubr.f32.mxu0 0.0
        %3424 = vmatmul.mubr.f32.gmra.mrb[0].mxu0 %v3355
        %v3425 = vpop.f32.mrb[0].mxu0
        %v3426 = vadd.f32 0.0, %v3425
        %v3427 = vpop.f32.mrb[0].mxu0
        %v3428 = vadd.f32 0.0, %v3427
        %3429 = vdwg.mxu0
        %3430 = vmatprep.subr.mxu0 0.0
        %3431 = vmatpush1.msra.mxu0 %v2815
        %3432 = vmatprep.subr.mxu0 0.0
        %3433 = vmatpush1.msra.mxu0 %v2818
        %3434 = vmatprep.subr.mxu0 0.0
        %3435 = vmatpush1.msra.mxu0 %v2821
        %3436 = vmatprep.subr.mxu0 0.0
        %3437 = vmatpush1.msra.mxu0 %v2824
        %3438 = vmatprep.subr.mxu0 0.0
        %3439 = vmatpush1.msra.mxu0 %v2827
        %3440 = vmatprep.subr.mxu0 0.0
        %3441 = vmatpush1.msra.mxu0 %v2830
        %3442 = vmatprep.subr.mxu0 0.0
        %3443 = vmatpush1.msra.mxu0 %v2833
        %3444 = vmatprep.subr.mxu0 0.0
        %3445 = vmatpush1.msra.mxu0 %v2836
        %3446 = vmatprep.subr.mxu0 0.0
        %3447 = vmatpush1.msra.mxu0 %v2839
        %3448 = vmatprep.subr.mxu0 0.0
        %3449 = vmatpush1.msra.mxu0 %v2842
        %3450 = vmatprep.subr.mxu0 0.0
        %3451 = vmatpush1.msra.mxu0 %v2845
        %3452 = vmatprep.subr.mxu0 0.0
        %3453 = vmatpush1.msra.mxu0 %v2848
        %3454 = vmatprep.subr.mxu0 0.0
        %3455 = vmatpush1.msra.mxu0 %v2851
        %3456 = vmatprep.subr.mxu0 0.0
        %3457 = vmatpush1.msra.mxu0 %v2854
        %3458 = vmatprep.subr.mxu0 0.0
        %3459 = vmatpush1.msra.mxu0 %v2857
        %3460 = vmatprep.subr.mxu0 0.0
        %3461 = vmatpush1.msra.mxu0 %v2860
        %3462 = vmatprep.subr.mxu0 0.0
        %3463 = vmatpush1.msra.mxu0 0.0
        %3464 = vmatprep.subr.mxu0 0.0
        %3465 = vmatpush1.msra.mxu0 0.0
        %3466 = vmatprep.subr.mxu0 0.0
        %3467 = vmatpush1.msra.mxu0 0.0
        %3468 = vmatprep.subr.mxu0 0.0
        %3469 = vmatpush1.msra.mxu0 0.0
        %3470 = vmatprep.subr.mxu0 0.0
        %3471 = vmatpush1.msra.mxu0 0.0
        %3472 = vmatprep.subr.mxu0 0.0
        %3473 = vmatpush1.msra.mxu0 0.0
        %3474 = vmatprep.subr.mxu0 0.0
        %3475 = vmatpush1.msra.mxu0 0.0
        %3476 = vmatprep.subr.mxu0 0.0
        %3477 = vmatpush1.msra.mxu0 0.0
        %3478 = vmatprep.subr.mxu0 0.0
        %3479 = vmatpush1.msra.mxu0 0.0
        %3480 = vmatprep.subr.mxu0 0.0
        %3481 = vmatpush1.msra.mxu0 0.0
        %3482 = vmatprep.subr.mxu0 0.0
        %3483 = vmatpush1.msra.mxu0 0.0
        %3484 = vmatprep.subr.mxu0 0.0
        %3485 = vmatpush1.msra.mxu0 0.0
        %3486 = vmatprep.subr.mxu0 0.0
        %3487 = vmatpush1.msra.mxu0 0.0
        %3488 = vmatprep.subr.mxu0 0.0
        %3489 = vmatpush1.msra.mxu0 0.0
        %3490 = vmatprep.subr.mxu0 0.0
        %3491 = vmatpush1.msra.mxu0 0.0
        %3492 = vmatprep.subr.mxu0 0.0
        %3493 = vmatpush1.msra.mxu0 0.0
        %3494 = vmatprep.mubr.f32.mxu0 0.0
        %3495 = vmatmul.mubr.f32.gmra.mrb[0].mxu0 %v3355
        %v3496 = vpop.f32.mrb[0].mxu0
        %v3497 = vadd.f32 0.0, %v3496
        %v3498 = vpop.f32.mrb[0].mxu0
        %3499 = vdwg.mxu0
        %v3500 = vadd.f32 %v3356, %v3426
        %v3501 = vxor.u32 %v3500, 2147483648
        %v3502 = vmul.f32 %v3501, 1.442695
        %v3503 = vpow.pop %v3502
        %v3504 = vadd.f32 %v3503, 1.0
        %v3505 = vrcp.pop %v3504
        %v3506 = vmul.f32 1.0, %v3505
        %v3507 = vadd.f32 %v3357, %v3428
        %v3508 = vxor.u32 %v3507, 2147483648
        %v3509 = vmul.f32 %v3508, 1.442695
        %v3510 = vpow.pop %v3509
        %v3511 = vadd.f32 %v3510, 1.0
        %v3512 = vrcp.pop %v3511
        %v3513 = vmul.f32 1.0, %v3512
        %v3514 = vadd.f32 %v3497, %v2808
        %v3515 = vmul.f32 %v3506, %v3514
        %v3516 = vadd.f32 %v3358, %v3515
        %v3517 = vtanh.pop %v3516
        %v3518 = vsub.f32 1.0, %v3513
        %v3519 = vmul.f32 %v3518, %v3517
        %v3520 = vmul.f32 %v3513, %v3355
        %v3521 = vadd.f32 %v3519, %v3520
        %v3522 = vld [vmem:[%s1620] sm:$0xff]
        %v3523 = vld [vmem:[%s1620 + $0x8] sm:$0xff]
        %v3524 = vld [vmem:[%s1620 + $0x10] sm:$0xff]
        %3525 = vmatprep.subr.mxu0 %v2814
        %3526 = vmatpush1.msra.mxu0 %v2813
        %3527 = vmatprep.subr.mxu0 %v2817
        %3528 = vmatpush1.msra.mxu0 %v2816
        %3529 = vmatprep.subr.mxu0 %v2820
        %3530 = vmatpush1.msra.mxu0 %v2819
        %3531 = vmatprep.subr.mxu0 %v2823
        %3532 = vmatpush1.msra.mxu0 %v2822
        %3533 = vmatprep.subr.mxu0 %v2826
        %3534 = vmatpush1.msra.mxu0 %v2825
        %3535 = vmatprep.subr.mxu0 %v2829
        %3536 = vmatpush1.msra.mxu0 %v2828
        %3537 = vmatprep.subr.mxu0 %v2832
        %3538 = vmatpush1.msra.mxu0 %v2831
        %3539 = vmatprep.subr.mxu0 %v2835
        %3540 = vmatpush1.msra.mxu0 %v2834
        %3541 = vmatprep.subr.mxu0 %v2838
        %3542 = vmatpush1.msra.mxu0 %v2837
        %3543 = vmatprep.subr.mxu0 %v2841
        %3544 = vmatpush1.msra.mxu0 %v2840
        %3545 = vmatprep.subr.mxu0 %v2844
        %3546 = vmatpush1.msra.mxu0 %v2843
        %3547 = vmatprep.subr.mxu0 %v2847
        %3548 = vmatpush1.msra.mxu0 %v2846
        %3549 = vmatprep.subr.mxu0 %v2850
        %3550 = vmatpush1.msra.mxu0 %v2849
        %3551 = vmatprep.subr.mxu0 %v2853
        %3552 = vmatpush1.msra.mxu0 %v2852
        %3553 = vmatprep.subr.mxu0 %v2856
        %3554 = vmatpush1.msra.mxu0 %v2855
        %3555 = vmatprep.subr.mxu0 %v2859
        %3556 = vmatpush1.msra.mxu0 %v2858
        %3557 = vmatprep.subr.mxu0 0.0
        %3558 = vmatpush1.msra.mxu0 0.0
        %3559 = vmatprep.subr.mxu0 0.0
        %3560 = vmatpush1.msra.mxu0 0.0
        %3561 = vmatprep.subr.mxu0 0.0
        %3562 = vmatpush1.msra.mxu0 0.0
        %3563 = vmatprep.subr.mxu0 0.0
        %3564 = vmatpush1.msra.mxu0 0.0
        %3565 = vmatprep.subr.mxu0 0.0
        %3566 = vmatpush1.msra.mxu0 0.0
        %3567 = vmatprep.subr.mxu0 0.0
        %3568 = vmatpush1.msra.mxu0 0.0
        %3569 = vmatprep.subr.mxu0 0.0
        %3570 = vmatpush1.msra.mxu0 0.0
        %3571 = vmatprep.subr.mxu0 0.0
        %3572 = vmatpush1.msra.mxu0 0.0
        %3573 = vmatprep.subr.mxu0 0.0
        %3574 = vmatpush1.msra.mxu0 0.0
        %3575 = vmatprep.subr.mxu0 0.0
        %3576 = vmatpush1.msra.mxu0 0.0
        %3577 = vmatprep.subr.mxu0 0.0
        %3578 = vmatpush1.msra.mxu0 0.0
        %3579 = vmatprep.subr.mxu0 0.0
        %3580 = vmatpush1.msra.mxu0 0.0
        %3581 = vmatprep.subr.mxu0 0.0
        %3582 = vmatpush1.msra.mxu0 0.0
        %3583 = vmatprep.subr.mxu0 0.0
        %3584 = vmatpush1.msra.mxu0 0.0
        %3585 = vmatprep.subr.mxu0 0.0
        %3586 = vmatpush1.msra.mxu0 0.0
        %3587 = vmatprep.subr.mxu0 0.0
        %3588 = vmatpush1.msra.mxu0 0.0
        %3589 = vmatprep.mubr.f32.mxu0 0.0
        %3590 = vmatmul.mubr.f32.gmra.mrb[0].mxu0 %v3521
        %v3591 = vpop.f32.mrb[0].mxu0
        %v3592 = vadd.f32 0.0, %v3591
        %v3593 = vpop.f32.mrb[0].mxu0
        %v3594 = vadd.f32 0.0, %v3593
        %3595 = vdwg.mxu0
        %3596 = vmatprep.subr.mxu0 0.0
        %3597 = vmatpush1.msra.mxu0 %v2815
        %3598 = vmatprep.subr.mxu0 0.0
        %3599 = vmatpush1.msra.mxu0 %v2818
        %3600 = vmatprep.subr.mxu0 0.0
        %3601 = vmatpush1.msra.mxu0 %v2821
        %3602 = vmatprep.subr.mxu0 0.0
        %3603 = vmatpush1.msra.mxu0 %v2824
        %3604 = vmatprep.subr.mxu0 0.0
        %3605 = vmatpush1.msra.mxu0 %v2827
        %3606 = vmatprep.subr.mxu0 0.0
        %3607 = vmatpush1.msra.mxu0 %v2830
        %3608 = vmatprep.subr.mxu0 0.0
        %3609 = vmatpush1.msra.mxu0 %v2833
        %3610 = vmatprep.subr.mxu0 0.0
        %3611 = vmatpush1.msra.mxu0 %v2836
        %3612 = vmatprep.subr.mxu0 0.0
        %3613 = vmatpush1.msra.mxu0 %v2839
        %3614 = vmatprep.subr.mxu0 0.0
        %3615 = vmatpush1.msra.mxu0 %v2842
        %3616 = vmatprep.subr.mxu0 0.0
        %3617 = vmatpush1.msra.mxu0 %v2845
        %3618 = vmatprep.subr.mxu0 0.0
        %3619 = vmatpush1.msra.mxu0 %v2848
        %3620 = vmatprep.subr.mxu0 0.0
        %3621 = vmatpush1.msra.mxu0 %v2851
        %3622 = vmatprep.subr.mxu0 0.0
        %3623 = vmatpush1.msra.mxu0 %v2854
        %3624 = vmatprep.subr.mxu0 0.0
        %3625 = vmatpush1.msra.mxu0 %v2857
        %3626 = vmatprep.subr.mxu0 0.0
        %3627 = vmatpush1.msra.mxu0 %v2860
        %3628 = vmatprep.subr.mxu0 0.0
        %3629 = vmatpush1.msra.mxu0 0.0
        %3630 = vmatprep.subr.mxu0 0.0
        %3631 = vmatpush1.msra.mxu0 0.0
        %3632 = vmatprep.subr.mxu0 0.0
        %3633 = vmatpush1.msra.mxu0 0.0
        %3634 = vmatprep.subr.mxu0 0.0
        %3635 = vmatpush1.msra.mxu0 0.0
        %3636 = vmatprep.subr.mxu0 0.0
        %3637 = vmatpush1.msra.mxu0 0.0
        %3638 = vmatprep.subr.mxu0 0.0
        %3639 = vmatpush1.msra.mxu0 0.0
        %3640 = vmatprep.subr.mxu0 0.0
        %3641 = vmatpush1.msra.mxu0 0.0
        %3642 = vmatprep.subr.mxu0 0.0
        %3643 = vmatpush1.msra.mxu0 0.0
        %3644 = vmatprep.subr.mxu0 0.0
        %3645 = vmatpush1.msra.mxu0 0.0
        %3646 = vmatprep.subr.mxu0 0.0
        %3647 = vmatpush1.msra.mxu0 0.0
        %3648 = vmatprep.subr.mxu0 0.0
        %3649 = vmatpush1.msra.mxu0 0.0
        %3650 = vmatprep.subr.mxu0 0.0
        %3651 = vmatpush1.msra.mxu0 0.0
        %3652 = vmatprep.subr.mxu0 0.0
        %3653 = vmatpush1.msra.mxu0 0.0
        %3654 = vmatprep.subr.mxu0 0.0
        %3655 = vmatpush1.msra.mxu0 0.0
        %3656 = vmatprep.subr.mxu0 0.0
        %3657 = vmatpush1.msra.mxu0 0.0
        %3658 = vmatprep.subr.mxu0 0.0
        %3659 = vmatpush1.msra.mxu0 0.0
        %3660 = vmatprep.mubr.f32.mxu0 0.0
        %3661 = vmatmul.mubr.f32.gmra.mrb[0].mxu0 %v3521
        %v3662 = vpop.f32.mrb[0].mxu0
        %v3663 = vadd.f32 0.0, %v3662
        %v3664 = vpop.f32.mrb[0].mxu0
        %3665 = vdwg.mxu0
        %v3666 = vadd.f32 %v3522, %v3592
        %v3667 = vxor.u32 %v3666, 2147483648
        %v3668 = vmul.f32 %v3667, 1.442695
        %v3669 = vpow.pop %v3668
        %v3670 = vadd.f32 %v3669, 1.0
        %v3671 = vrcp.pop %v3670
        %v3672 = vmul.f32 1.0, %v3671
        %v3673 = vadd.f32 %v3523, %v3594
        %v3674 = vxor.u32 %v3673, 2147483648
        %v3675 = vmul.f32 %v3674, 1.442695
        %v3676 = vpow.pop %v3675
        %v3677 = vadd.f32 %v3676, 1.0
        %v3678 = vrcp.pop %v3677
        %v3679 = vmul.f32 1.0, %v3678
        %v3680 = vadd.f32 %v3663, %v2808
        %v3681 = vmul.f32 %v3672, %v3680
        %v3682 = vadd.f32 %v3524, %v3681
        %v3683 = vtanh.pop %v3682
        %v3684 = vsub.f32 1.0, %v3679
        %v3685 = vmul.f32 %v3684, %v3683
        %v3686 = vmul.f32 %v3679, %v3521
        %v3687 = vadd.f32 %v3685, %v3686
        %v3688 = vld [vmem:[%s1837] sm:$0xff]
        %v3689 = vld [vmem:[%s1837 + $0x8] sm:$0xff]
        %v3690 = vld [vmem:[%s1837 + $0x10] sm:$0xff]
        %3691 = vmatprep.subr.mxu0 %v2814
        %3692 = vmatpush1.msra.mxu0 %v2813
        %3693 = vmatprep.subr.mxu0 %v2817
        %3694 = vmatpush1.msra.mxu0 %v2816
        %3695 = vmatprep.subr.mxu0 %v2820
        %3696 = vmatpush1.msra.mxu0 %v2819
        %3697 = vmatprep.subr.mxu0 %v2823
        %3698 = vmatpush1.msra.mxu0 %v2822
        %3699 = vmatprep.subr.mxu0 %v2826
        %3700 = vmatpush1.msra.mxu0 %v2825
        %3701 = vmatprep.subr.mxu0 %v2829
        %3702 = vmatpush1.msra.mxu0 %v2828
        %3703 = vmatprep.subr.mxu0 %v2832
        %3704 = vmatpush1.msra.mxu0 %v2831
        %3705 = vmatprep.subr.mxu0 %v2835
        %3706 = vmatpush1.msra.mxu0 %v2834
        %3707 = vmatprep.subr.mxu0 %v2838
        %3708 = vmatpush1.msra.mxu0 %v2837
        %3709 = vmatprep.subr.mxu0 %v2841
        %3710 = vmatpush1.msra.mxu0 %v2840
        %3711 = vmatprep.subr.mxu0 %v2844
        %3712 = vmatpush1.msra.mxu0 %v2843
        %3713 = vmatprep.subr.mxu0 %v2847
        %3714 = vmatpush1.msra.mxu0 %v2846
        %3715 = vmatprep.subr.mxu0 %v2850
        %3716 = vmatpush1.msra.mxu0 %v2849
        %3717 = vmatprep.subr.mxu0 %v2853
        %3718 = vmatpush1.msra.mxu0 %v2852
        %3719 = vmatprep.subr.mxu0 %v2856
        %3720 = vmatpush1.msra.mxu0 %v2855
        %3721 = vmatprep.subr.mxu0 %v2859
        %3722 = vmatpush1.msra.mxu0 %v2858
        %3723 = vmatprep.subr.mxu0 0.0
        %3724 = vmatpush1.msra.mxu0 0.0
        %3725 = vmatprep.subr.mxu0 0.0
        %3726 = vmatpush1.msra.mxu0 0.0
        %3727 = vmatprep.subr.mxu0 0.0
        %3728 = vmatpush1.msra.mxu0 0.0
        %3729 = vmatprep.subr.mxu0 0.0
        %3730 = vmatpush1.msra.mxu0 0.0
        %3731 = vmatprep.subr.mxu0 0.0
        %3732 = vmatpush1.msra.mxu0 0.0
        %3733 = vmatprep.subr.mxu0 0.0
        %3734 = vmatpush1.msra.mxu0 0.0
        %3735 = vmatprep.subr.mxu0 0.0
        %3736 = vmatpush1.msra.mxu0 0.0
        %3737 = vmatprep.subr.mxu0 0.0
        %3738 = vmatpush1.msra.mxu0 0.0
        %3739 = vmatprep.subr.mxu0 0.0
        %3740 = vmatpush1.msra.mxu0 0.0
        %3741 = vmatprep.subr.mxu0 0.0
        %3742 = vmatpush1.msra.mxu0 0.0
        %3743 = vmatprep.subr.mxu0 0.0
        %3744 = vmatpush1.msra.mxu0 0.0
        %3745 = vmatprep.subr.mxu0 0.0
        %3746 = vmatpush1.msra.mxu0 0.0
        %3747 = vmatprep.subr.mxu0 0.0
        %3748 = vmatpush1.msra.mxu0 0.0
        %3749 = vmatprep.subr.mxu0 0.0
        %3750 = vmatpush1.msra.mxu0 0.0
        %3751 = vmatprep.subr.mxu0 0.0
        %3752 = vmatpush1.msra.mxu0 0.0
        %3753 = vmatprep.subr.mxu0 0.0
        %3754 = vmatpush1.msra.mxu0 0.0
        %3755 = vmatprep.mubr.f32.mxu0 0.0
        %3756 = vmatmul.mubr.f32.gmra.mrb[0].mxu0 %v3687
        %v3757 = vpop.f32.mrb[0].mxu0
        %v3758 = vadd.f32 0.0, %v3757
        %v3759 = vpop.f32.mrb[0].mxu0
        %v3760 = vadd.f32 0.0, %v3759
        %3761 = vdwg.mxu0
        %3762 = vmatprep.subr.mxu0 0.0
        %3763 = vmatpush1.msra.mxu0 %v2815
        %3764 = vmatprep.subr.mxu0 0.0
        %3765 = vmatpush1.msra.mxu0 %v2818
        %3766 = vmatprep.subr.mxu0 0.0
        %3767 = vmatpush1.msra.mxu0 %v2821
        %3768 = vmatprep.subr.mxu0 0.0
        %3769 = vmatpush1.msra.mxu0 %v2824
        %3770 = vmatprep.subr.mxu0 0.0
        %3771 = vmatpush1.msra.mxu0 %v2827
        %3772 = vmatprep.subr.mxu0 0.0
        %3773 = vmatpush1.msra.mxu0 %v2830
        %3774 = vmatprep.subr.mxu0 0.0
        %3775 = vmatpush1.msra.mxu0 %v2833
        %3776 = vmatprep.subr.mxu0 0.0
        %3777 = vmatpush1.msra.mxu0 %v2836
        %3778 = vmatprep.subr.mxu0 0.0
        %3779 = vmatpush1.msra.mxu0 %v2839
        %3780 = vmatprep.subr.mxu0 0.0
        %3781 = vmatpush1.msra.mxu0 %v2842
        %3782 = vmatprep.subr.mxu0 0.0
        %3783 = vmatpush1.msra.mxu0 %v2845
        %3784 = vmatprep.subr.mxu0 0.0
        %3785 = vmatpush1.msra.mxu0 %v2848
        %3786 = vmatprep.subr.mxu0 0.0
        %3787 = vmatpush1.msra.mxu0 %v2851
        %3788 = vmatprep.subr.mxu0 0.0
        %3789 = vmatpush1.msra.mxu0 %v2854
        %3790 = vmatprep.subr.mxu0 0.0
        %3791 = vmatpush1.msra.mxu0 %v2857
        %3792 = vmatprep.subr.mxu0 0.0
        %3793 = vmatpush1.msra.mxu0 %v2860
        %3794 = vmatprep.subr.mxu0 0.0
        %3795 = vmatpush1.msra.mxu0 0.0
        %3796 = vmatprep.subr.mxu0 0.0
        %3797 = vmatpush1.msra.mxu0 0.0
        %3798 = vmatprep.subr.mxu0 0.0
        %3799 = vmatpush1.msra.mxu0 0.0
        %3800 = vmatprep.subr.mxu0 0.0
        %3801 = vmatpush1.msra.mxu0 0.0
        %3802 = vmatprep.subr.mxu0 0.0
        %3803 = vmatpush1.msra.mxu0 0.0
        %3804 = vmatprep.subr.mxu0 0.0
        %3805 = vmatpush1.msra.mxu0 0.0
        %3806 = vmatprep.subr.mxu0 0.0
        %3807 = vmatpush1.msra.mxu0 0.0
        %3808 = vmatprep.subr.mxu0 0.0
        %3809 = vmatpush1.msra.mxu0 0.0
        %3810 = vmatprep.subr.mxu0 0.0
        %3811 = vmatpush1.msra.mxu0 0.0
        %3812 = vmatprep.subr.mxu0 0.0
        %3813 = vmatpush1.msra.mxu0 0.0
        %3814 = vmatprep.subr.mxu0 0.0
        %3815 = vmatpush1.msra.mxu0 0.0
        %3816 = vmatprep.subr.mxu0 0.0
        %3817 = vmatpush1.msra.mxu0 0.0
        %3818 = vmatprep.subr.mxu0 0.0
        %3819 = vmatpush1.msra.mxu0 0.0
        %3820 = vmatprep.subr.mxu0 0.0
        %3821 = vmatpush1.msra.mxu0 0.0
        %3822 = vmatprep.subr.mxu0 0.0
        %3823 = vmatpush1.msra.mxu0 0.0
        %3824 = vmatprep.subr.mxu0 0.0
        %3825 = vmatpush1.msra.mxu0 0.0
        %3826 = vmatprep.mubr.f32.mxu0 0.0
        %3827 = vmatmul.mubr.f32.gmra.mrb[0].mxu0 %v3687
        %v3828 = vpop.f32.mrb[0].mxu0
        %v3829 = vadd.f32 0.0, %v3828
        %v3830 = vpop.f32.mrb[0].mxu0
        %3831 = vdwg.mxu0
        %v3832 = vadd.f32 %v3688, %v3758
        %v3833 = vxor.u32 %v3832, 2147483648
        %v3834 = vmul.f32 %v3833, 1.442695
        %v3835 = vpow.pop %v3834
        %v3836 = vadd.f32 %v3835, 1.0
        %v3837 = vrcp.pop %v3836
        %v3838 = vmul.f32 1.0, %v3837
        %v3839 = vadd.f32 %v3689, %v3760
        %v3840 = vxor.u32 %v3839, 2147483648
        %v3841 = vmul.f32 %v3840, 1.442695
        %v3842 = vpow.pop %v3841
        %v3843 = vadd.f32 %v3842, 1.0
        %v3844 = vrcp.pop %v3843
        %v3845 = vmul.f32 1.0, %v3844
        %v3846 = vadd.f32 %v3829, %v2808
        %v3847 = vmul.f32 %v3838, %v3846
        %v3848 = vadd.f32 %v3690, %v3847
        %v3849 = vtanh.pop %v3848
        %v3850 = vsub.f32 1.0, %v3845
        %v3851 = vmul.f32 %v3850, %v3849
        %v3852 = vmul.f32 %v3845, %v3687
        %v3853 = vadd.f32 %v3851, %v3852
        %v3854 = vld [vmem:[%s2054] sm:$0xff]
        %v3855 = vld [vmem:[%s2054 + $0x8] sm:$0xff]
        %v3856 = vld [vmem:[%s2054 + $0x10] sm:$0xff]
        %3857 = vmatprep.subr.mxu0 %v2814
        %3858 = vmatpush1.msra.mxu0 %v2813
        %3859 = vmatprep.subr.mxu0 %v2817
        %3860 = vmatpush1.msra.mxu0 %v2816
        %3861 = vmatprep.subr.mxu0 %v2820
        %3862 = vmatpush1.msra.mxu0 %v2819
        %3863 = vmatprep.subr.mxu0 %v2823
        %3864 = vmatpush1.msra.mxu0 %v2822
        %3865 = vmatprep.subr.mxu0 %v2826
        %3866 = vmatpush1.msra.mxu0 %v2825
        %3867 = vmatprep.subr.mxu0 %v2829
        %3868 = vmatpush1.msra.mxu0 %v2828
        %3869 = vmatprep.subr.mxu0 %v2832
        %3870 = vmatpush1.msra.mxu0 %v2831
        %3871 = vmatprep.subr.mxu0 %v2835
        %3872 = vmatpush1.msra.mxu0 %v2834
        %3873 = vmatprep.subr.mxu0 %v2838
        %3874 = vmatpush1.msra.mxu0 %v2837
        %3875 = vmatprep.subr.mxu0 %v2841
        %3876 = vmatpush1.msra.mxu0 %v2840
        %3877 = vmatprep.subr.mxu0 %v2844
        %3878 = vmatpush1.msra.mxu0 %v2843
        %3879 = vmatprep.subr.mxu0 %v2847
        %3880 = vmatpush1.msra.mxu0 %v2846
        %3881 = vmatprep.subr.mxu0 %v2850
        %3882 = vmatpush1.msra.mxu0 %v2849
        %3883 = vmatprep.subr.mxu0 %v2853
        %3884 = vmatpush1.msra.mxu0 %v2852
        %3885 = vmatprep.subr.mxu0 %v2856
        %3886 = vmatpush1.msra.mxu0 %v2855
        %3887 = vmatprep.subr.mxu0 %v2859
        %3888 = vmatpush1.msra.mxu0 %v2858
        %3889 = vmatprep.subr.mxu0 0.0
        %3890 = vmatpush1.msra.mxu0 0.0
        %3891 = vmatprep.subr.mxu0 0.0
        %3892 = vmatpush1.msra.mxu0 0.0
        %3893 = vmatprep.subr.mxu0 0.0
        %3894 = vmatpush1.msra.mxu0 0.0
        %3895 = vmatprep.subr.mxu0 0.0
        %3896 = vmatpush1.msra.mxu0 0.0
        %3897 = vmatprep.subr.mxu0 0.0
        %3898 = vmatpush1.msra.mxu0 0.0
        %3899 = vmatprep.subr.mxu0 0.0
        %3900 = vmatpush1.msra.mxu0 0.0
        %3901 = vmatprep.subr.mxu0 0.0
        %3902 = vmatpush1.msra.mxu0 0.0
        %3903 = vmatprep.subr.mxu0 0.0
        %3904 = vmatpush1.msra.mxu0 0.0
        %3905 = vmatprep.subr.mxu0 0.0
        %3906 = vmatpush1.msra.mxu0 0.0
        %3907 = vmatprep.subr.mxu0 0.0
        %3908 = vmatpush1.msra.mxu0 0.0
        %3909 = vmatprep.subr.mxu0 0.0
        %3910 = vmatpush1.msra.mxu0 0.0
        %3911 = vmatprep.subr.mxu0 0.0
        %3912 = vmatpush1.msra.mxu0 0.0
        %3913 = vmatprep.subr.mxu0 0.0
        %3914 = vmatpush1.msra.mxu0 0.0
        %3915 = vmatprep.subr.mxu0 0.0
        %3916 = vmatpush1.msra.mxu0 0.0
        %3917 = vmatprep.subr.mxu0 0.0
        %3918 = vmatpush1.msra.mxu0 0.0
        %3919 = vmatprep.subr.mxu0 0.0
        %3920 = vmatpush1.msra.mxu0 0.0
        %3921 = vmatprep.mubr.f32.mxu0 0.0
        %3922 = vmatmul.mubr.f32.gmra.mrb[0].mxu0 %v3853
        %v3923 = vpop.f32.mrb[0].mxu0
        %v3924 = vadd.f32 0.0, %v3923
        %v3925 = vpop.f32.mrb[0].mxu0
        %v3926 = vadd.f32 0.0, %v3925
        %3927 = vdwg.mxu0
        %3928 = vmatprep.subr.mxu0 0.0
        %3929 = vmatpush1.msra.mxu0 %v2815
        %3930 = vmatprep.subr.mxu0 0.0
        %3931 = vmatpush1.msra.mxu0 %v2818
        %3932 = vmatprep.subr.mxu0 0.0
        %3933 = vmatpush1.msra.mxu0 %v2821
        %3934 = vmatprep.subr.mxu0 0.0
        %3935 = vmatpush1.msra.mxu0 %v2824
        %3936 = vmatprep.subr.mxu0 0.0
        %3937 = vmatpush1.msra.mxu0 %v2827
        %3938 = vmatprep.subr.mxu0 0.0
        %3939 = vmatpush1.msra.mxu0 %v2830
        %3940 = vmatprep.subr.mxu0 0.0
        %3941 = vmatpush1.msra.mxu0 %v2833
        %3942 = vmatprep.subr.mxu0 0.0
        %3943 = vmatpush1.msra.mxu0 %v2836
        %3944 = vmatprep.subr.mxu0 0.0
        %3945 = vmatpush1.msra.mxu0 %v2839
        %3946 = vmatprep.subr.mxu0 0.0
        %3947 = vmatpush1.msra.mxu0 %v2842
        %3948 = vmatprep.subr.mxu0 0.0
        %3949 = vmatpush1.msra.mxu0 %v2845
        %3950 = vmatprep.subr.mxu0 0.0
        %3951 = vmatpush1.msra.mxu0 %v2848
        %3952 = vmatprep.subr.mxu0 0.0
        %3953 = vmatpush1.msra.mxu0 %v2851
        %3954 = vmatprep.subr.mxu0 0.0
        %3955 = vmatpush1.msra.mxu0 %v2854
        %3956 = vmatprep.subr.mxu0 0.0
        %3957 = vmatpush1.msra.mxu0 %v2857
        %3958 = vmatprep.subr.mxu0 0.0
        %3959 = vmatpush1.msra.mxu0 %v2860
        %3960 = vmatprep.subr.mxu0 0.0
        %3961 = vmatpush1.msra.mxu0 0.0
        %3962 = vmatprep.subr.mxu0 0.0
        %3963 = vmatpush1.msra.mxu0 0.0
        %3964 = vmatprep.subr.mxu0 0.0
        %3965 = vmatpush1.msra.mxu0 0.0
        %3966 = vmatprep.subr.mxu0 0.0
        %3967 = vmatpush1.msra.mxu0 0.0
        %3968 = vmatprep.subr.mxu0 0.0
        %3969 = vmatpush1.msra.mxu0 0.0
        %3970 = vmatprep.subr.mxu0 0.0
        %3971 = vmatpush1.msra.mxu0 0.0
        %3972 = vmatprep.subr.mxu0 0.0
        %3973 = vmatpush1.msra.mxu0 0.0
        %3974 = vmatprep.subr.mxu0 0.0
        %3975 = vmatpush1.msra.mxu0 0.0
        %3976 = vmatprep.subr.mxu0 0.0
        %3977 = vmatpush1.msra.mxu0 0.0
        %3978 = vmatprep.subr.mxu0 0.0
        %3979 = vmatpush1.msra.mxu0 0.0
        %3980 = vmatprep.subr.mxu0 0.0
        %3981 = vmatpush1.msra.mxu0 0.0
        %3982 = vmatprep.subr.mxu0 0.0
        %3983 = vmatpush1.msra.mxu0 0.0
        %3984 = vmatprep.subr.mxu0 0.0
        %3985 = vmatpush1.msra.mxu0 0.0
        %3986 = vmatprep.subr.mxu0 0.0
        %3987 = vmatpush1.msra.mxu0 0.0
        %3988 = vmatprep.subr.mxu0 0.0
        %3989 = vmatpush1.msra.mxu0 0.0
        %3990 = vmatprep.subr.mxu0 0.0
        %3991 = vmatpush1.msra.mxu0 0.0
        %3992 = vmatprep.mubr.f32.mxu0 0.0
        %3993 = vmatmul.mubr.f32.gmra.mrb[0].mxu0 %v3853
        %v3994 = vpop.f32.mrb[0].mxu0
        %v3995 = vadd.f32 0.0, %v3994
        %v3996 = vpop.f32.mrb[0].mxu0
        %3997 = vdwg.mxu0
        %v3998 = vadd.f32 %v3854, %v3924
        %v3999 = vxor.u32 %v3998, 2147483648
        %v4000 = vmul.f32 %v3999, 1.442695
        %v4001 = vpow.pop %v4000
        %v4002 = vadd.f32 %v4001, 1.0
        %v4003 = vrcp.pop %v4002
        %v4004 = vmul.f32 1.0, %v4003
        %v4005 = vadd.f32 %v3855, %v3926
        %v4006 = vxor.u32 %v4005, 2147483648
        %v4007 = vmul.f32 %v4006, 1.442695
        %v4008 = vpow.pop %v4007
        %v4009 = vadd.f32 %v4008, 1.0
        %v4010 = vrcp.pop %v4009
        %v4011 = vmul.f32 1.0, %v4010
        %v4012 = vadd.f32 %v3995, %v2808
        %v4013 = vmul.f32 %v4004, %v4012
        %v4014 = vadd.f32 %v3856, %v4013
        %v4015 = vtanh.pop %v4014
        %v4016 = vsub.f32 1.0, %v4011
        %v4017 = vmul.f32 %v4016, %v4015
        %v4018 = vmul.f32 %v4011, %v3853
        %v4019 = vadd.f32 %v4017, %v4018
        %v4020 = vld [vmem:[%s2271] sm:$0xff]
        %v4021 = vld [vmem:[%s2271 + $0x8] sm:$0xff]
        %v4022 = vld [vmem:[%s2271 + $0x10] sm:$0xff]
        %4023 = vmatprep.subr.mxu0 %v2814
        %4024 = vmatpush1.msra.mxu0 %v2813
        %4025 = vmatprep.subr.mxu0 %v2817
        %4026 = vmatpush1.msra.mxu0 %v2816
        %4027 = vmatprep.subr.mxu0 %v2820
        %4028 = vmatpush1.msra.mxu0 %v2819
        %4029 = vmatprep.subr.mxu0 %v2823
        %4030 = vmatpush1.msra.mxu0 %v2822
        %4031 = vmatprep.subr.mxu0 %v2826
        %4032 = vmatpush1.msra.mxu0 %v2825
        %4033 = vmatprep.subr.mxu0 %v2829
        %4034 = vmatpush1.msra.mxu0 %v2828
        %4035 = vmatprep.subr.mxu0 %v2832
        %4036 = vmatpush1.msra.mxu0 %v2831
        %4037 = vmatprep.subr.mxu0 %v2835
        %4038 = vmatpush1.msra.mxu0 %v2834
        %4039 = vmatprep.subr.mxu0 %v2838
        %4040 = vmatpush1.msra.mxu0 %v2837
        %4041 = vmatprep.subr.mxu0 %v2841
        %4042 = vmatpush1.msra.mxu0 %v2840
        %4043 = vmatprep.subr.mxu0 %v2844
        %4044 = vmatpush1.msra.mxu0 %v2843
        %4045 = vmatprep.subr.mxu0 %v2847
        %4046 = vmatpush1.msra.mxu0 %v2846
        %4047 = vmatprep.subr.mxu0 %v2850
        %4048 = vmatpush1.msra.mxu0 %v2849
        %4049 = vmatprep.subr.mxu0 %v2853
        %4050 = vmatpush1.msra.mxu0 %v2852
        %4051 = vmatprep.subr.mxu0 %v2856
        %4052 = vmatpush1.msra.mxu0 %v2855
        %4053 = vmatprep.subr.mxu0 %v2859
        %4054 = vmatpush1.msra.mxu0 %v2858
        %4055 = vmatprep.subr.mxu0 0.0
        %4056 = vmatpush1.msra.mxu0 0.0
        %4057 = vmatprep.subr.mxu0 0.0
        %4058 = vmatpush1.msra.mxu0 0.0
        %4059 = vmatprep.subr.mxu0 0.0
        %4060 = vmatpush1.msra.mxu0 0.0
        %4061 = vmatprep.subr.mxu0 0.0
        %4062 = vmatpush1.msra.mxu0 0.0
        %4063 = vmatprep.subr.mxu0 0.0
        %4064 = vmatpush1.msra.mxu0 0.0
        %4065 = vmatprep.subr.mxu0 0.0
        %4066 = vmatpush1.msra.mxu0 0.0
        %4067 = vmatprep.subr.mxu0 0.0
        %4068 = vmatpush1.msra.mxu0 0.0
        %4069 = vmatprep.subr.mxu0 0.0
        %4070 = vmatpush1.msra.mxu0 0.0
        %4071 = vmatprep.subr.mxu0 0.0
        %4072 = vmatpush1.msra.mxu0 0.0
        %4073 = vmatprep.subr.mxu0 0.0
        %4074 = vmatpush1.msra.mxu0 0.0
        %4075 = vmatprep.subr.mxu0 0.0
        %4076 = vmatpush1.msra.mxu0 0.0
        %4077 = vmatprep.subr.mxu0 0.0
        %4078 = vmatpush1.msra.mxu0 0.0
        %4079 = vmatprep.subr.mxu0 0.0
        %4080 = vmatpush1.msra.mxu0 0.0
        %4081 = vmatprep.subr.mxu0 0.0
        %4082 = vmatpush1.msra.mxu0 0.0
        %4083 = vmatprep.subr.mxu0 0.0
        %4084 = vmatpush1.msra.mxu0 0.0
        %4085 = vmatprep.subr.mxu0 0.0
        %4086 = vmatpush1.msra.mxu0 0.0
        %4087 = vmatprep.mubr.f32.mxu0 0.0
        %4088 = vmatmul.mubr.f32.gmra.mrb[0].mxu0 %v4019
        %v4089 = vpop.f32.mrb[0].mxu0
        %v4090 = vadd.f32 0.0, %v4089
        %v4091 = vpop.f32.mrb[0].mxu0
        %v4092 = vadd.f32 0.0, %v4091
        %4093 = vdwg.mxu0
        %4094 = vmatprep.subr.mxu0 0.0
        %4095 = vmatpush1.msra.mxu0 %v2815
        %4096 = vmatprep.subr.mxu0 0.0
        %4097 = vmatpush1.msra.mxu0 %v2818
        %4098 = vmatprep.subr.mxu0 0.0
        %4099 = vmatpush1.msra.mxu0 %v2821
        %4100 = vmatprep.subr.mxu0 0.0
        %4101 = vmatpush1.msra.mxu0 %v2824
        %4102 = vmatprep.subr.mxu0 0.0
        %4103 = vmatpush1.msra.mxu0 %v2827
        %4104 = vmatprep.subr.mxu0 0.0
        %4105 = vmatpush1.msra.mxu0 %v2830
        %4106 = vmatprep.subr.mxu0 0.0
        %4107 = vmatpush1.msra.mxu0 %v2833
        %4108 = vmatprep.subr.mxu0 0.0
        %4109 = vmatpush1.msra.mxu0 %v2836
        %4110 = vmatprep.subr.mxu0 0.0
        %4111 = vmatpush1.msra.mxu0 %v2839
        %4112 = vmatprep.subr.mxu0 0.0
        %4113 = vmatpush1.msra.mxu0 %v2842
        %4114 = vmatprep.subr.mxu0 0.0
        %4115 = vmatpush1.msra.mxu0 %v2845
        %4116 = vmatprep.subr.mxu0 0.0
        %4117 = vmatpush1.msra.mxu0 %v2848
        %4118 = vmatprep.subr.mxu0 0.0
        %4119 = vmatpush1.msra.mxu0 %v2851
        %4120 = vmatprep.subr.mxu0 0.0
        %4121 = vmatpush1.msra.mxu0 %v2854
        %4122 = vmatprep.subr.mxu0 0.0
        %4123 = vmatpush1.msra.mxu0 %v2857
        %4124 = vmatprep.subr.mxu0 0.0
        %4125 = vmatpush1.msra.mxu0 %v2860
        %4126 = vmatprep.subr.mxu0 0.0
        %4127 = vmatpush1.msra.mxu0 0.0
        %4128 = vmatprep.subr.mxu0 0.0
        %4129 = vmatpush1.msra.mxu0 0.0
        %4130 = vmatprep.subr.mxu0 0.0
        %4131 = vmatpush1.msra.mxu0 0.0
        %4132 = vmatprep.subr.mxu0 0.0
        %4133 = vmatpush1.msra.mxu0 0.0
        %4134 = vmatprep.subr.mxu0 0.0
        %4135 = vmatpush1.msra.mxu0 0.0
        %4136 = vmatprep.subr.mxu0 0.0
        %4137 = vmatpush1.msra.mxu0 0.0
        %4138 = vmatprep.subr.mxu0 0.0
        %4139 = vmatpush1.msra.mxu0 0.0
        %4140 = vmatprep.subr.mxu0 0.0
        %4141 = vmatpush1.msra.mxu0 0.0
        %4142 = vmatprep.subr.mxu0 0.0
        %4143 = vmatpush1.msra.mxu0 0.0
        %4144 = vmatprep.subr.mxu0 0.0
        %4145 = vmatpush1.msra.mxu0 0.0
        %4146 = vmatprep.subr.mxu0 0.0
        %4147 = vmatpush1.msra.mxu0 0.0
        %4148 = vmatprep.subr.mxu0 0.0
        %4149 = vmatpush1.msra.mxu0 0.0
        %4150 = vmatprep.subr.mxu0 0.0
        %4151 = vmatpush1.msra.mxu0 0.0
        %4152 = vmatprep.subr.mxu0 0.0
        %4153 = vmatpush1.msra.mxu0 0.0
        %4154 = vmatprep.subr.mxu0 0.0
        %4155 = vmatpush1.msra.mxu0 0.0
        %4156 = vmatprep.subr.mxu0 0.0
        %4157 = vmatpush1.msra.mxu0 0.0
        %4158 = vmatprep.mubr.f32.mxu0 0.0
        %4159 = vmatmul.mubr.f32.gmra.mrb[0].mxu0 %v4019
        %v4160 = vpop.f32.mrb[0].mxu0
        %v4161 = vadd.f32 0.0, %v4160
        %v4162 = vpop.f32.mrb[0].mxu0
        %4163 = vdwg.mxu0
        %v4164 = vadd.f32 %v4020, %v4090
        %v4165 = vxor.u32 %v4164, 2147483648
        %v4166 = vmul.f32 %v4165, 1.442695
        %v4167 = vpow.pop %v4166
        %v4168 = vadd.f32 %v4167, 1.0
        %v4169 = vrcp.pop %v4168
        %v4170 = vmul.f32 1.0, %v4169
        %v4171 = vadd.f32 %v4021, %v4092
        %v4172 = vxor.u32 %v4171, 2147483648
        %v4173 = vmul.f32 %v4172, 1.442695
        %v4174 = vpow.pop %v4173
        %v4175 = vadd.f32 %v4174, 1.0
        %v4176 = vrcp.pop %v4175
        %v4177 = vmul.f32 1.0, %v4176
        %v4178 = vadd.f32 %v4161, %v2808
        %v4179 = vmul.f32 %v4170, %v4178
        %v4180 = vadd.f32 %v4022, %v4179
        %v4181 = vtanh.pop %v4180
        %v4182 = vsub.f32 1.0, %v4177
        %v4183 = vmul.f32 %v4182, %v4181
        %v4184 = vmul.f32 %v4177, %v4019
        %v4185 = vadd.f32 %v4183, %v4184
        %v4186 = vld [vmem:[%s9] sm:$0x1]
        %v4188 = vlaneseq
        %v4189 = vshrl.u32 %v4188, 7
        %v4190 = vsub.s32 0, %v4189
        %v4191 = vrot.slane %v4186, %v4190
        %v4193 = vmul.f32 %v4185, %v4191
        %4194 = vadd.xlane.f32.xlu0 %v4193
        %v4195 = vpop.xlane.xlu0 %4194
        %v4196 = vld [vmem:[#allocation4] sm:$0x1]
        %v4198 = vlaneseq
        %v4199 = vshrl.u32 %v4198, 7
        %v4200 = vsub.s32 0, %v4199
        %v4201 = vrot.slane %v4196, %v4200
        %v4203 = vadd.f32 %v4195, %v4201
        %vm4204 = vcmask 7168
        %4205 = vst.msk [vmem:[%s448] sm:$0xff] %vm4204, %v4203
        %p4206 = scmp.lt.s32.totalorder %s24, 1
        %s4207 = scalar_select %p4206, %s24, 1
        %s4208 = smul.addr %s4207, 8
        %s4209 = scalar_lea.vmem %s11, %s4208
        // Predicated region
        $region103: #{gru_model_forward.1} parent=97 // pred_check
          %p4210 = pneg %p278
        $region104: #{gru_model_forward.1} parent=97 // pred_check_branch
          %4212 = sbr.rel (%p4210) target = $region106
        $region105: #{gru_model_forward.1} parent=97 // pred_region
          _
        $region106: #{gru_model_forward.1} parent=97 // pred_fallthru
          _
      $region98: #{gru_model_forward.1} parent=5 // pred_fallthru
        _
      %p4213 = scmp.le.s32.totalorder 2, %s19
      // Predicated region
      $region107: #{gru_model_forward.1} parent=5 // pred_check
        %p4214 = pneg %p4213
      $region108: #{gru_model_forward.1} parent=5 // pred_check_branch
        %4216 = sbr.rel (%p4214) target = $region110
      $region109: #{gru_model_forward.1} parent=5 // pred_region
        %s4217 = ssub.s32 %s19, 2
        // Predicated region
        $region111: #{gru_model_forward.1} parent=109 // pred_check
          %p4218 = pneg %p284
        $region112: #{gru_model_forward.1} parent=109 // pred_check_branch
          %4220 = sbr.rel (%p4218) target = $region114
        $region113: #{gru_model_forward.1} parent=109 // pred_region
          %p4221 = scmp.lt.s32.totalorder %s25, 1
          %s4222 = scalar_select %p4221, %s25, 1
          %s4223 = smul.addr %s4222, 8
          %s4224 = scalar_lea.vmem %s11, %s4223
        $region114: #{gru_model_forward.1} parent=109 // pred_fallthru
          _
      $region110: #{gru_model_forward.1} parent=5 // pred_fallthru
        _
    $region6: #{gru_model_forward.1} parent=1 // loop_footer
      %s23 = sadd.s32 1, %s19
    $region7: #{gru_model_forward.1} parent=1 // loop_footer_branch
      %18 = sbr.rel target = $region3
    $region8: #{gru_model_forward.1} parent=1 // loop_exit
      _

</llo_original>
